<compile_context>
chip_gen: v7x
topology: tpu7x:2x2x1
jax: 0.10.0
libtpu: 0.0.40
codegen_flags: <defaults>
</compile_context>

<pallas_src>
import math
from functools import partial

import jax
import jax.numpy as jnp
from jax.experimental import pallas as pl
from jax.experimental.pallas import tpu as pltpu


# ---------------------------------------------------------------------------
# Fused kernel: attention->adj (k==0, VMEM scratch) + streamed GCN reduction.
# ---------------------------------------------------------------------------
def _gatn_kernel(a1_ref, gamma_ref, beta_ref,
                 wqkv_ref, bqkv_ref, wo1_ref, bo1_ref, wo2_ref, bo2_ref,
                 inp_ref, w1_ref, w2_ref,
                 out_ref,
                 adj_ref, ai_ref, s2_ref, *, num_heads, head_size):
    k = pl.program_id(0)
    C = a1_ref.shape[0]
    scale = 1.0 / math.sqrt(head_size)

    # ---------------- phase 1 (k == 0): attention block -> gen_adj ----------
    @pl.when(k == 0)
    def _init():
        x = a1_ref[...]

        # LayerNorm (computed once, reused by both attention branches).
        mu = jnp.mean(x, axis=-1, keepdims=True)
        var = jnp.mean((x - mu) * (x - mu), axis=-1, keepdims=True)
        hn = (x - mu) * jax.lax.rsqrt(var + 1e-6)
        hn = hn * gamma_ref[...] + beta_ref[...]

        # Single fused QKV projection for BOTH attention branches: (C, 6C).
        qkv = jnp.dot(hn, wqkv_ref[...],
                      preferred_element_type=jnp.float32) + bqkv_ref[...]

        # Collect all per-head score matrices (both branches) so the softmax
        # runs ONCE over a stacked (2*num_heads*C, C) block.
        scores, values = [], []
        for br in range(2):                              # static unroll
            off = br * 3 * C
            q = qkv[:, off:off + C]
            kk = qkv[:, off + C:off + 2 * C]
            v = qkv[:, off + 2 * C:off + 3 * C]
            for hd in range(num_heads):                  # static unroll
                sl = slice(hd * head_size, (hd + 1) * head_size)
                s = jax.lax.dot_general(q[:, sl], kk[:, sl],
                                        (((1,), (1,)), ((), ())),
                                        preferred_element_type=jnp.float32)
                scores.append(s * scale)
                values.append(v[:, sl])

        s_all = jnp.concatenate(scores, axis=0)          # (2*H*C, C)
        s_all = s_all - jnp.max(s_all, axis=-1, keepdims=True)
        e = jnp.exp(s_all)
        p_all = e * pl.reciprocal(jnp.sum(e, axis=-1, keepdims=True),
                                  approx=True)

        ctxs = [jnp.dot(p_all[i * C:(i + 1) * C], values[i],
                        preferred_element_type=jnp.float32)
                for i in range(2 * num_heads)]
        x1 = jnp.dot(jnp.concatenate(ctxs[:num_heads], axis=-1), wo1_ref[...],
                     preferred_element_type=jnp.float32) + bo1_ref[...]
        x2 = jnp.dot(jnp.concatenate(ctxs[num_heads:], axis=-1), wo2_ref[...],
                     preferred_element_type=jnp.float32) + bo2_ref[...]

        a = jnp.dot(x1, x2, preferred_element_type=jnp.float32)  # bmm, batch=1

        # adj = squeeze(bmm, 0) + I
        row = jax.lax.broadcasted_iota(jnp.int32, (C, C), 0)
        col = jax.lax.broadcasted_iota(jnp.int32, (C, C), 1)
        a = a + jnp.where(row == col, 1.0, 0.0).astype(jnp.float32)

        # TODO(synk): gen_adj is not defined in the provided source; standard
        # ML-GCN gen_adj is assumed: D = diag(A.sum(1) ** -0.5); adj = (A@D).T @ D
        d = jax.lax.rsqrt(jnp.sum(a, axis=1, keepdims=True))     # (C, 1)
        adj = jnp.transpose(a * d * jnp.transpose(d))
        adj_ref[...] = adj

        # Re-associated gc1: ai = adj @ inp, computed once (f32 dot, bf16 store).
        ai = jnp.dot(adj, inp_ref[...].astype(jnp.float32),
                     preferred_element_type=jnp.float32)         # (C, F)
        ai_ref[...] = ai.astype(jnp.bfloat16)

        s2_ref[...] = jnp.zeros_like(s2_ref)

    # ---------------- phase 2: streamed gc1 -> LeakyReLU -> gc2 partial -----
    # h1_blk = (adj @ inp) @ W1_blk   (== adj @ (inp @ W1_blk) re-associated)
    h1 = jnp.dot(ai_ref[...], w1_ref[...],
                 preferred_element_type=jnp.float32)             # (C, tk)
    h1 = jnp.where(h1 > 0, h1, 0.2 * h1)                         # LeakyReLU(0.2)
    s2_ref[...] += jnp.dot(h1.astype(jnp.bfloat16), w2_ref[...],
                           preferred_element_type=jnp.float32)   # (C, F)

    # ---------------- phase 3 (k == last): gc2 aggregate + x.T @ x ----------
    @pl.when(k == pl.num_programs(0) - 1)
    def _final():
        h2 = jnp.dot(adj_ref[...], s2_ref[...],
                     preferred_element_type=jnp.float32)         # (C, F)
        h2b = h2.astype(jnp.bfloat16)                            # single-pass MXU
        out_ref[...] = jax.lax.dot_general(h2b, h2b, (((0,), (0,)), ((), ())),
                                           preferred_element_type=jnp.float32)


# ---------------------------------------------------------------------------
# Wrapper
# ---------------------------------------------------------------------------
def gatn_forward(inp, a1, a2, params):
    # GATNAttentionBlock.forward ignores its `y` argument (A_2), so a2 is
    # accepted for interface parity but unused.
    del a2
    C = a1.shape[0]
    F = inp.shape[1]
    H = params["gc1_w"].shape[1]
    num_heads = 1 if C in (11, 13, 17) else 4
    assert C % num_heads == 0, "num_classes must be divisible by num_heads"
    head_size = C // num_heads

    # Stream the hidden axis in big lane-aligned blocks (fewer grid steps, but
    # keep kt > 1 when possible so weight DMA hides behind the k==0 phase).
    if H % 512 == 0:
        tk = 512
    elif H % 256 == 0:
        tk = 256
    else:
        tk = H
    kt = H // tk
    nbuf = max(2, min(kt, 4))        # deep prefetch for the streamed weights

    # bf16 weights/inputs on the MXU path: halves the only non-trivial HBM
    # traffic; accumulation stays f32.
    w1 = params["gc1_w"].astype(jnp.bfloat16)
    w2 = params["gc2_w"].astype(jnp.bfloat16)
    inp_bf = inp.astype(jnp.bfloat16)

    # Fuse both attention branches' QKV projections into one (C, 6C) weight.
    wqkv = jnp.concatenate([params["attn1"]["wqkv"], params["attn2"]["wqkv"]],
                           axis=1)                               # (C, 6C)
    bqkv = jnp.concatenate([params["attn1"]["bqkv"], params["attn2"]["bqkv"]],
                           axis=1)                               # (1, 6C)

    grid_spec = pltpu.PrefetchScalarGridSpec(
        num_scalar_prefetch=0,
        grid=(kt,),
        in_specs=[
            pl.BlockSpec((C, C), lambda k: (0, 0)),        # a1      (resident)
            pl.BlockSpec((1, C), lambda k: (0, 0)),        # ln_gamma
            pl.BlockSpec((1, C), lambda k: (0, 0)),        # ln_beta
            pl.BlockSpec((C, 6 * C), lambda k: (0, 0)),    # fused wqkv (both)
            pl.BlockSpec((1, 6 * C), lambda k: (0, 0)),    # fused bqkv (both)
            pl.BlockSpec((C, C), lambda k: (0, 0)),        # attn1 wo
            pl.BlockSpec((1, C), lambda k: (0, 0)),        # attn1 bo
            pl.BlockSpec((C, C), lambda k: (0, 0)),        # attn2 wo
            pl.BlockSpec((1, C), lambda k: (0, 0)),        # attn2 bo
            pl.BlockSpec((C, F), lambda k: (0, 0)),        # inp bf16 (resident)
            pl.BlockSpec((F, tk), lambda k: (0, k),        # gc1_w   (streamed)
                         pipeline_mode=pl.Buffered(nbuf)),
            pl.BlockSpec((tk, F), lambda k: (k, 0),        # gc2_w   (streamed)
                         pipeline_mode=pl.Buffered(nbuf)),
        ],
        out_specs=pl.BlockSpec((F, F), lambda k: (0, 0)),  # output resident
        scratch_shapes=[pltpu.VMEM((C, C), jnp.float32),   # adj
                        pltpu.VMEM((C, F), jnp.bfloat16),  # ai = adj @ inp
                        pltpu.VMEM((C, F), jnp.float32)],  # s2 accumulator
    )

    return pl.pallas_call(
        partial(_gatn_kernel, num_heads=num_heads, head_size=head_size),
        out_shape=jax.ShapeDtypeStruct((F, F), jnp.float32),
        grid_spec=grid_spec,
        compiler_params=pltpu.CompilerParams(
            dimension_semantics=("arbitrary",)),
    )(a1, params["ln_gamma"], params["ln_beta"],
      wqkv, bqkv,
      params["attn1"]["wo"], params["attn1"]["bo"],
      params["attn2"]["wo"], params["attn2"]["bo"],
      inp_bf, w1, w2)


# ---------------------------------------------------------------------------
# Deterministic parameter init (mirrors module __init__ shapes; adjacency and
# embedding pickle files replaced by synthetic deterministic data).
# ---------------------------------------------------------------------------
def init_params(key, num_classes, in_channel=300, gc_hidden=1024):
    C = num_classes
    k1, k2, k3, k4 = jax.random.split(key, 4)

    def attn_params(akey, bound=0.05):
        kw = jax.random.split(akey, 8)
        # nn.Linear weights, pre-transposed to (in, out) so the kernel does x @ W.
        wq, wk, wv, wo = (jax.random.uniform(k, (C, C), jnp.float32, -bound, bound)
                          for k in kw[:4])
        bq, bk, bv, bo = (jax.random.uniform(k, (C,), jnp.float32, -bound, bound)
                          for k in kw[4:])
        return {"wqkv": jnp.concatenate([wq, wk, wv], axis=1),      # (C, 3C)
                "bqkv": jnp.concatenate([bq, bk, bv]).reshape(1, 3 * C),
                "wo": wo,                                           # (C, C)
                "bo": bo.reshape(1, C)}

    stdv1 = 1.0 / math.sqrt(gc_hidden)    # GraphConvolution.reset_parameters
    stdv2 = 1.0 / math.sqrt(in_channel)
    return {
        "ln_gamma": jnp.ones((1, C), jnp.float32),           # LayerNorm default
        "ln_beta": jnp.zeros((1, C), jnp.float32),
        "attn1": attn_params(k1),
        "attn2": attn_params(k2),
        "gc1_w": jax.random.uniform(k3, (in_channel, gc_hidden), jnp.float32, -stdv1, stdv1),
        "gc2_w": jax.random.uniform(k4, (gc_hidden, in_channel), jnp.float32, -stdv2, stdv2),
    }


# ---------------------------------------------------------------------------
# Pure-JAX reference (mirrors the PyTorch forward semantics, f32 end-to-end)
# ---------------------------------------------------------------------------
def gatn_reference(inp, a1, params, num_classes):
    C = num_classes
    num_heads = 1 if C in (11, 13, 17) else 4
    head_size = C // num_heads

    def layer_norm(h):
        mu = h.mean(-1, keepdims=True)
        var = ((h - mu) ** 2).mean(-1, keepdims=True)
        return (h - mu) / jnp.sqrt(var + 1e-6) * params["ln_gamma"] + params["ln_beta"]

    def attention(h, p):
        qkv = h @ p["wqkv"] + p["bqkv"][0]
        q, k, v = qkv[:, :C], qkv[:, C:2 * C], qkv[:, 2 * C:]

        def split(t):
            return t.reshape(C, num_heads, head_size).transpose(1, 0, 2)

        q, k, v = split(q), split(k), split(v)
        s = jnp.einsum("hqd,hkd->hqk", q, k) / math.sqrt(head_size)
        s = s - s.max(-1, keepdims=True)
        e = jnp.exp(s)
        pr = e / e.sum(-1, keepdims=True)
        ctx = jnp.einsum("hqk,hkd->hqd", pr, v).transpose(1, 0, 2).reshape(C, C)
        return ctx @ p["wo"] + p["bo"][0]

    hn = layer_norm(a1)
    x1 = attention(hn, params["attn1"])
    x2 = attention(hn, params["attn2"])
    a = x1 @ x2 + jnp.eye(C, dtype=jnp.float32)
    d = a.sum(1) ** -0.5
    D = jnp.diag(d)
    adj = (a @ D).T @ D
    h1 = adj @ (inp @ params["gc1_w"])
    h1 = jnp.where(h1 > 0, h1, 0.2 * h1)
    h2 = adj @ (h1 @ params["gc2_w"])
    return h2.T @ h2


if __name__ == "__main__":
    num_classes, in_channel = 20, 300   # VOC-style config -> 4 attention heads
    key = jax.random.PRNGKey(0)
    k_inp, k_a1, k_a2, k_par = jax.random.split(key, 4)

    inp = jax.random.normal(k_inp, (num_classes, in_channel), jnp.float32)
    a1 = jax.random.uniform(k_a1, (num_classes, num_classes), jnp.float32)   # A_1 (batch dim squeezed)
    a2 = jax.random.uniform(k_a2, (num_classes, num_classes), jnp.float32)   # A_2 (unused by forward)
    params = init_params(k_par, num_classes, in_channel)

    out = jax.jit(gatn_forward)(inp, a1, a2, params)
    out = jax.block_until_ready(out)

    with jax.default_matmul_precision("highest"):
        ref = gatn_reference(inp, a1, params, num_classes)

    assert out.shape == (in_channel, in_channel)
    assert bool(jnp.isfinite(out).all())
    assert bool(jnp.allclose(out, ref, rtol=2e-2, atol=2e-2)), float(jnp.max(jnp.abs(out - ref)))
    print("KERNEL_OK")
</pallas_src>

<mosaic_0001>
module attributes {stable_mosaic.version = 11 : i64} {
  func.func @_gatn_kernel(%arg0: i32, %arg1: memref<20x20xf32, #tpu.memory_space<vmem>>, %arg2: memref<1x20xf32, #tpu.memory_space<vmem>>, %arg3: memref<1x20xf32, #tpu.memory_space<vmem>>, %arg4: memref<20x120xf32, #tpu.memory_space<vmem>>, %arg5: memref<1x120xf32, #tpu.memory_space<vmem>>, %arg6: memref<20x20xf32, #tpu.memory_space<vmem>>, %arg7: memref<1x20xf32, #tpu.memory_space<vmem>>, %arg8: memref<20x20xf32, #tpu.memory_space<vmem>>, %arg9: memref<1x20xf32, #tpu.memory_space<vmem>>, %arg10: memref<20x300xbf16, #tpu.memory_space<vmem>>, %arg11: memref<300x512xbf16, #tpu.memory_space<vmem>>, %arg12: memref<512x300xbf16, #tpu.memory_space<vmem>>, %arg13: memref<300x300xf32, #tpu.memory_space<vmem>>, %arg14: memref<20x20xf32, #tpu.memory_space<vmem>>, %arg15: memref<20x300xbf16, #tpu.memory_space<vmem>>, %arg16: memref<20x300xf32, #tpu.memory_space<vmem>>) attributes {dimension_semantics = [#tpu.dimension_semantics<arbitrary>], iteration_bounds = array<i64: 2>, scalar_prefetch = 0 : i64, scratch_operands = 3 : i64, tpu.core_type = #tpu.core_type<tc>, window_params = [{pipeline_mode = #tpu.pipeline_mode<synchronous>, transform_indices = @transform_0, window_bounds = array<i64: 20, 20>}, {pipeline_mode = #tpu.pipeline_mode<synchronous>, transform_indices = @transform_1, window_bounds = array<i64: 1, 20>}, {pipeline_mode = #tpu.pipeline_mode<synchronous>, transform_indices = @transform_2, window_bounds = array<i64: 1, 20>}, {pipeline_mode = #tpu.pipeline_mode<synchronous>, transform_indices = @transform_3, window_bounds = array<i64: 20, 120>}, {pipeline_mode = #tpu.pipeline_mode<synchronous>, transform_indices = @transform_4, window_bounds = array<i64: 1, 120>}, {pipeline_mode = #tpu.pipeline_mode<synchronous>, transform_indices = @transform_5, window_bounds = array<i64: 20, 20>}, {pipeline_mode = #tpu.pipeline_mode<synchronous>, transform_indices = @transform_6, window_bounds = array<i64: 1, 20>}, {pipeline_mode = #tpu.pipeline_mode<synchronous>, transform_indices = @transform_7, window_bounds = array<i64: 20, 20>}, {pipeline_mode = #tpu.pipeline_mode<synchronous>, transform_indices = @transform_8, window_bounds = array<i64: 1, 20>}, {pipeline_mode = #tpu.pipeline_mode<synchronous>, transform_indices = @transform_9, window_bounds = array<i64: 20, 300>}, {pipeline_mode = #tpu.pipeline_mode<double_buffered>, transform_indices = @transform_10, window_bounds = array<i64: 300, 512>}, {pipeline_mode = #tpu.pipeline_mode<double_buffered>, transform_indices = @transform_11, window_bounds = array<i64: 512, 300>}, {pipeline_mode = #tpu.pipeline_mode<synchronous>, transform_indices = @transform_12, window_bounds = array<i64: 300, 300>}]} {
    %c0_i32 = arith.constant 0 : i32
    %0 = arith.cmpi eq, %arg0, %c0_i32 : i32
    %1 = arith.extui %0 : i1 to i32
    %c0_i32_0 = arith.constant 0 : i32
    %2 = arith.cmpi ne, %1, %c0_i32_0 : i32
    scf.if %2 {
      %c0_14 = arith.constant 0 : index
      %c0_15 = arith.constant 0 : index
      %20 = vector.load %arg1[%c0_14, %c0_15] : memref<20x20xf32, #tpu.memory_space<vmem>>, vector<20x20xf32>
      %cst_16 = arith.constant dense<0.000000e+00> : vector<20xf32>
      %21 = vector.multi_reduction <add>, %20, %cst_16 [1] : vector<20x20xf32> to vector<20xf32>
      %22 = vector.shape_cast %21 : vector<20xf32> to vector<20x1xf32>
      %cst_17 = arith.constant 2.000000e+01 : f32
      %23 = vector.broadcast %cst_17 : f32 to vector<20x1xf32>
      %24 = arith.divf %22, %23 : vector<20x1xf32>
      %25 = vector.broadcast %24 : vector<20x1xf32> to vector<20x20xf32>
      %26 = arith.subf %20, %25 : vector<20x20xf32>
      %27 = vector.broadcast %24 : vector<20x1xf32> to vector<20x20xf32>
      %28 = arith.subf %20, %27 : vector<20x20xf32>
      %29 = arith.mulf %26, %28 : vector<20x20xf32>
      %cst_18 = arith.constant dense<0.000000e+00> : vector<20xf32>
      %30 = vector.multi_reduction <add>, %29, %cst_18 [1] : vector<20x20xf32> to vector<20xf32>
      %31 = vector.shape_cast %30 : vector<20xf32> to vector<20x1xf32>
      %cst_19 = arith.constant 2.000000e+01 : f32
      %32 = vector.broadcast %cst_19 : f32 to vector<20x1xf32>
      %33 = arith.divf %31, %32 : vector<20x1xf32>
      %34 = vector.broadcast %24 : vector<20x1xf32> to vector<20x20xf32>
      %35 = arith.subf %20, %34 : vector<20x20xf32>
      %cst_20 = arith.constant 9.99999997E-7 : f32
      %36 = vector.broadcast %cst_20 : f32 to vector<20x1xf32>
      %37 = arith.addf %33, %36 : vector<20x1xf32>
      %38 = math.rsqrt %37 : vector<20x1xf32>
      %39 = vector.broadcast %38 : vector<20x1xf32> to vector<20x20xf32>
      %40 = arith.mulf %35, %39 : vector<20x20xf32>
      %c0_21 = arith.constant 0 : index
      %c0_22 = arith.constant 0 : index
      %41 = vector.load %arg2[%c0_21, %c0_22] : memref<1x20xf32, #tpu.memory_space<vmem>>, vector<1x20xf32>
      %42 = vector.broadcast %41 : vector<1x20xf32> to vector<20x20xf32>
      %43 = arith.mulf %40, %42 : vector<20x20xf32>
      %c0_23 = arith.constant 0 : index
      %c0_24 = arith.constant 0 : index
      %44 = vector.load %arg3[%c0_23, %c0_24] : memref<1x20xf32, #tpu.memory_space<vmem>>, vector<1x20xf32>
      %45 = vector.broadcast %44 : vector<1x20xf32> to vector<20x20xf32>
      %46 = arith.addf %43, %45 : vector<20x20xf32>
      %c0_25 = arith.constant 0 : index
      %c0_26 = arith.constant 0 : index
      %47 = vector.load %arg4[%c0_25, %c0_26] : memref<20x120xf32, #tpu.memory_space<vmem>>, vector<20x120xf32>
      %cst_27 = arith.constant dense<0.000000e+00> : vector<20x120xf32>
      %48 = tpu.matmul %46, %47, %cst_27 {dimension_numbers = #tpu.dot_dimension_numbers<[1], [0], [0], [1], [0, 0, 1, 1], [], []>} : vector<20x20xf32>, vector<20x120xf32>, vector<20x120xf32> -> vector<20x120xf32>
      %c0_28 = arith.constant 0 : index
      %c0_29 = arith.constant 0 : index
      %49 = vector.load %arg5[%c0_28, %c0_29] : memref<1x120xf32, #tpu.memory_space<vmem>>, vector<1x120xf32>
      %50 = vector.broadcast %49 : vector<1x120xf32> to vector<20x120xf32>
      %51 = arith.addf %48, %50 : vector<20x120xf32>
      %52 = vector.extract_strided_slice %51 {offsets = [0, 0], sizes = [20, 20], strides = [1, 1]} : vector<20x120xf32> to vector<20x20xf32>
      %53 = vector.extract_strided_slice %51 {offsets = [0, 20], sizes = [20, 20], strides = [1, 1]} : vector<20x120xf32> to vector<20x20xf32>
      %54 = vector.extract_strided_slice %51 {offsets = [0, 40], sizes = [20, 20], strides = [1, 1]} : vector<20x120xf32> to vector<20x20xf32>
      %55 = vector.extract_strided_slice %52 {offsets = [0, 0], sizes = [20, 5], strides = [1, 1]} : vector<20x20xf32> to vector<20x5xf32>
      %56 = vector.extract_strided_slice %53 {offsets = [0, 0], sizes = [20, 5], strides = [1, 1]} : vector<20x20xf32> to vector<20x5xf32>
      %cst_30 = arith.constant dense<0.000000e+00> : vector<20x20xf32>
      %57 = tpu.matmul %55, %56, %cst_30 {dimension_numbers = #tpu.dot_dimension_numbers<[1], [1], [0], [0], [0, 0, 1, 0], [], []>} : vector<20x5xf32>, vector<20x5xf32>, vector<20x20xf32> -> vector<20x20xf32>
      %cst_31 = arith.constant 0.44721359 : f32
      %58 = vector.broadcast %cst_31 : f32 to vector<20x20xf32>
      %59 = arith.mulf %57, %58 : vector<20x20xf32>
      %60 = vector.extract_strided_slice %54 {offsets = [0, 0], sizes = [20, 5], strides = [1, 1]} : vector<20x20xf32> to vector<20x5xf32>
      %61 = vector.extract_strided_slice %52 {offsets = [0, 5], sizes = [20, 5], strides = [1, 1]} : vector<20x20xf32> to vector<20x5xf32>
      %62 = vector.extract_strided_slice %53 {offsets = [0, 5], sizes = [20, 5], strides = [1, 1]} : vector<20x20xf32> to vector<20x5xf32>
      %cst_32 = arith.constant dense<0.000000e+00> : vector<20x20xf32>
      %63 = tpu.matmul %61, %62, %cst_32 {dimension_numbers = #tpu.dot_dimension_numbers<[1], [1], [0], [0], [0, 0, 1, 0], [], []>} : vector<20x5xf32>, vector<20x5xf32>, vector<20x20xf32> -> vector<20x20xf32>
      %cst_33 = arith.constant 0.44721359 : f32
      %64 = vector.broadcast %cst_33 : f32 to vector<20x20xf32>
      %65 = arith.mulf %63, %64 : vector<20x20xf32>
      %66 = vector.extract_strided_slice %54 {offsets = [0, 5], sizes = [20, 5], strides = [1, 1]} : vector<20x20xf32> to vector<20x5xf32>
      %67 = vector.extract_strided_slice %52 {offsets = [0, 10], sizes = [20, 5], strides = [1, 1]} : vector<20x20xf32> to vector<20x5xf32>
      %68 = vector.extract_strided_slice %53 {offsets = [0, 10], sizes = [20, 5], strides = [1, 1]} : vector<20x20xf32> to vector<20x5xf32>
      %cst_34 = arith.constant dense<0.000000e+00> : vector<20x20xf32>
      %69 = tpu.matmul %67, %68, %cst_34 {dimension_numbers = #tpu.dot_dimension_numbers<[1], [1], [0], [0], [0, 0, 1, 0], [], []>} : vector<20x5xf32>, vector<20x5xf32>, vector<20x20xf32> -> vector<20x20xf32>
      %cst_35 = arith.constant 0.44721359 : f32
      %70 = vector.broadcast %cst_35 : f32 to vector<20x20xf32>
      %71 = arith.mulf %69, %70 : vector<20x20xf32>
      %72 = vector.extract_strided_slice %54 {offsets = [0, 10], sizes = [20, 5], strides = [1, 1]} : vector<20x20xf32> to vector<20x5xf32>
      %73 = vector.extract_strided_slice %52 {offsets = [0, 15], sizes = [20, 5], strides = [1, 1]} : vector<20x20xf32> to vector<20x5xf32>
      %74 = vector.extract_strided_slice %53 {offsets = [0, 15], sizes = [20, 5], strides = [1, 1]} : vector<20x20xf32> to vector<20x5xf32>
      %cst_36 = arith.constant dense<0.000000e+00> : vector<20x20xf32>
      %75 = tpu.matmul %73, %74, %cst_36 {dimension_numbers = #tpu.dot_dimension_numbers<[1], [1], [0], [0], [0, 0, 1, 0], [], []>} : vector<20x5xf32>, vector<20x5xf32>, vector<20x20xf32> -> vector<20x20xf32>
      %cst_37 = arith.constant 0.44721359 : f32
      %76 = vector.broadcast %cst_37 : f32 to vector<20x20xf32>
      %77 = arith.mulf %75, %76 : vector<20x20xf32>
      %78 = vector.extract_strided_slice %54 {offsets = [0, 15], sizes = [20, 5], strides = [1, 1]} : vector<20x20xf32> to vector<20x5xf32>
      %79 = vector.extract_strided_slice %51 {offsets = [0, 60], sizes = [20, 20], strides = [1, 1]} : vector<20x120xf32> to vector<20x20xf32>
      %80 = vector.extract_strided_slice %51 {offsets = [0, 80], sizes = [20, 20], strides = [1, 1]} : vector<20x120xf32> to vector<20x20xf32>
      %81 = vector.extract_strided_slice %51 {offsets = [0, 100], sizes = [20, 20], strides = [1, 1]} : vector<20x120xf32> to vector<20x20xf32>
      %82 = vector.extract_strided_slice %79 {offsets = [0, 0], sizes = [20, 5], strides = [1, 1]} : vector<20x20xf32> to vector<20x5xf32>
      %83 = vector.extract_strided_slice %80 {offsets = [0, 0], sizes = [20, 5], strides = [1, 1]} : vector<20x20xf32> to vector<20x5xf32>
      %cst_38 = arith.constant dense<0.000000e+00> : vector<20x20xf32>
      %84 = tpu.matmul %82, %83, %cst_38 {dimension_numbers = #tpu.dot_dimension_numbers<[1], [1], [0], [0], [0, 0, 1, 0], [], []>} : vector<20x5xf32>, vector<20x5xf32>, vector<20x20xf32> -> vector<20x20xf32>
      %cst_39 = arith.constant 0.44721359 : f32
      %85 = vector.broadcast %cst_39 : f32 to vector<20x20xf32>
      %86 = arith.mulf %84, %85 : vector<20x20xf32>
      %87 = vector.extract_strided_slice %81 {offsets = [0, 0], sizes = [20, 5], strides = [1, 1]} : vector<20x20xf32> to vector<20x5xf32>
      %88 = vector.extract_strided_slice %79 {offsets = [0, 5], sizes = [20, 5], strides = [1, 1]} : vector<20x20xf32> to vector<20x5xf32>
      %89 = vector.extract_strided_slice %80 {offsets = [0, 5], sizes = [20, 5], strides = [1, 1]} : vector<20x20xf32> to vector<20x5xf32>
      %cst_40 = arith.constant dense<0.000000e+00> : vector<20x20xf32>
      %90 = tpu.matmul %88, %89, %cst_40 {dimension_numbers = #tpu.dot_dimension_numbers<[1], [1], [0], [0], [0, 0, 1, 0], [], []>} : vector<20x5xf32>, vector<20x5xf32>, vector<20x20xf32> -> vector<20x20xf32>
      %cst_41 = arith.constant 0.44721359 : f32
      %91 = vector.broadcast %cst_41 : f32 to vector<20x20xf32>
      %92 = arith.mulf %90, %91 : vector<20x20xf32>
      %93 = vector.extract_strided_slice %81 {offsets = [0, 5], sizes = [20, 5], strides = [1, 1]} : vector<20x20xf32> to vector<20x5xf32>
      %94 = vector.extract_strided_slice %79 {offsets = [0, 10], sizes = [20, 5], strides = [1, 1]} : vector<20x20xf32> to vector<20x5xf32>
      %95 = vector.extract_strided_slice %80 {offsets = [0, 10], sizes = [20, 5], strides = [1, 1]} : vector<20x20xf32> to vector<20x5xf32>
      %cst_42 = arith.constant dense<0.000000e+00> : vector<20x20xf32>
      %96 = tpu.matmul %94, %95, %cst_42 {dimension_numbers = #tpu.dot_dimension_numbers<[1], [1], [0], [0], [0, 0, 1, 0], [], []>} : vector<20x5xf32>, vector<20x5xf32>, vector<20x20xf32> -> vector<20x20xf32>
      %cst_43 = arith.constant 0.44721359 : f32
      %97 = vector.broadcast %cst_43 : f32 to vector<20x20xf32>
      %98 = arith.mulf %96, %97 : vector<20x20xf32>
      %99 = vector.extract_strided_slice %81 {offsets = [0, 10], sizes = [20, 5], strides = [1, 1]} : vector<20x20xf32> to vector<20x5xf32>
      %100 = vector.extract_strided_slice %79 {offsets = [0, 15], sizes = [20, 5], strides = [1, 1]} : vector<20x20xf32> to vector<20x5xf32>
      %101 = vector.extract_strided_slice %80 {offsets = [0, 15], sizes = [20, 5], strides = [1, 1]} : vector<20x20xf32> to vector<20x5xf32>
      %cst_44 = arith.constant dense<0.000000e+00> : vector<20x20xf32>
      %102 = tpu.matmul %100, %101, %cst_44 {dimension_numbers = #tpu.dot_dimension_numbers<[1], [1], [0], [0], [0, 0, 1, 0], [], []>} : vector<20x5xf32>, vector<20x5xf32>, vector<20x20xf32> -> vector<20x20xf32>
      %cst_45 = arith.constant 0.44721359 : f32
      %103 = vector.broadcast %cst_45 : f32 to vector<20x20xf32>
      %104 = arith.mulf %102, %103 : vector<20x20xf32>
      %105 = vector.extract_strided_slice %81 {offsets = [0, 15], sizes = [20, 5], strides = [1, 1]} : vector<20x20xf32> to vector<20x5xf32>
      %106 = tpu.concatenate %59, %65, %71, %77, %86, %92, %98, %104 in 0 : vector<20x20xf32>, vector<20x20xf32>, vector<20x20xf32>, vector<20x20xf32>, vector<20x20xf32>, vector<20x20xf32>, vector<20x20xf32>, vector<20x20xf32> -> vector<160x20xf32>
      %cst_46 = arith.constant dense<0xFF800000> : vector<160xf32>
      %107 = vector.multi_reduction <maximumf>, %106, %cst_46 [1] : vector<160x20xf32> to vector<160xf32>
      %108 = vector.shape_cast %107 : vector<160xf32> to vector<160x1xf32>
      %109 = vector.broadcast %108 : vector<160x1xf32> to vector<160x20xf32>
      %110 = arith.subf %106, %109 : vector<160x20xf32>
      %111 = math.exp %110 : vector<160x20xf32>
      %cst_47 = arith.constant dense<0.000000e+00> : vector<160xf32>
      %112 = vector.multi_reduction <add>, %111, %cst_47 [1] : vector<160x20xf32> to vector<160xf32>
      %113 = vector.shape_cast %112 : vector<160xf32> to vector<160x1xf32>
      %114 = tpu.reciprocal %113 {approx = true} : vector<160x1xf32> -> vector<160x1xf32>
      %115 = vector.broadcast %114 : vector<160x1xf32> to vector<160x20xf32>
      %116 = arith.mulf %111, %115 : vector<160x20xf32>
      %117 = vector.extract_strided_slice %116 {offsets = [0, 0], sizes = [20, 20], strides = [1, 1]} : vector<160x20xf32> to vector<20x20xf32>
      %cst_48 = arith.constant dense<0.000000e+00> : vector<20x5xf32>
      %118 = tpu.matmul %117, %60, %cst_48 {dimension_numbers = #tpu.dot_dimension_numbers<[1], [0], [0], [1], [0, 0, 1, 1], [], []>} : vector<20x20xf32>, vector<20x5xf32>, vector<20x5xf32> -> vector<20x5xf32>
      %119 = vector.extract_strided_slice %116 {offsets = [20, 0], sizes = [20, 20], strides = [1, 1]} : vector<160x20xf32> to vector<20x20xf32>
      %cst_49 = arith.constant dense<0.000000e+00> : vector<20x5xf32>
      %120 = tpu.matmul %119, %66, %cst_49 {dimension_numbers = #tpu.dot_dimension_numbers<[1], [0], [0], [1], [0, 0, 1, 1], [], []>} : vector<20x20xf32>, vector<20x5xf32>, vector<20x5xf32> -> vector<20x5xf32>
      %121 = vector.extract_strided_slice %116 {offsets = [40, 0], sizes = [20, 20], strides = [1, 1]} : vector<160x20xf32> to vector<20x20xf32>
      %cst_50 = arith.constant dense<0.000000e+00> : vector<20x5xf32>
      %122 = tpu.matmul %121, %72, %cst_50 {dimension_numbers = #tpu.dot_dimension_numbers<[1], [0], [0], [1], [0, 0, 1, 1], [], []>} : vector<20x20xf32>, vector<20x5xf32>, vector<20x5xf32> -> vector<20x5xf32>
      %123 = vector.extract_strided_slice %116 {offsets = [60, 0], sizes = [20, 20], strides = [1, 1]} : vector<160x20xf32> to vector<20x20xf32>
      %cst_51 = arith.constant dense<0.000000e+00> : vector<20x5xf32>
      %124 = tpu.matmul %123, %78, %cst_51 {dimension_numbers = #tpu.dot_dimension_numbers<[1], [0], [0], [1], [0, 0, 1, 1], [], []>} : vector<20x20xf32>, vector<20x5xf32>, vector<20x5xf32> -> vector<20x5xf32>
      %125 = vector.extract_strided_slice %116 {offsets = [80, 0], sizes = [20, 20], strides = [1, 1]} : vector<160x20xf32> to vector<20x20xf32>
      %cst_52 = arith.constant dense<0.000000e+00> : vector<20x5xf32>
      %126 = tpu.matmul %125, %87, %cst_52 {dimension_numbers = #tpu.dot_dimension_numbers<[1], [0], [0], [1], [0, 0, 1, 1], [], []>} : vector<20x20xf32>, vector<20x5xf32>, vector<20x5xf32> -> vector<20x5xf32>
      %127 = vector.extract_strided_slice %116 {offsets = [100, 0], sizes = [20, 20], strides = [1, 1]} : vector<160x20xf32> to vector<20x20xf32>
      %cst_53 = arith.constant dense<0.000000e+00> : vector<20x5xf32>
      %128 = tpu.matmul %127, %93, %cst_53 {dimension_numbers = #tpu.dot_dimension_numbers<[1], [0], [0], [1], [0, 0, 1, 1], [], []>} : vector<20x20xf32>, vector<20x5xf32>, vector<20x5xf32> -> vector<20x5xf32>
      %129 = vector.extract_strided_slice %116 {offsets = [120, 0], sizes = [20, 20], strides = [1, 1]} : vector<160x20xf32> to vector<20x20xf32>
      %cst_54 = arith.constant dense<0.000000e+00> : vector<20x5xf32>
      %130 = tpu.matmul %129, %99, %cst_54 {dimension_numbers = #tpu.dot_dimension_numbers<[1], [0], [0], [1], [0, 0, 1, 1], [], []>} : vector<20x20xf32>, vector<20x5xf32>, vector<20x5xf32> -> vector<20x5xf32>
      %131 = vector.extract_strided_slice %116 {offsets = [140, 0], sizes = [20, 20], strides = [1, 1]} : vector<160x20xf32> to vector<20x20xf32>
      %cst_55 = arith.constant dense<0.000000e+00> : vector<20x5xf32>
      %132 = tpu.matmul %131, %105, %cst_55 {dimension_numbers = #tpu.dot_dimension_numbers<[1], [0], [0], [1], [0, 0, 1, 1], [], []>} : vector<20x20xf32>, vector<20x5xf32>, vector<20x5xf32> -> vector<20x5xf32>
      %133 = tpu.concatenate %118, %120, %122, %124 in 1 : vector<20x5xf32>, vector<20x5xf32>, vector<20x5xf32>, vector<20x5xf32> -> vector<20x20xf32>
      %c0_56 = arith.constant 0 : index
      %c0_57 = arith.constant 0 : index
      %134 = vector.load %arg6[%c0_56, %c0_57] : memref<20x20xf32, #tpu.memory_space<vmem>>, vector<20x20xf32>
      %cst_58 = arith.constant dense<0.000000e+00> : vector<20x20xf32>
      %135 = tpu.matmul %133, %134, %cst_58 {dimension_numbers = #tpu.dot_dimension_numbers<[1], [0], [0], [1], [0, 0, 1, 1], [], []>} : vector<20x20xf32>, vector<20x20xf32>, vector<20x20xf32> -> vector<20x20xf32>
      %c0_59 = arith.constant 0 : index
      %c0_60 = arith.constant 0 : index
      %136 = vector.load %arg7[%c0_59, %c0_60] : memref<1x20xf32, #tpu.memory_space<vmem>>, vector<1x20xf32>
      %137 = vector.broadcast %136 : vector<1x20xf32> to vector<20x20xf32>
      %138 = arith.addf %135, %137 : vector<20x20xf32>
      %139 = tpu.concatenate %126, %128, %130, %132 in 1 : vector<20x5xf32>, vector<20x5xf32>, vector<20x5xf32>, vector<20x5xf32> -> vector<20x20xf32>
      %c0_61 = arith.constant 0 : index
      %c0_62 = arith.constant 0 : index
      %140 = vector.load %arg8[%c0_61, %c0_62] : memref<20x20xf32, #tpu.memory_space<vmem>>, vector<20x20xf32>
      %cst_63 = arith.constant dense<0.000000e+00> : vector<20x20xf32>
      %141 = tpu.matmul %139, %140, %cst_63 {dimension_numbers = #tpu.dot_dimension_numbers<[1], [0], [0], [1], [0, 0, 1, 1], [], []>} : vector<20x20xf32>, vector<20x20xf32>, vector<20x20xf32> -> vector<20x20xf32>
      %c0_64 = arith.constant 0 : index
      %c0_65 = arith.constant 0 : index
      %142 = vector.load %arg9[%c0_64, %c0_65] : memref<1x20xf32, #tpu.memory_space<vmem>>, vector<1x20xf32>
      %143 = vector.broadcast %142 : vector<1x20xf32> to vector<20x20xf32>
      %144 = arith.addf %141, %143 : vector<20x20xf32>
      %cst_66 = arith.constant dense<0.000000e+00> : vector<20x20xf32>
      %145 = tpu.matmul %138, %144, %cst_66 {dimension_numbers = #tpu.dot_dimension_numbers<[1], [0], [0], [1], [0, 0, 1, 1], [], []>} : vector<20x20xf32>, vector<20x20xf32>, vector<20x20xf32> -> vector<20x20xf32>
      %146 = tpu.iota {dimensions = array<i32: 0>} : vector<20x20xi32>
      %147 = tpu.iota {dimensions = array<i32: 1>} : vector<20x20xi32>
      %148 = arith.cmpi eq, %146, %147 : vector<20x20xi32>
      %cst_67 = arith.constant 1.000000e+00 : f32
      %cst_68 = arith.constant 0.000000e+00 : f32
      %149 = vector.broadcast %cst_67 : f32 to vector<20x20xf32>
      %150 = vector.broadcast %cst_68 : f32 to vector<20x20xf32>
      %151 = arith.select %148, %149, %150 : vector<20x20xi1>, vector<20x20xf32>
      %152 = arith.addf %145, %151 : vector<20x20xf32>
      %cst_69 = arith.constant dense<0.000000e+00> : vector<20xf32>
      %153 = vector.multi_reduction <add>, %152, %cst_69 [1] : vector<20x20xf32> to vector<20xf32>
      %154 = vector.shape_cast %153 : vector<20xf32> to vector<20x1xf32>
      %155 = math.rsqrt %154 : vector<20x1xf32>
      %156 = vector.broadcast %155 : vector<20x1xf32> to vector<20x20xf32>
      %157 = arith.mulf %152, %156 : vector<20x20xf32>
      %158 = tpu.transpose %155, [1, 0] : vector<20x1xf32> -> vector<1x20xf32>
      %159 = vector.broadcast %158 : vector<1x20xf32> to vector<20x20xf32>
      %160 = arith.mulf %157, %159 : vector<20x20xf32>
      %161 = tpu.transpose %160, [1, 0] : vector<20x20xf32> -> vector<20x20xf32>
      %c0_70 = arith.constant 0 : index
      %c0_71 = arith.constant 0 : index
      %162 = vector.load %arg14[%c0_70, %c0_71] : memref<20x20xf32, #tpu.memory_space<vmem>>, vector<20x20xf32>
      tpu.vector_store %arg14[%c0_70, %c0_71], %161 {strides = array<i32>} : memref<20x20xf32, #tpu.memory_space<vmem>>, vector<20x20xf32>,
      %c0_72 = arith.constant 0 : index
      %c0_73 = arith.constant 0 : index
      %163 = vector.load %arg10[%c0_72, %c0_73] : memref<20x300xbf16, #tpu.memory_space<vmem>>, vector<20x300xbf16>
      %164 = arith.extf %163 : vector<20x300xbf16> to vector<20x300xf32>
      %cst_74 = arith.constant dense<0.000000e+00> : vector<20x300xf32>
      %165 = tpu.matmul %161, %164, %cst_74 {dimension_numbers = #tpu.dot_dimension_numbers<[1], [0], [0], [1], [0, 0, 1, 1], [], []>} : vector<20x20xf32>, vector<20x300xf32>, vector<20x300xf32> -> vector<20x300xf32>
      %166 = arith.truncf %165 : vector<20x300xf32> to vector<20x300xbf16>
      %c0_75 = arith.constant 0 : index
      %c0_76 = arith.constant 0 : index
      %167 = vector.load %arg15[%c0_75, %c0_76] : memref<20x300xbf16, #tpu.memory_space<vmem>>, vector<20x300xbf16>
      tpu.vector_store %arg15[%c0_75, %c0_76], %166 {strides = array<i32>} : memref<20x300xbf16, #tpu.memory_space<vmem>>, vector<20x300xbf16>,
      %cst_77 = arith.constant 0.000000e+00 : f32
      %168 = vector.broadcast %cst_77 : f32 to vector<20x300xf32>
      %c0_78 = arith.constant 0 : index
      %c0_79 = arith.constant 0 : index
      %169 = vector.load %arg16[%c0_78, %c0_79] : memref<20x300xf32, #tpu.memory_space<vmem>>, vector<20x300xf32>
      tpu.vector_store %arg16[%c0_78, %c0_79], %168 {strides = array<i32>} : memref<20x300xf32, #tpu.memory_space<vmem>>, vector<20x300xf32>,
    } else {
    }
    %c0 = arith.constant 0 : index
    %c0_1 = arith.constant 0 : index
    %3 = vector.load %arg15[%c0, %c0_1] : memref<20x300xbf16, #tpu.memory_space<vmem>>, vector<20x300xbf16>
    %c0_2 = arith.constant 0 : index
    %c0_3 = arith.constant 0 : index
    %4 = vector.load %arg11[%c0_2, %c0_3] : memref<300x512xbf16, #tpu.memory_space<vmem>>, vector<300x512xbf16>
    %cst = arith.constant dense<0.000000e+00> : vector<20x512xf32>
    %5 = tpu.matmul %3, %4, %cst {dimension_numbers = #tpu.dot_dimension_numbers<[1], [0], [0], [1], [0, 0, 1, 1], [], []>} : vector<20x300xbf16>, vector<300x512xbf16>, vector<20x512xf32> -> vector<20x512xf32>
    %cst_4 = arith.constant 0.000000e+00 : f32
    %6 = vector.broadcast %cst_4 : f32 to vector<20x512xf32>
    %7 = arith.cmpf ogt, %5, %6 : vector<20x512xf32>
    %cst_5 = arith.constant 2.000000e-01 : f32
    %8 = vector.broadcast %cst_5 : f32 to vector<20x512xf32>
    %9 = arith.mulf %8, %5 : vector<20x512xf32>
    %10 = arith.select %7, %5, %9 : vector<20x512xi1>, vector<20x512xf32>
    %c0_6 = arith.constant 0 : index
    %c0_7 = arith.constant 0 : index
    %11 = vector.load %arg16[%c0_6, %c0_7] : memref<20x300xf32, #tpu.memory_space<vmem>>, vector<20x300xf32>
    %12 = arith.truncf %10 : vector<20x512xf32> to vector<20x512xbf16>
    %c0_8 = arith.constant 0 : index
    %c0_9 = arith.constant 0 : index
    %13 = vector.load %arg12[%c0_8, %c0_9] : memref<512x300xbf16, #tpu.memory_space<vmem>>, vector<512x300xbf16>
    %cst_10 = arith.constant dense<0.000000e+00> : vector<20x300xf32>
    %14 = tpu.matmul %12, %13, %cst_10 {dimension_numbers = #tpu.dot_dimension_numbers<[1], [0], [0], [1], [0, 0, 1, 1], [], []>} : vector<20x512xbf16>, vector<512x300xbf16>, vector<20x300xf32> -> vector<20x300xf32>
    %15 = arith.addf %11, %14 : vector<20x300xf32>
    %c0_11 = arith.constant 0 : index
    %c0_12 = arith.constant 0 : index
    %16 = vector.load %arg16[%c0_11, %c0_12] : memref<20x300xf32, #tpu.memory_space<vmem>>, vector<20x300xf32>
    tpu.vector_store %arg16[%c0_11, %c0_12], %15 {strides = array<i32>} : memref<20x300xf32, #tpu.memory_space<vmem>>, vector<20x300xf32>,
    %c1_i32 = arith.constant 1 : i32
    %17 = arith.cmpi eq, %arg0, %c1_i32 : i32
    %18 = arith.extui %17 : i1 to i32
    %c0_i32_13 = arith.constant 0 : i32
    %19 = arith.cmpi ne, %18, %c0_i32_13 : i32
    scf.if %19 {
      %c0_14 = arith.constant 0 : index
      %c0_15 = arith.constant 0 : index
      %20 = vector.load %arg14[%c0_14, %c0_15] : memref<20x20xf32, #tpu.memory_space<vmem>>, vector<20x20xf32>
      %c0_16 = arith.constant 0 : index
      %c0_17 = arith.constant 0 : index
      %21 = vector.load %arg16[%c0_16, %c0_17] : memref<20x300xf32, #tpu.memory_space<vmem>>, vector<20x300xf32>
      %cst_18 = arith.constant dense<0.000000e+00> : vector<20x300xf32>
      %22 = tpu.matmul %20, %21, %cst_18 {dimension_numbers = #tpu.dot_dimension_numbers<[1], [0], [0], [1], [0, 0, 1, 1], [], []>} : vector<20x20xf32>, vector<20x300xf32>, vector<20x300xf32> -> vector<20x300xf32>
      %23 = arith.truncf %22 : vector<20x300xf32> to vector<20x300xbf16>
      %cst_19 = arith.constant dense<0.000000e+00> : vector<300x300xf32>
      %24 = tpu.matmul %23, %23, %cst_19 {dimension_numbers = #tpu.dot_dimension_numbers<[0], [0], [1], [1], [0, 1, 1, 1], [], []>} : vector<20x300xbf16>, vector<20x300xbf16>, vector<300x300xf32> -> vector<300x300xf32>
      %c0_20 = arith.constant 0 : index
      %c0_21 = arith.constant 0 : index
      %25 = vector.load %arg13[%c0_20, %c0_21] : memref<300x300xf32, #tpu.memory_space<vmem>>, vector<300x300xf32>
      tpu.vector_store %arg13[%c0_20, %c0_21], %24 {strides = array<i32>} : memref<300x300xf32, #tpu.memory_space<vmem>>, vector<300x300xf32>,
    } else {
    }
    return
  }
  func.func @transform_0(%arg0: i32) -> (i32, i32) {
    %c0_i32 = arith.constant 0 : i32
    %c0_i32_0 = arith.constant 0 : i32
    %c0_i32_1 = arith.constant 0 : i32
    return %c0_i32, %c0_i32_0 : i32, i32
  }
  func.func @transform_1(%arg0: i32) -> (i32, i32) {
    %c0_i32 = arith.constant 0 : i32
    %c0_i32_0 = arith.constant 0 : i32
    %c0_i32_1 = arith.constant 0 : i32
    return %c0_i32, %c0_i32_0 : i32, i32
  }
  func.func @transform_2(%arg0: i32) -> (i32, i32) {
    %c0_i32 = arith.constant 0 : i32
    %c0_i32_0 = arith.constant 0 : i32
    %c0_i32_1 = arith.constant 0 : i32
    return %c0_i32, %c0_i32_0 : i32, i32
  }
  func.func @transform_3(%arg0: i32) -> (i32, i32) {
    %c0_i32 = arith.constant 0 : i32
    %c0_i32_0 = arith.constant 0 : i32
    %c0_i32_1 = arith.constant 0 : i32
    return %c0_i32, %c0_i32_0 : i32, i32
  }
  func.func @transform_4(%arg0: i32) -> (i32, i32) {
    %c0_i32 = arith.constant 0 : i32
    %c0_i32_0 = arith.constant 0 : i32
    %c0_i32_1 = arith.constant 0 : i32
    return %c0_i32, %c0_i32_0 : i32, i32
  }
  func.func @transform_5(%arg0: i32) -> (i32, i32) {
    %c0_i32 = arith.constant 0 : i32
    %c0_i32_0 = arith.constant 0 : i32
    %c0_i32_1 = arith.constant 0 : i32
    return %c0_i32, %c0_i32_0 : i32, i32
  }
  func.func @transform_6(%arg0: i32) -> (i32, i32) {
    %c0_i32 = arith.constant 0 : i32
    %c0_i32_0 = arith.constant 0 : i32
    %c0_i32_1 = arith.constant 0 : i32
    return %c0_i32, %c0_i32_0 : i32, i32
  }
  func.func @transform_7(%arg0: i32) -> (i32, i32) {
    %c0_i32 = arith.constant 0 : i32
    %c0_i32_0 = arith.constant 0 : i32
    %c0_i32_1 = arith.constant 0 : i32
    return %c0_i32, %c0_i32_0 : i32, i32
  }
  func.func @transform_8(%arg0: i32) -> (i32, i32) {
    %c0_i32 = arith.constant 0 : i32
    %c0_i32_0 = arith.constant 0 : i32
    %c0_i32_1 = arith.constant 0 : i32
    return %c0_i32, %c0_i32_0 : i32, i32
  }
  func.func @transform_9(%arg0: i32) -> (i32, i32) {
    %c0_i32 = arith.constant 0 : i32
    %c0_i32_0 = arith.constant 0 : i32
    %c0_i32_1 = arith.constant 0 : i32
    return %c0_i32, %c0_i32_0 : i32, i32
  }
  func.func @transform_10(%arg0: i32) -> (i32, i32) {
    %c0_i32 = arith.constant 0 : i32
    %c0_i32_0 = arith.constant 0 : i32
    return %c0_i32, %arg0 : i32, i32
  }
  func.func @transform_11(%arg0: i32) -> (i32, i32) {
    %c0_i32 = arith.constant 0 : i32
    %c0_i32_0 = arith.constant 0 : i32
    return %arg0, %c0_i32 : i32, i32
  }
  func.func @transform_12(%arg0: i32) -> (i32, i32) {
    %c0_i32 = arith.constant 0 : i32
    %c0_i32_0 = arith.constant 0 : i32
    %c0_i32_1 = arith.constant 0 : i32
    return %c0_i32, %c0_i32_0 : i32, i32
  }
}

</mosaic_0001>

<llo_original>
// kernel: gatn_forward.1
$region0: #{gatn_forward.1}
  #allocation0 [shape = 'u32[]', space=smem, size = 0x4, offset = 0x4, fixed_abs, tag = 'smem constant byte address 0x4 - core index']
  #allocation1 [shape = 'u32[144,128]{1,0:T(1,128)}', space=vmem, size = 0x12000, scoped, tag = 'internal scratch']
  #allocation2 [shape = 'f32[20,20]{1,0:T(8,128)}', space=vmem, size = 0x3000, scoped, tag = 'scratch operand']
  #allocation3 [shape = 'bf16[20,300]{1,0:T(8,128)(2,1)}', space=vmem, size = 0x4800, scoped, tag = 'scratch operand']
  #allocation4 [shape = 'f32[20,300]{1,0:T(8,128)}', space=vmem, size = 0x9000, scoped, tag = 'scratch operand']
  %s0 = inlined_call_operand.vmem [shape: f32[20,20], index: 0, kind: input, shape index: {}]
  %s1 = inlined_call_operand.vmem [shape: f32[1,20], index: 1, kind: input, shape index: {}]
  %s2 = inlined_call_operand.vmem [shape: f32[1,20], index: 2, kind: input, shape index: {}]
  %s3 = inlined_call_operand.vmem [shape: f32[20,120], index: 3, kind: input, shape index: {}]
  %s4 = inlined_call_operand.vmem [shape: f32[1,120], index: 4, kind: input, shape index: {}]
  %s5 = inlined_call_operand.vmem [shape: f32[20,20], index: 5, kind: input, shape index: {}]
  %s6 = inlined_call_operand.vmem [shape: f32[1,20], index: 6, kind: input, shape index: {}]
  %s7 = inlined_call_operand.vmem [shape: f32[20,20], index: 7, kind: input, shape index: {}]
  %s8 = inlined_call_operand.vmem [shape: f32[1,20], index: 8, kind: input, shape index: {}]
  %s9 = inlined_call_operand.vmem [shape: bf16[20,300], index: 9, kind: input, shape index: {}]
  %s10 = inlined_call_operand.vmem [shape: bf16[300,1024], index: 10, kind: input, shape index: {}]
  %s11 = inlined_call_operand.vmem [shape: bf16[1024,300], index: 11, kind: input, shape index: {}]
  %s12 = inlined_call_operand.hbm [shape: f32[300,300], index: 12, kind: output, shape index: {}]
  %s13 = sld [smem:[#allocation0]]
  $region112: #{gatn_forward.1} parent=0
    _
  %s15 = ssub.s32 1, %s13
  %s16 = scalar_select 0, %s15, %s13
  $region1: #{gatn_forward.1} parent=0
    #allocation5 [shape = 'u8[622592]{0}', space=vmem, size = 0x98000, scoped, tag = 'input window, operand 10']
    #allocation6 [shape = 'u8[466944]{0}', space=vmem, size = 0x72000, scoped, tag = 'output window, operand 0, single buffered']
    #allocation7 [shape = 's32[2]{0}', space=sflag, size = 0x8, scoped, tag = 'scoped memory for gatn_forward.1']
    %17 = vsyncpa [#allocation7], 0
    loop: start=0, step=1, limit=4
    $region2: #{gatn_forward.1} parent=1 // loop_pre_header
      _
    $region3: #{gatn_forward.1} parent=1 // loop_header
      %s19 = sphi 0, %s23
      %p20 = scmp.ge.s32.totalorder %s19, 4
      %s27 = sphi 0, %s27
      %s29 = sphi 0, %s27
      %s30 = sphi 0, %s29
      %s44 = sphi 0, %s30
      %s48 = sphi 0, %s48
      %s50 = sphi 0, %s48
      %s51 = sphi 0, %s50
      %s65 = sphi 0, %s51
      %s69 = sphi 0, %s69
      %s71 = sphi 0, %s69
      %s72 = sphi 0, %s71
      %s86 = sphi 0, %s72
      %s90 = sphi 0, %s90
      %s92 = sphi 0, %s90
      %s93 = sphi 0, %s92
      %s107 = sphi 0, %s93
      %s111 = sphi 0, %s111
      %s113 = sphi 0, %s111
      %s114 = sphi 0, %s113
      %s128 = sphi 0, %s114
      %s132 = sphi 0, %s132
      %s134 = sphi 0, %s132
      %s135 = sphi 0, %s134
      %s149 = sphi 0, %s135
      %s153 = sphi 0, %s153
      %s155 = sphi 0, %s153
      %s156 = sphi 0, %s155
      %s170 = sphi 0, %s156
      %s174 = sphi 0, %s174
      %s176 = sphi 0, %s174
      %s177 = sphi 0, %s176
      %s191 = sphi 0, %s177
      %s195 = sphi 0, %s195
      %s197 = sphi 0, %s195
      %s198 = sphi 0, %s197
      %s212 = sphi 0, %s198
      %s216 = sphi 0, %s216
      %s218 = sphi 0, %s216
      %s219 = sphi 0, %s218
      %s233 = sphi 0, %s219
      %s239 = sphi 0, %s241
      %s242 = sphi 0, %s239
      %s243 = sphi 0, %s242
      %s259 = sphi 0, %s243
      %s265 = sphi 0, %s267
      %s268 = sphi 0, %s265
      %s269 = sphi 0, %s268
      %s285 = sphi 0, %s269
      %s289 = sphi 0, %s289
      %s291 = sphi 0, %s289
      %s292 = sphi 0, %s291
      %s306 = sphi 0, %s292
    $region4: #{gatn_forward.1} parent=1 // loop_header_branch
      %22 = sbr.rel (%p20) target = $region8
    $region5: #{gatn_forward.1} parent=1 // loop_body
      %s24 = ssub.s32 %s19, 1
      %s25 = ssub.s32 %s19, 2
      %s26 = sadd.s32 %s19, 1
      %s28 = sadd.s32 %s27, 1
      %p31 = scmp.eq.s32.totalorder %s19, 1
      %p32 = scmp.ne.s32.totalorder %s27, %s29
      %p33 = scmp.eq.s32.totalorder %s19, 0
      %p34 = por %p32, %p33
      %p35 = scmp.ne.s32.totalorder %s27, %s29
      %p36 = scmp.eq.s32.totalorder %s24, 1
      %p37 = por %p35, %p36
      %p38 = scmp.ne.s32.totalorder %s29, %s30
      %p39 = scmp.eq.s32.totalorder %s24, 0
      %p40 = por %p38, %p39
      %p41 = scmp.ne.s32.totalorder %s29, %s30
      %p42 = scmp.eq.s32.totalorder %s25, 1
      %p43 = por %p41, %p42
      %p45 = scmp.ne.s32.totalorder %s30, %s44
      %p46 = scmp.eq.s32.totalorder %s25, 0
      %p47 = por %p45, %p46
      %s49 = sadd.s32 %s48, 1
      %p52 = scmp.eq.s32.totalorder %s19, 1
      %p53 = scmp.ne.s32.totalorder %s48, %s50
      %p54 = scmp.eq.s32.totalorder %s19, 0
      %p55 = por %p53, %p54
      %p56 = scmp.ne.s32.totalorder %s48, %s50
      %p57 = scmp.eq.s32.totalorder %s24, 1
      %p58 = por %p56, %p57
      %p59 = scmp.ne.s32.totalorder %s50, %s51
      %p60 = scmp.eq.s32.totalorder %s24, 0
      %p61 = por %p59, %p60
      %p62 = scmp.ne.s32.totalorder %s50, %s51
      %p63 = scmp.eq.s32.totalorder %s25, 1
      %p64 = por %p62, %p63
      %p66 = scmp.ne.s32.totalorder %s51, %s65
      %p67 = scmp.eq.s32.totalorder %s25, 0
      %p68 = por %p66, %p67
      %s70 = sadd.s32 %s69, 1
      %p73 = scmp.eq.s32.totalorder %s19, 1
      %p74 = scmp.ne.s32.totalorder %s69, %s71
      %p75 = scmp.eq.s32.totalorder %s19, 0
      %p76 = por %p74, %p75
      %p77 = scmp.ne.s32.totalorder %s69, %s71
      %p78 = scmp.eq.s32.totalorder %s24, 1
      %p79 = por %p77, %p78
      %p80 = scmp.ne.s32.totalorder %s71, %s72
      %p81 = scmp.eq.s32.totalorder %s24, 0
      %p82 = por %p80, %p81
      %p83 = scmp.ne.s32.totalorder %s71, %s72
      %p84 = scmp.eq.s32.totalorder %s25, 1
      %p85 = por %p83, %p84
      %p87 = scmp.ne.s32.totalorder %s72, %s86
      %p88 = scmp.eq.s32.totalorder %s25, 0
      %p89 = por %p87, %p88
      %s91 = sadd.s32 %s90, 1
      %p94 = scmp.eq.s32.totalorder %s19, 1
      %p95 = scmp.ne.s32.totalorder %s90, %s92
      %p96 = scmp.eq.s32.totalorder %s19, 0
      %p97 = por %p95, %p96
      %p98 = scmp.ne.s32.totalorder %s90, %s92
      %p99 = scmp.eq.s32.totalorder %s24, 1
      %p100 = por %p98, %p99
      %p101 = scmp.ne.s32.totalorder %s92, %s93
      %p102 = scmp.eq.s32.totalorder %s24, 0
      %p103 = por %p101, %p102
      %p104 = scmp.ne.s32.totalorder %s92, %s93
      %p105 = scmp.eq.s32.totalorder %s25, 1
      %p106 = por %p104, %p105
      %p108 = scmp.ne.s32.totalorder %s93, %s107
      %p109 = scmp.eq.s32.totalorder %s25, 0
      %p110 = por %p108, %p109
      %s112 = sadd.s32 %s111, 1
      %p115 = scmp.eq.s32.totalorder %s19, 1
      %p116 = scmp.ne.s32.totalorder %s111, %s113
      %p117 = scmp.eq.s32.totalorder %s19, 0
      %p118 = por %p116, %p117
      %p119 = scmp.ne.s32.totalorder %s111, %s113
      %p120 = scmp.eq.s32.totalorder %s24, 1
      %p121 = por %p119, %p120
      %p122 = scmp.ne.s32.totalorder %s113, %s114
      %p123 = scmp.eq.s32.totalorder %s24, 0
      %p124 = por %p122, %p123
      %p125 = scmp.ne.s32.totalorder %s113, %s114
      %p126 = scmp.eq.s32.totalorder %s25, 1
      %p127 = por %p125, %p126
      %p129 = scmp.ne.s32.totalorder %s114, %s128
      %p130 = scmp.eq.s32.totalorder %s25, 0
      %p131 = por %p129, %p130
      %s133 = sadd.s32 %s132, 1
      %p136 = scmp.eq.s32.totalorder %s19, 1
      %p137 = scmp.ne.s32.totalorder %s132, %s134
      %p138 = scmp.eq.s32.totalorder %s19, 0
      %p139 = por %p137, %p138
      %p140 = scmp.ne.s32.totalorder %s132, %s134
      %p141 = scmp.eq.s32.totalorder %s24, 1
      %p142 = por %p140, %p141
      %p143 = scmp.ne.s32.totalorder %s134, %s135
      %p144 = scmp.eq.s32.totalorder %s24, 0
      %p145 = por %p143, %p144
      %p146 = scmp.ne.s32.totalorder %s134, %s135
      %p147 = scmp.eq.s32.totalorder %s25, 1
      %p148 = por %p146, %p147
      %p150 = scmp.ne.s32.totalorder %s135, %s149
      %p151 = scmp.eq.s32.totalorder %s25, 0
      %p152 = por %p150, %p151
      %s154 = sadd.s32 %s153, 1
      %p157 = scmp.eq.s32.totalorder %s19, 1
      %p158 = scmp.ne.s32.totalorder %s153, %s155
      %p159 = scmp.eq.s32.totalorder %s19, 0
      %p160 = por %p158, %p159
      %p161 = scmp.ne.s32.totalorder %s153, %s155
      %p162 = scmp.eq.s32.totalorder %s24, 1
      %p163 = por %p161, %p162
      %p164 = scmp.ne.s32.totalorder %s155, %s156
      %p165 = scmp.eq.s32.totalorder %s24, 0
      %p166 = por %p164, %p165
      %p167 = scmp.ne.s32.totalorder %s155, %s156
      %p168 = scmp.eq.s32.totalorder %s25, 1
      %p169 = por %p167, %p168
      %p171 = scmp.ne.s32.totalorder %s156, %s170
      %p172 = scmp.eq.s32.totalorder %s25, 0
      %p173 = por %p171, %p172
      %s175 = sadd.s32 %s174, 1
      %p178 = scmp.eq.s32.totalorder %s19, 1
      %p179 = scmp.ne.s32.totalorder %s174, %s176
      %p180 = scmp.eq.s32.totalorder %s19, 0
      %p181 = por %p179, %p180
      %p182 = scmp.ne.s32.totalorder %s174, %s176
      %p183 = scmp.eq.s32.totalorder %s24, 1
      %p184 = por %p182, %p183
      %p185 = scmp.ne.s32.totalorder %s176, %s177
      %p186 = scmp.eq.s32.totalorder %s24, 0
      %p187 = por %p185, %p186
      %p188 = scmp.ne.s32.totalorder %s176, %s177
      %p189 = scmp.eq.s32.totalorder %s25, 1
      %p190 = por %p188, %p189
      %p192 = scmp.ne.s32.totalorder %s177, %s191
      %p193 = scmp.eq.s32.totalorder %s25, 0
      %p194 = por %p192, %p193
      %s196 = sadd.s32 %s195, 1
      %p199 = scmp.eq.s32.totalorder %s19, 1
      %p200 = scmp.ne.s32.totalorder %s195, %s197
      %p201 = scmp.eq.s32.totalorder %s19, 0
      %p202 = por %p200, %p201
      %p203 = scmp.ne.s32.totalorder %s195, %s197
      %p204 = scmp.eq.s32.totalorder %s24, 1
      %p205 = por %p203, %p204
      %p206 = scmp.ne.s32.totalorder %s197, %s198
      %p207 = scmp.eq.s32.totalorder %s24, 0
      %p208 = por %p206, %p207
      %p209 = scmp.ne.s32.totalorder %s197, %s198
      %p210 = scmp.eq.s32.totalorder %s25, 1
      %p211 = por %p209, %p210
      %p213 = scmp.ne.s32.totalorder %s198, %s212
      %p214 = scmp.eq.s32.totalorder %s25, 0
      %p215 = por %p213, %p214
      %s217 = sadd.s32 %s216, 1
      %p220 = scmp.eq.s32.totalorder %s19, 1
      %p221 = scmp.ne.s32.totalorder %s216, %s218
      %p222 = scmp.eq.s32.totalorder %s19, 0
      %p223 = por %p221, %p222
      %p224 = scmp.ne.s32.totalorder %s216, %s218
      %p225 = scmp.eq.s32.totalorder %s24, 1
      %p226 = por %p224, %p225
      %p227 = scmp.ne.s32.totalorder %s218, %s219
      %p228 = scmp.eq.s32.totalorder %s24, 0
      %p229 = por %p227, %p228
      %p230 = scmp.ne.s32.totalorder %s218, %s219
      %p231 = scmp.eq.s32.totalorder %s25, 1
      %p232 = por %p230, %p231
      %p234 = scmp.ne.s32.totalorder %s219, %s233
      %p235 = scmp.eq.s32.totalorder %s25, 0
      %p236 = por %p234, %p235
      %s237 = ssub.s32 %s19, %s26
      %p238 = scmp.eq.s32.totalorder %s237, 0
      %s240 = sadd.s32 %s239, 1
      %s241 = scalar_select %p238, %s239, %s240
      %p244 = pneg %p238
      %p245 = scmp.eq.s32.totalorder %s19, 1
      %p246 = por %p244, %p245
      %p247 = scmp.ne.s32.totalorder %s239, %s242
      %p248 = scmp.eq.s32.totalorder %s19, 0
      %p249 = por %p247, %p248
      %p250 = scmp.ne.s32.totalorder %s239, %s242
      %p251 = scmp.eq.s32.totalorder %s24, 1
      %p252 = por %p250, %p251
      %p253 = scmp.ne.s32.totalorder %s242, %s243
      %p254 = scmp.eq.s32.totalorder %s24, 0
      %p255 = por %p253, %p254
      %p256 = scmp.ne.s32.totalorder %s242, %s243
      %p257 = scmp.eq.s32.totalorder %s25, 1
      %p258 = por %p256, %p257
      %p260 = scmp.ne.s32.totalorder %s243, %s259
      %p261 = scmp.eq.s32.totalorder %s25, 0
      %p262 = por %p260, %p261
      %s263 = ssub.s32 %s19, %s26
      %p264 = scmp.eq.s32.totalorder %s263, 0
      %s266 = sadd.s32 %s265, 1
      %s267 = scalar_select %p264, %s265, %s266
      %p270 = pneg %p264
      %p271 = scmp.eq.s32.totalorder %s19, 1
      %p272 = por %p270, %p271
      %p273 = scmp.ne.s32.totalorder %s265, %s268
      %p274 = scmp.eq.s32.totalorder %s19, 0
      %p275 = por %p273, %p274
      %p276 = scmp.ne.s32.totalorder %s265, %s268
      %p277 = scmp.eq.s32.totalorder %s24, 1
      %p278 = por %p276, %p277
      %p279 = scmp.ne.s32.totalorder %s268, %s269
      %p280 = scmp.eq.s32.totalorder %s24, 0
      %p281 = por %p279, %p280
      %p282 = scmp.ne.s32.totalorder %s268, %s269
      %p283 = scmp.eq.s32.totalorder %s25, 1
      %p284 = por %p282, %p283
      %p286 = scmp.ne.s32.totalorder %s269, %s285
      %p287 = scmp.eq.s32.totalorder %s25, 0
      %p288 = por %p286, %p287
      %s290 = sadd.s32 %s289, 1
      %p293 = scmp.eq.s32.totalorder %s19, 1
      %p294 = scmp.ne.s32.totalorder %s289, %s291
      %p295 = scmp.eq.s32.totalorder %s19, 0
      %p296 = por %p294, %p295
      %p297 = scmp.ne.s32.totalorder %s289, %s291
      %p298 = scmp.eq.s32.totalorder %s24, 1
      %p299 = por %p297, %p298
      %p300 = scmp.ne.s32.totalorder %s291, %s292
      %p301 = scmp.eq.s32.totalorder %s24, 0
      %p302 = por %p300, %p301
      %p303 = scmp.ne.s32.totalorder %s291, %s292
      %p304 = scmp.eq.s32.totalorder %s25, 1
      %p305 = por %p303, %p304
      %p307 = scmp.ne.s32.totalorder %s292, %s306
      %p308 = scmp.eq.s32.totalorder %s25, 0
      %p309 = por %p307, %p308
      %p310 = scmp.le.s32.totalorder 1, %s19
      %p311 = scmp.lt.s32.totalorder %s19, 3
      %p312 = pnand %p310, %p311
      %p313 = pneg %p312
      // Predicated region
      $region9: #{gatn_forward.1} parent=5 // pred_check
        _
      $region10: #{gatn_forward.1} parent=5 // pred_check_branch
        %315 = sbr.rel (%p312) target = $region12
      $region11: #{gatn_forward.1} parent=5 // pred_region
        %s316 = ssub.s32 %s19, 1
        // Predicated region
        $region13: #{gatn_forward.1} parent=11 // pred_check
          %p317 = pneg %p40
        $region14: #{gatn_forward.1} parent=11 // pred_check_branch
          %319 = sbr.rel (%p317) target = $region16
        $region15: #{gatn_forward.1} parent=11 // pred_region
          _
        $region16: #{gatn_forward.1} parent=11 // pred_fallthru
          _
        // Predicated region
        $region17: #{gatn_forward.1} parent=11 // pred_check
          %p320 = pneg %p61
        $region18: #{gatn_forward.1} parent=11 // pred_check_branch
          %322 = sbr.rel (%p320) target = $region20
        $region19: #{gatn_forward.1} parent=11 // pred_region
          _
        $region20: #{gatn_forward.1} parent=11 // pred_fallthru
          _
        // Predicated region
        $region21: #{gatn_forward.1} parent=11 // pred_check
          %p323 = pneg %p82
        $region22: #{gatn_forward.1} parent=11 // pred_check_branch
          %325 = sbr.rel (%p323) target = $region24
        $region23: #{gatn_forward.1} parent=11 // pred_region
          _
        $region24: #{gatn_forward.1} parent=11 // pred_fallthru
          _
        // Predicated region
        $region25: #{gatn_forward.1} parent=11 // pred_check
          %p326 = pneg %p103
        $region26: #{gatn_forward.1} parent=11 // pred_check_branch
          %328 = sbr.rel (%p326) target = $region28
        $region27: #{gatn_forward.1} parent=11 // pred_region
          _
        $region28: #{gatn_forward.1} parent=11 // pred_fallthru
          _
        // Predicated region
        $region29: #{gatn_forward.1} parent=11 // pred_check
          %p329 = pneg %p124
        $region30: #{gatn_forward.1} parent=11 // pred_check_branch
          %331 = sbr.rel (%p329) target = $region32
        $region31: #{gatn_forward.1} parent=11 // pred_region
          _
        $region32: #{gatn_forward.1} parent=11 // pred_fallthru
          _
        // Predicated region
        $region33: #{gatn_forward.1} parent=11 // pred_check
          %p332 = pneg %p145
        $region34: #{gatn_forward.1} parent=11 // pred_check_branch
          %334 = sbr.rel (%p332) target = $region36
        $region35: #{gatn_forward.1} parent=11 // pred_region
          _
        $region36: #{gatn_forward.1} parent=11 // pred_fallthru
          _
        // Predicated region
        $region37: #{gatn_forward.1} parent=11 // pred_check
          %p335 = pneg %p166
        $region38: #{gatn_forward.1} parent=11 // pred_check_branch
          %337 = sbr.rel (%p335) target = $region40
        $region39: #{gatn_forward.1} parent=11 // pred_region
          _
        $region40: #{gatn_forward.1} parent=11 // pred_fallthru
          _
        // Predicated region
        $region41: #{gatn_forward.1} parent=11 // pred_check
          %p338 = pneg %p187
        $region42: #{gatn_forward.1} parent=11 // pred_check_branch
          %340 = sbr.rel (%p338) target = $region44
        $region43: #{gatn_forward.1} parent=11 // pred_region
          _
        $region44: #{gatn_forward.1} parent=11 // pred_fallthru
          _
        // Predicated region
        $region45: #{gatn_forward.1} parent=11 // pred_check
          %p341 = pneg %p208
        $region46: #{gatn_forward.1} parent=11 // pred_check_branch
          %343 = sbr.rel (%p341) target = $region48
        $region47: #{gatn_forward.1} parent=11 // pred_region
          _
        $region48: #{gatn_forward.1} parent=11 // pred_fallthru
          _
        // Predicated region
        $region49: #{gatn_forward.1} parent=11 // pred_check
          %p344 = pneg %p229
        $region50: #{gatn_forward.1} parent=11 // pred_check_branch
          %346 = sbr.rel (%p344) target = $region52
        $region51: #{gatn_forward.1} parent=11 // pred_region
          _
        $region52: #{gatn_forward.1} parent=11 // pred_fallthru
          _
      $region12: #{gatn_forward.1} parent=5 // pred_fallthru
        _
      %p347 = scmp.lt.s32.totalorder %s19, 2
      // Predicated region
      $region53: #{gatn_forward.1} parent=5 // pred_check
        %p348 = pneg %p347
      $region54: #{gatn_forward.1} parent=5 // pred_check_branch
        %350 = sbr.rel (%p348) target = $region56
      $region55: #{gatn_forward.1} parent=5 // pred_region
        // Predicated region
        $region57: #{gatn_forward.1} parent=55 // pred_check
          %p351 = pneg %p249
        $region58: #{gatn_forward.1} parent=55 // pred_check_branch
          %353 = sbr.rel (%p351) target = $region60
        $region59: #{gatn_forward.1} parent=55 // pred_region
          %s354 = sand.u32 %s239, 1
          %s355 = sand.u32 %s239, 1
          %s356 = smul.addr %s355, 608
          %s357 = scalar_lea.vmem [#allocation5], %s356
          %s358 = smul.u32 4, %s19
          %s359 = smul.addr %s358, 4
          %s360 = scalar_lea.vmem %s10, %s359
          // Predicated region
          $region61: #{gatn_forward.1} parent=59 // pred_check
            _
          $region62: #{gatn_forward.1} parent=59 // pred_check_branch
            %362 = sbr.rel (0) target = $region64
          $region63: #{gatn_forward.1} parent=59 // pred_region
            // Predicated region
            $region65: #{gatn_forward.1} parent=63 // pred_check
              _
            $region66: #{gatn_forward.1} parent=63 // pred_check_branch
              %364 = sbr.rel (0) target = $region68
            $region67: #{gatn_forward.1} parent=63 // pred_region
              loop: start=0, step=1, limit=1
              $region69: #{gatn_forward.1} parent=67 // loop_pre_header
                _
              $region70: #{gatn_forward.1} parent=67 // loop_header
                %s366 = sphi 0, %s370
                %p367 = scmp.ge.s32.totalorder %s366, 1
                %s371 = sphi %s360, %s360
                %s372 = sphi %s357, %s357
              $region71: #{gatn_forward.1} parent=67 // loop_header_branch
                %369 = sbr.rel (%p367) target = $region75
              $region72: #{gatn_forward.1} parent=67 // loop_body
                %v373 = vld [vmem:[%s371] sm:$0xff]
                %374 = vst [vmem:[%s372] sm:$0xff] %v373
                %v375 = vld [vmem:[%s371 + $0x8] sm:$0xff]
                %376 = vst [vmem:[%s372 + $0x8] sm:$0xff] %v375
                %v377 = vld [vmem:[%s371 + $0x20] sm:$0xff]
                %378 = vst [vmem:[%s372 + $0x10] sm:$0xff] %v377
                %v379 = vld [vmem:[%s371 + $0x28] sm:$0xff]
                %380 = vst [vmem:[%s372 + $0x18] sm:$0xff] %v379
                %v381 = vld [vmem:[%s371 + $0x40] sm:$0xff]
                %382 = vst [vmem:[%s372 + $0x20] sm:$0xff] %v381
                %v383 = vld [vmem:[%s371 + $0x48] sm:$0xff]
                %384 = vst [vmem:[%s372 + $0x28] sm:$0xff] %v383
                %v385 = vld [vmem:[%s371 + $0x60] sm:$0xff]
                %386 = vst [vmem:[%s372 + $0x30] sm:$0xff] %v385
                %v387 = vld [vmem:[%s371 + $0x68] sm:$0xff]
                %388 = vst [vmem:[%s372 + $0x38] sm:$0xff] %v387
                %v389 = vld [vmem:[%s371 + $0x80] sm:$0xff]
                %390 = vst [vmem:[%s372 + $0x40] sm:$0xff] %v389
                %v391 = vld [vmem:[%s371 + $0x88] sm:$0xff]
                %392 = vst [vmem:[%s372 + $0x48] sm:$0xff] %v391
                %v393 = vld [vmem:[%s371 + $0xa0] sm:$0xff]
                %394 = vst [vmem:[%s372 + $0x50] sm:$0xff] %v393
                %v395 = vld [vmem:[%s371 + $0xa8] sm:$0xff]
                %396 = vst [vmem:[%s372 + $0x58] sm:$0xff] %v395
                %v397 = vld [vmem:[%s371 + $0xc0] sm:$0xff]
                %398 = vst [vmem:[%s372 + $0x60] sm:$0xff] %v397
                %v399 = vld [vmem:[%s371 + $0xc8] sm:$0xff]
                %400 = vst [vmem:[%s372 + $0x68] sm:$0xff] %v399
                %v401 = vld [vmem:[%s371 + $0xe0] sm:$0xff]
                %402 = vst [vmem:[%s372 + $0x70] sm:$0xff] %v401
                %v403 = vld [vmem:[%s371 + $0xe8] sm:$0xff]
                %404 = vst [vmem:[%s372 + $0x78] sm:$0xff] %v403
                %v405 = vld [vmem:[%s371 + $0x100] sm:$0xff]
                %406 = vst [vmem:[%s372 + $0x80] sm:$0xff] %v405
                %v407 = vld [vmem:[%s371 + $0x108] sm:$0xff]
                %408 = vst [vmem:[%s372 + $0x88] sm:$0xff] %v407
                %v409 = vld [vmem:[%s371 + $0x120] sm:$0xff]
                %410 = vst [vmem:[%s372 + $0x90] sm:$0xff] %v409
                %v411 = vld [vmem:[%s371 + $0x128] sm:$0xff]
                %412 = vst [vmem:[%s372 + $0x98] sm:$0xff] %v411
                %v413 = vld [vmem:[%s371 + $0x140] sm:$0xff]
                %414 = vst [vmem:[%s372 + $0xa0] sm:$0xff] %v413
                %v415 = vld [vmem:[%s371 + $0x148] sm:$0xff]
                %416 = vst [vmem:[%s372 + $0xa8] sm:$0xff] %v415
                %v417 = vld [vmem:[%s371 + $0x160] sm:$0xff]
                %418 = vst [vmem:[%s372 + $0xb0] sm:$0xff] %v417
                %v419 = vld [vmem:[%s371 + $0x168] sm:$0xff]
                %420 = vst [vmem:[%s372 + $0xb8] sm:$0xff] %v419
                %v421 = vld [vmem:[%s371 + $0x180] sm:$0xff]
                %422 = vst [vmem:[%s372 + $0xc0] sm:$0xff] %v421
                %v423 = vld [vmem:[%s371 + $0x188] sm:$0xff]
                %424 = vst [vmem:[%s372 + $0xc8] sm:$0xff] %v423
                %v425 = vld [vmem:[%s371 + $0x1a0] sm:$0xff]
                %426 = vst [vmem:[%s372 + $0xd0] sm:$0xff] %v425
                %v427 = vld [vmem:[%s371 + $0x1a8] sm:$0xff]
                %428 = vst [vmem:[%s372 + $0xd8] sm:$0xff] %v427
                %v429 = vld [vmem:[%s371 + $0x1c0] sm:$0xff]
                %430 = vst [vmem:[%s372 + $0xe0] sm:$0xff] %v429
                %v431 = vld [vmem:[%s371 + $0x1c8] sm:$0xff]
                %432 = vst [vmem:[%s372 + $0xe8] sm:$0xff] %v431
                %v433 = vld [vmem:[%s371 + $0x1e0] sm:$0xff]
                %434 = vst [vmem:[%s372 + $0xf0] sm:$0xff] %v433
                %v435 = vld [vmem:[%s371 + $0x1e8] sm:$0xff]
                %436 = vst [vmem:[%s372 + $0xf8] sm:$0xff] %v435
                %v437 = vld [vmem:[%s371 + $0x200] sm:$0xff]
                %438 = vst [vmem:[%s372 + $0x100] sm:$0xff] %v437
                %v439 = vld [vmem:[%s371 + $0x208] sm:$0xff]
                %440 = vst [vmem:[%s372 + $0x108] sm:$0xff] %v439
                %v441 = vld [vmem:[%s371 + $0x220] sm:$0xff]
                %442 = vst [vmem:[%s372 + $0x110] sm:$0xff] %v441
                %v443 = vld [vmem:[%s371 + $0x228] sm:$0xff]
                %444 = vst [vmem:[%s372 + $0x118] sm:$0xff] %v443
                %v445 = vld [vmem:[%s371 + $0x240] sm:$0xff]
                %446 = vst [vmem:[%s372 + $0x120] sm:$0xff] %v445
                %v447 = vld [vmem:[%s371 + $0x248] sm:$0xff]
                %448 = vst [vmem:[%s372 + $0x128] sm:$0xff] %v447
                %v449 = vld [vmem:[%s371 + $0x260] sm:$0xff]
                %450 = vst [vmem:[%s372 + $0x130] sm:$0xff] %v449
                %v451 = vld [vmem:[%s371 + $0x268] sm:$0xff]
                %452 = vst [vmem:[%s372 + $0x138] sm:$0xff] %v451
                %v453 = vld [vmem:[%s371 + $0x280] sm:$0xff]
                %454 = vst [vmem:[%s372 + $0x140] sm:$0xff] %v453
                %v455 = vld [vmem:[%s371 + $0x288] sm:$0xff]
                %456 = vst [vmem:[%s372 + $0x148] sm:$0xff] %v455
                %v457 = vld [vmem:[%s371 + $0x2a0] sm:$0xff]
                %458 = vst [vmem:[%s372 + $0x150] sm:$0xff] %v457
                %v459 = vld [vmem:[%s371 + $0x2a8] sm:$0xff]
                %460 = vst [vmem:[%s372 + $0x158] sm:$0xff] %v459
                %v461 = vld [vmem:[%s371 + $0x2c0] sm:$0xff]
                %462 = vst [vmem:[%s372 + $0x160] sm:$0xff] %v461
                %v463 = vld [vmem:[%s371 + $0x2c8] sm:$0xff]
                %464 = vst [vmem:[%s372 + $0x168] sm:$0xff] %v463
                %v465 = vld [vmem:[%s371 + $0x2e0] sm:$0xff]
                %466 = vst [vmem:[%s372 + $0x170] sm:$0xff] %v465
                %v467 = vld [vmem:[%s371 + $0x2e8] sm:$0xff]
                %468 = vst [vmem:[%s372 + $0x178] sm:$0xff] %v467
                %v469 = vld [vmem:[%s371 + $0x300] sm:$0xff]
                %470 = vst [vmem:[%s372 + $0x180] sm:$0xff] %v469
                %v471 = vld [vmem:[%s371 + $0x308] sm:$0xff]
                %472 = vst [vmem:[%s372 + $0x188] sm:$0xff] %v471
                %v473 = vld [vmem:[%s371 + $0x320] sm:$0xff]
                %474 = vst [vmem:[%s372 + $0x190] sm:$0xff] %v473
                %v475 = vld [vmem:[%s371 + $0x328] sm:$0xff]
                %476 = vst [vmem:[%s372 + $0x198] sm:$0xff] %v475
                %v477 = vld [vmem:[%s371 + $0x340] sm:$0xff]
                %478 = vst [vmem:[%s372 + $0x1a0] sm:$0xff] %v477
                %v479 = vld [vmem:[%s371 + $0x348] sm:$0xff]
                %480 = vst [vmem:[%s372 + $0x1a8] sm:$0xff] %v479
                %v481 = vld [vmem:[%s371 + $0x360] sm:$0xff]
                %482 = vst [vmem:[%s372 + $0x1b0] sm:$0xff] %v481
                %v483 = vld [vmem:[%s371 + $0x368] sm:$0xff]
                %484 = vst [vmem:[%s372 + $0x1b8] sm:$0xff] %v483
                %v485 = vld [vmem:[%s371 + $0x380] sm:$0xff]
                %486 = vst [vmem:[%s372 + $0x1c0] sm:$0xff] %v485
                %v487 = vld [vmem:[%s371 + $0x388] sm:$0xff]
                %488 = vst [vmem:[%s372 + $0x1c8] sm:$0xff] %v487
                %v489 = vld [vmem:[%s371 + $0x3a0] sm:$0xff]
                %490 = vst [vmem:[%s372 + $0x1d0] sm:$0xff] %v489
                %v491 = vld [vmem:[%s371 + $0x3a8] sm:$0xff]
                %492 = vst [vmem:[%s372 + $0x1d8] sm:$0xff] %v491
                %v493 = vld [vmem:[%s371 + $0x3c0] sm:$0xff]
                %494 = vst [vmem:[%s372 + $0x1e0] sm:$0xff] %v493
                %v495 = vld [vmem:[%s371 + $0x3c8] sm:$0xff]
                %496 = vst [vmem:[%s372 + $0x1e8] sm:$0xff] %v495
                %v497 = vld [vmem:[%s371 + $0x3e0] sm:$0xff]
                %498 = vst [vmem:[%s372 + $0x1f0] sm:$0xff] %v497
                %v499 = vld [vmem:[%s371 + $0x3e8] sm:$0xff]
                %500 = vst [vmem:[%s372 + $0x1f8] sm:$0xff] %v499
                %v501 = vld [vmem:[%s371 + $0x400] sm:$0xff]
                %502 = vst [vmem:[%s372 + $0x200] sm:$0xff] %v501
                %v503 = vld [vmem:[%s371 + $0x408] sm:$0xff]
                %504 = vst [vmem:[%s372 + $0x208] sm:$0xff] %v503
                %v505 = vld [vmem:[%s371 + $0x420] sm:$0xff]
                %506 = vst [vmem:[%s372 + $0x210] sm:$0xff] %v505
                %v507 = vld [vmem:[%s371 + $0x428] sm:$0xff]
                %508 = vst [vmem:[%s372 + $0x218] sm:$0xff] %v507
                %v509 = vld [vmem:[%s371 + $0x440] sm:$0xff]
                %510 = vst [vmem:[%s372 + $0x220] sm:$0xff] %v509
                %v511 = vld [vmem:[%s371 + $0x448] sm:$0xff]
                %512 = vst [vmem:[%s372 + $0x228] sm:$0xff] %v511
                %v513 = vld [vmem:[%s371 + $0x460] sm:$0xff]
                %514 = vst [vmem:[%s372 + $0x230] sm:$0xff] %v513
                %v515 = vld [vmem:[%s371 + $0x468] sm:$0xff]
                %516 = vst [vmem:[%s372 + $0x238] sm:$0xff] %v515
                %v517 = vld [vmem:[%s371 + $0x480] sm:$0xff]
                %518 = vst [vmem:[%s372 + $0x240] sm:$0xff] %v517
                %v519 = vld [vmem:[%s371 + $0x488] sm:$0xff]
                %520 = vst [vmem:[%s372 + $0x248] sm:$0xff] %v519
                %v521 = vld [vmem:[%s371 + $0x4a0] sm:$0xff]
                %522 = vst [vmem:[%s372 + $0x250] sm:$0xff] %v521
                %v523 = vld [vmem:[%s371 + $0x4a8] sm:$0xff]
                %524 = vst [vmem:[%s372 + $0x258] sm:$0xff] %v523
              $region73: #{gatn_forward.1} parent=67 // loop_footer
                %s370 = sadd.s32 1, %s366
              $region74: #{gatn_forward.1} parent=67 // loop_footer_branch
                %365 = sbr.rel target = $region70
              $region75: #{gatn_forward.1} parent=67 // loop_exit
                _
            $region68: #{gatn_forward.1} parent=63 // pred_fallthru
              _
            // Predicated region
            $region76: #{gatn_forward.1} parent=63 // pred_check
              _
            $region77: #{gatn_forward.1} parent=63 // pred_check_branch
              %526 = sbr.rel target = $region79
            $region78: #{gatn_forward.1} parent=63 // pred_region
              _
            $region79: #{gatn_forward.1} parent=63 // pred_fallthru
              _
          $region64: #{gatn_forward.1} parent=59 // pred_fallthru
            _
          %527 = vnop
        $region60: #{gatn_forward.1} parent=55 // pred_fallthru
          _
        // Predicated region
        $region80: #{gatn_forward.1} parent=55 // pred_check
          %p528 = pneg %p275
        $region81: #{gatn_forward.1} parent=55 // pred_check_branch
          %530 = sbr.rel (%p528) target = $region83
        $region82: #{gatn_forward.1} parent=55 // pred_region
          %s531 = smul.u32 64, %s19
          %p532 = scmp.lt.s32.totalorder %s531, 127
          %s533 = scalar_select %p532, %s531, 127
          %s534 = smul.addr %s533, 3
          %s535 = smul.addr %s534, 4
          %s536 = scalar_lea.vmem %s11, %s535
          %s537 = smul.u32 64, %s19
        $region83: #{gatn_forward.1} parent=55 // pred_fallthru
          _
      $region56: #{gatn_forward.1} parent=5 // pred_fallthru
        _
      %p538 = scmp.le.s32.totalorder 1, %s19
      %p539 = scmp.lt.s32.totalorder %s19, 3
      %p540 = pnand %p538, %p539
      %p541 = pneg %p540
      // Predicated region
      $region84: #{gatn_forward.1} parent=5 // pred_check
        _
      $region85: #{gatn_forward.1} parent=5 // pred_check_branch
        %543 = sbr.rel (%p540) target = $region87
      $region86: #{gatn_forward.1} parent=5 // pred_region
        %s544 = ssub.s32 %s19, 1
        %s545 = sand.u32 %s242, 1
        %s546 = sand.u32 %s242, 1
        %s547 = smul.addr %s546, 608
        %s548 = scalar_lea.vmem [#allocation5], %s547
        // Predicated region
        $region88: #{gatn_forward.1} parent=86 // pred_check
          %p549 = pneg %p255
        $region89: #{gatn_forward.1} parent=86 // pred_check_branch
          %551 = sbr.rel (%p549) target = $region91
        $region90: #{gatn_forward.1} parent=86 // pred_region
          _
        $region91: #{gatn_forward.1} parent=86 // pred_fallthru
          _
        %p552 = pneg %p40
        %p553 = pneg %p37
        %p554 = pneg %p61
        %p555 = pneg %p58
        %p556 = pneg %p82
        %p557 = pneg %p79
        %p558 = pneg %p103
        %p559 = pneg %p100
        %p560 = pneg %p124
        %p561 = pneg %p121
        %p562 = pneg %p145
        %p563 = pneg %p142
        %p564 = pneg %p166
        %p565 = pneg %p163
        %p566 = pneg %p187
        %p567 = pneg %p184
        %p568 = pneg %p208
        %p569 = pneg %p205
        %p570 = pneg %p229
        %p571 = pneg %p226
        %s572 = sand.u32 %s242, 1
        %s573 = sand.u32 %s242, 1
        %s574 = smul.addr %s573, 608
        %s575 = scalar_lea.vmem [#allocation5], %s574
        %p576 = pneg %p255
        %p577 = pneg %p252
        %s578 = smul.u32 64, %s24
        %p579 = scmp.lt.s32.totalorder %s578, 127
        %s580 = scalar_select %p579, %s578, 127
        %s581 = smul.addr %s580, 3
        %s582 = smul.addr %s581, 4
        %s583 = scalar_lea.vmem %s11, %s582
        %p584 = pneg %p281
        %p585 = pneg %p278
        %p586 = pneg %p302
        %p587 = pneg %p299
        %s588 = smul.u32 4, %s24
        %s589 = smul.u32 64, %s24
        %p590 = scmp.lt.s32.totalorder %s589, 127
        %s591 = scalar_select %p590, %s589, 127
        %s592 = smul.addr %s591, 3
        %s593 = smul.addr %s592, 4
        %s594 = scalar_lea.vmem %s11, %s593
        %s595 = smul.u32 64, %s24
        %p597 = scmp.eq.s32.totalorder %s24, 0
        // Predicated region
        $region92: #{gatn_forward.1} parent=86 // pred_check
          %p598 = pneg %p597
        $region93: #{gatn_forward.1} parent=86 // pred_check_branch
          %600 = sbr.rel (%p598) target = $region95
        $region94: #{gatn_forward.1} parent=86 // pred_region
          %v601 = vld [vmem:[%s0] sm:$0xff]
          %v602 = vld [vmem:[%s0 + $0x8] sm:$0xff]
          %v603 = vld [vmem:[%s0 + $0x10] sm:$0xf]
          %vm604 = vcmask 162816
          %v605 = vsel %vm604, %v601, 0.0
          %606 = vadd.xlane.f32.xlu0 %v605
          %v607 = vpop.xlane.xlu0 %606
          %v608 = vsel %vm604, %v602, 0.0
          %609 = vadd.xlane.f32.xlu0 %v608
          %v610 = vpop.xlane.xlu0 %609
          %vm611 = vcmask 158720
          %v612 = vsel %vm611, %v603, 0.0
          %613 = vadd.xlane.f32.xlu0 %v612
          %v614 = vpop.xlane.xlu0 %613
          %v615 = vrcp.pop 20.0
          %v616 = vmul.f32 %v607, %v615
          %v617 = vmul.f32 %v610, %v615
          %v618 = vmul.f32 %v614, %v615
          %v619 = vsub.f32 %v601, %v616
          %v620 = vsub.f32 %v602, %v617
          %v621 = vsub.f32 %v603, %v618
          %v622 = vmul.f32 %v619, %v619
          %v623 = vmul.f32 %v620, %v620
          %v624 = vmul.f32 %v621, %v621
          %v625 = vsel %vm604, %v622, 0.0
          %626 = vadd.xlane.f32.xlu0 %v625
          %v627 = vpop.xlane.xlu0 %626
          %v628 = vsel %vm604, %v623, 0.0
          %629 = vadd.xlane.f32.xlu0 %v628
          %v630 = vpop.xlane.xlu0 %629
          %v631 = vsel %vm611, %v624, 0.0
          %632 = vadd.xlane.f32.xlu0 %v631
          %v633 = vpop.xlane.xlu0 %632
          %v634 = vmul.f32 %v627, %v615
          %v635 = vmul.f32 %v630, %v615
          %v636 = vmul.f32 %v633, %v615
          %v637 = vadd.f32 %v634, 1e-06
          %v638 = vadd.f32 %v635, 1e-06
          %v639 = vadd.f32 %v636, 1e-06
          %v640 = vrsqrt.pop %v637
          %v641 = vrsqrt.pop %v638
          %v642 = vrsqrt.pop %v639
          %v643 = vmul.f32 %v619, %v640
          %v644 = vmul.f32 %v620, %v641
          %v645 = vmul.f32 %v621, %v642
          %v646 = vld [vmem:[%s1] sm:$0x1]
          %v648 = vlaneseq
          %v649 = vshrl.u32 %v648, 7
          %v650 = vsub.s32 0, %v649
          %v651 = vrot.slane %v646, %v650
          %v653 = vmul.f32 %v643, %v651
          %v654 = vmul.f32 %v644, %v651
          %v655 = vmul.f32 %v645, %v651
          %v656 = vld [vmem:[%s2] sm:$0x1]
          %v658 = vlaneseq
          %v659 = vshrl.u32 %v658, 7
          %v660 = vsub.s32 0, %v659
          %v661 = vrot.slane %v656, %v660
          %v663 = vadd.f32 %v653, %v661
          %v664 = vadd.f32 %v654, %v661
          %v665 = vadd.f32 %v655, %v661
          %v666 = vld [vmem:[%s3] sm:$0xff]
          %v667 = vld [vmem:[%s3 + $0x8] sm:$0xff]
          %v668 = vld [vmem:[%s3 + $0x10] sm:$0xf]
          %v669 = vld [vmem:[%s4] sm:$0x1]
          %v671 = vlaneseq
          %v672 = vshrl.u32 %v671, 7
          %v673 = vsub.s32 0, %v672
          %v674 = vrot.slane %v669, %v673
          %v677 = vsel %vm604, %v663, 0
          %v680 = vsel %vm604, %v664, 0
          %v683 = vsel %vm604, %v665, 0
          %vm685 = vcmask 1043456
          %v687 = vsel %vm685, %v668, 0
          %689 = vmatprep.subr.mxu0 0.0
          %690 = vmatpush1.msra.mxu0 %v666
          %691 = vmatprep.subr.mxu0 0.0
          %692 = vmatpush1.msra.mxu0 %v667
          %693 = vmatprep.subr.mxu0 0.0
          %694 = vmatpush1.msra.mxu0 %v687
          %695 = vmatprep.subr.mxu0 0.0
          %696 = vmatpush1.msra.mxu0 0.0
          %697 = vmatprep.subr.mxu0 0.0
          %698 = vmatpush1.msra.mxu0 0.0
          %699 = vmatprep.subr.mxu0 0.0
          %700 = vmatpush1.msra.mxu0 0.0
          %701 = vmatprep.subr.mxu0 0.0
          %702 = vmatpush1.msra.mxu0 0.0
          %703 = vmatprep.subr.mxu0 0.0
          %704 = vmatpush1.msra.mxu0 0.0
          %705 = vmatprep.subr.mxu0 0.0
          %706 = vmatpush1.msra.mxu0 0.0
          %707 = vmatprep.subr.mxu0 0.0
          %708 = vmatpush1.msra.mxu0 0.0
          %709 = vmatprep.subr.mxu0 0.0
          %710 = vmatpush1.msra.mxu0 0.0
          %711 = vmatprep.subr.mxu0 0.0
          %712 = vmatpush1.msra.mxu0 0.0
          %713 = vmatprep.subr.mxu0 0.0
          %714 = vmatpush1.msra.mxu0 0.0
          %715 = vmatprep.subr.mxu0 0.0
          %716 = vmatpush1.msra.mxu0 0.0
          %717 = vmatprep.subr.mxu0 0.0
          %718 = vmatpush1.msra.mxu0 0.0
          %719 = vmatprep.subr.mxu0 0.0
          %720 = vmatpush1.msra.mxu0 0.0
          %721 = vmatprep.subr.mxu0 0.0
          %722 = vmatpush1.msra.mxu0 0.0
          %723 = vmatprep.subr.mxu0 0.0
          %724 = vmatpush1.msra.mxu0 0.0
          %725 = vmatprep.subr.mxu0 0.0
          %726 = vmatpush1.msra.mxu0 0.0
          %727 = vmatprep.subr.mxu0 0.0
          %728 = vmatpush1.msra.mxu0 0.0
          %729 = vmatprep.subr.mxu0 0.0
          %730 = vmatpush1.msra.mxu0 0.0
          %731 = vmatprep.subr.mxu0 0.0
          %732 = vmatpush1.msra.mxu0 0.0
          %733 = vmatprep.subr.mxu0 0.0
          %734 = vmatpush1.msra.mxu0 0.0
          %735 = vmatprep.subr.mxu0 0.0
          %736 = vmatpush1.msra.mxu0 0.0
          %737 = vmatprep.subr.mxu0 0.0
          %738 = vmatpush1.msra.mxu0 0.0
          %739 = vmatprep.subr.mxu0 0.0
          %740 = vmatpush1.msra.mxu0 0.0
          %741 = vmatprep.subr.mxu0 0.0
          %742 = vmatpush1.msra.mxu0 0.0
          %743 = vmatprep.subr.mxu0 0.0
          %744 = vmatpush1.msra.mxu0 0.0
          %745 = vmatprep.subr.mxu0 0.0
          %746 = vmatpush1.msra.mxu0 0.0
          %747 = vmatprep.subr.mxu0 0.0
          %748 = vmatpush1.msra.mxu0 0.0
          %749 = vmatprep.subr.mxu0 0.0
          %750 = vmatpush1.msra.mxu0 0.0
          %751 = vmatprep.subr.mxu0 0.0
          %752 = vmatpush1.msra.mxu0 0.0
          %753 = vmatprep.mubr.f32.mxu0 0.0
          %754 = vmatmul.mubr.f32.gmra.mrb[0].mxu0 %v677
          %v755 = vpop.f32.mrb[0].mxu0
          %v756 = vadd.f32 %v674, %v755
          %v757 = vpop.f32.mrb[0].mxu0
          %758 = vmatprep.mubr.f32.mxu0 0.0
          %759 = vmatmul.mubr.f32.gmra.mrb[0].mxu0 %v680
          %v760 = vpop.f32.mrb[0].mxu0
          %v761 = vadd.f32 %v674, %v760
          %v762 = vpop.f32.mrb[0].mxu0
          %763 = vmatprep.mubr.f32.mxu0 0.0
          %764 = vmatmul.mubr.f32.gmra.mrb[0].mxu0 %v683
          %v765 = vpop.f32.mrb[0].mxu0
          %v766 = vadd.f32 %v674, %v765
          %v767 = vpop.f32.mrb[0].mxu0
          %768 = vdwg.mxu0
          %772 = vrot.lane.b32.xlu0 %v756, 108
          %v773 = vpop.permute.xlu0 %772
          %774 = vrot.lane.b32.xlu0 %v761, 108
          %v775 = vpop.permute.xlu0 %774
          %776 = vrot.lane.b32.xlu0 %v766, 108
          %v777 = vpop.permute.xlu0 %776
          %vm778 = vcmask 39936
          %v779 = vsel %vm778, %v756, 0
          %v781 = vsel %vm778, %v761, 0
          %v783 = vsel %vm778, %v766, 0
          %v785 = vsel %vm778, %v773, 0
          %v787 = vsel %vm778, %v775, 0
          %v789 = vsel %vm778, %v777, 0
          %791 = vmatprep.subr.mxu0 0.0
          %792 = vmatpush1.xpose.msra.mxu0 %v785
          %793 = vmatprep.subr.mxu0 0.0
          %794 = vmatpush1.xpose.msra.mxu0 %v787
          %795 = vmatprep.subr.mxu0 0.0
          %796 = vmatpush1.xpose.msra.mxu0 %v789
          %797 = vmatprep.subr.mxu0 0.0
          %798 = vmatpush1.xpose.msra.mxu0 0.0
          %799 = vmatprep.subr.mxu0 0.0
          %800 = vmatpush1.xpose.msra.mxu0 0.0
          %801 = vmatprep.subr.mxu0 0.0
          %802 = vmatpush1.xpose.msra.mxu0 0.0
          %803 = vmatprep.subr.mxu0 0.0
          %804 = vmatpush1.xpose.msra.mxu0 0.0
          %805 = vmatprep.subr.mxu0 0.0
          %806 = vmatpush1.xpose.msra.mxu0 0.0
          %807 = vmatprep.subr.mxu0 0.0
          %808 = vmatpush1.xpose.msra.mxu0 0.0
          %809 = vmatprep.subr.mxu0 0.0
          %810 = vmatpush1.xpose.msra.mxu0 0.0
          %811 = vmatprep.subr.mxu0 0.0
          %812 = vmatpush1.xpose.msra.mxu0 0.0
          %813 = vmatprep.subr.mxu0 0.0
          %814 = vmatpush1.xpose.msra.mxu0 0.0
          %815 = vmatprep.subr.mxu0 0.0
          %816 = vmatpush1.xpose.msra.mxu0 0.0
          %817 = vmatprep.subr.mxu0 0.0
          %818 = vmatpush1.xpose.msra.mxu0 0.0
          %819 = vmatprep.subr.mxu0 0.0
          %820 = vmatpush1.xpose.msra.mxu0 0.0
          %821 = vmatprep.subr.mxu0 0.0
          %822 = vmatpush1.xpose.msra.mxu0 0.0
          %823 = vmatprep.subr.mxu0 0.0
          %824 = vmatpush1.xpose.msra.mxu0 0.0
          %825 = vmatprep.subr.mxu0 0.0
          %826 = vmatpush1.xpose.msra.mxu0 0.0
          %827 = vmatprep.subr.mxu0 0.0
          %828 = vmatpush1.xpose.msra.mxu0 0.0
          %829 = vmatprep.subr.mxu0 0.0
          %830 = vmatpush1.xpose.msra.mxu0 0.0
          %831 = vmatprep.subr.mxu0 0.0
          %832 = vmatpush1.xpose.msra.mxu0 0.0
          %833 = vmatprep.subr.mxu0 0.0
          %834 = vmatpush1.xpose.msra.mxu0 0.0
          %835 = vmatprep.subr.mxu0 0.0
          %836 = vmatpush1.xpose.msra.mxu0 0.0
          %837 = vmatprep.subr.mxu0 0.0
          %838 = vmatpush1.xpose.msra.mxu0 0.0
          %839 = vmatprep.subr.mxu0 0.0
          %840 = vmatpush1.xpose.msra.mxu0 0.0
          %841 = vmatprep.subr.mxu0 0.0
          %842 = vmatpush1.xpose.msra.mxu0 0.0
          %843 = vmatprep.subr.mxu0 0.0
          %844 = vmatpush1.xpose.msra.mxu0 0.0
          %845 = vmatprep.subr.mxu0 0.0
          %846 = vmatpush1.xpose.msra.mxu0 0.0
          %847 = vmatprep.subr.mxu0 0.0
          %848 = vmatpush1.xpose.msra.mxu0 0.0
          %849 = vmatprep.subr.mxu0 0.0
          %850 = vmatpush1.xpose.msra.mxu0 0.0
          %851 = vmatprep.subr.mxu0 0.0
          %852 = vmatpush1.xpose.msra.mxu0 0.0
          %853 = vmatprep.subr.mxu0 0.0
          %854 = vmatpush1.xpose.msra.mxu0 0.0
          %855 = vmatprep.mubr.f32.mxu0 0.0
          %856 = vmatmul.mubr.f32.gmra.mrb[0].mxu0 %v779
          %v857 = vpop.f32.mrb[0].mxu0
          %v858 = vadd.f32 0.0, %v857
          %v859 = vpop.f32.mrb[0].mxu0
          %860 = vmatprep.mubr.f32.mxu0 0.0
          %861 = vmatmul.mubr.f32.gmra.mrb[0].mxu0 %v781
          %v862 = vpop.f32.mrb[0].mxu0
          %v863 = vadd.f32 0.0, %v862
          %v864 = vpop.f32.mrb[0].mxu0
          %865 = vmatprep.mubr.f32.mxu0 0.0
          %866 = vmatmul.mubr.f32.gmra.mrb[0].mxu0 %v783
          %v867 = vpop.f32.mrb[0].mxu0
          %v868 = vadd.f32 0.0, %v867
          %v869 = vpop.f32.mrb[0].mxu0
          %870 = vdwg.mxu0
          %v871 = vmul.f32 %v858, 0.4472136
          %v872 = vmul.f32 %v863, 0.4472136
          %v873 = vmul.f32 %v868, 0.4472136
          %874 = vrot.lane.b32.xlu0 %v756, 123
          %v875 = vpop.permute.xlu0 %874
          %876 = vrot.lane.b32.xlu0 %v761, 123
          %v877 = vpop.permute.xlu0 %876
          %878 = vrot.lane.b32.xlu0 %v766, 123
          %v879 = vpop.permute.xlu0 %878
          %880 = vrot.lane.b32.xlu0 %v756, 103
          %v881 = vpop.permute.xlu0 %880
          %882 = vrot.lane.b32.xlu0 %v761, 103
          %v883 = vpop.permute.xlu0 %882
          %884 = vrot.lane.b32.xlu0 %v766, 103
          %v885 = vpop.permute.xlu0 %884
          %v886 = vsel %vm778, %v875, 0
          %v888 = vsel %vm778, %v877, 0
          %v890 = vsel %vm778, %v879, 0
          %v892 = vsel %vm778, %v881, 0
          %v894 = vsel %vm778, %v883, 0
          %v896 = vsel %vm778, %v885, 0
          %898 = vmatprep.subr.mxu0 0.0
          %899 = vmatpush1.xpose.msra.mxu0 %v892
          %900 = vmatprep.subr.mxu0 0.0
          %901 = vmatpush1.xpose.msra.mxu0 %v894
          %902 = vmatprep.subr.mxu0 0.0
          %903 = vmatpush1.xpose.msra.mxu0 %v896
          %904 = vmatprep.subr.mxu0 0.0
          %905 = vmatpush1.xpose.msra.mxu0 0.0
          %906 = vmatprep.subr.mxu0 0.0
          %907 = vmatpush1.xpose.msra.mxu0 0.0
          %908 = vmatprep.subr.mxu0 0.0
          %909 = vmatpush1.xpose.msra.mxu0 0.0
          %910 = vmatprep.subr.mxu0 0.0
          %911 = vmatpush1.xpose.msra.mxu0 0.0
          %912 = vmatprep.subr.mxu0 0.0
          %913 = vmatpush1.xpose.msra.mxu0 0.0
          %914 = vmatprep.subr.mxu0 0.0
          %915 = vmatpush1.xpose.msra.mxu0 0.0
          %916 = vmatprep.subr.mxu0 0.0
          %917 = vmatpush1.xpose.msra.mxu0 0.0
          %918 = vmatprep.subr.mxu0 0.0
          %919 = vmatpush1.xpose.msra.mxu0 0.0
          %920 = vmatprep.subr.mxu0 0.0
          %921 = vmatpush1.xpose.msra.mxu0 0.0
          %922 = vmatprep.subr.mxu0 0.0
          %923 = vmatpush1.xpose.msra.mxu0 0.0
          %924 = vmatprep.subr.mxu0 0.0
          %925 = vmatpush1.xpose.msra.mxu0 0.0
          %926 = vmatprep.subr.mxu0 0.0
          %927 = vmatpush1.xpose.msra.mxu0 0.0
          %928 = vmatprep.subr.mxu0 0.0
          %929 = vmatpush1.xpose.msra.mxu0 0.0
          %930 = vmatprep.subr.mxu0 0.0
          %931 = vmatpush1.xpose.msra.mxu0 0.0
          %932 = vmatprep.subr.mxu0 0.0
          %933 = vmatpush1.xpose.msra.mxu0 0.0
          %934 = vmatprep.subr.mxu0 0.0
          %935 = vmatpush1.xpose.msra.mxu0 0.0
          %936 = vmatprep.subr.mxu0 0.0
          %937 = vmatpush1.xpose.msra.mxu0 0.0
          %938 = vmatprep.subr.mxu0 0.0
          %939 = vmatpush1.xpose.msra.mxu0 0.0
          %940 = vmatprep.subr.mxu0 0.0
          %941 = vmatpush1.xpose.msra.mxu0 0.0
          %942 = vmatprep.subr.mxu0 0.0
          %943 = vmatpush1.xpose.msra.mxu0 0.0
          %944 = vmatprep.subr.mxu0 0.0
          %945 = vmatpush1.xpose.msra.mxu0 0.0
          %946 = vmatprep.subr.mxu0 0.0
          %947 = vmatpush1.xpose.msra.mxu0 0.0
          %948 = vmatprep.subr.mxu0 0.0
          %949 = vmatpush1.xpose.msra.mxu0 0.0
          %950 = vmatprep.subr.mxu0 0.0
          %951 = vmatpush1.xpose.msra.mxu0 0.0
          %952 = vmatprep.subr.mxu0 0.0
          %953 = vmatpush1.xpose.msra.mxu0 0.0
          %954 = vmatprep.subr.mxu0 0.0
          %955 = vmatpush1.xpose.msra.mxu0 0.0
          %956 = vmatprep.subr.mxu0 0.0
          %957 = vmatpush1.xpose.msra.mxu0 0.0
          %958 = vmatprep.subr.mxu0 0.0
          %959 = vmatpush1.xpose.msra.mxu0 0.0
          %960 = vmatprep.subr.mxu0 0.0
          %961 = vmatpush1.xpose.msra.mxu0 0.0
          %962 = vmatprep.mubr.f32.mxu0 0.0
          %963 = vmatmul.mubr.f32.gmra.mrb[0].mxu0 %v886
          %v964 = vpop.f32.mrb[0].mxu0
          %v965 = vadd.f32 0.0, %v964
          %v966 = vpop.f32.mrb[0].mxu0
          %967 = vmatprep.mubr.f32.mxu0 0.0
          %968 = vmatmul.mubr.f32.gmra.mrb[0].mxu0 %v888
          %v969 = vpop.f32.mrb[0].mxu0
          %v970 = vadd.f32 0.0, %v969
          %v971 = vpop.f32.mrb[0].mxu0
          %972 = vmatprep.mubr.f32.mxu0 0.0
          %973 = vmatmul.mubr.f32.gmra.mrb[0].mxu0 %v890
          %v974 = vpop.f32.mrb[0].mxu0
          %v975 = vadd.f32 0.0, %v974
          %v976 = vpop.f32.mrb[0].mxu0
          %977 = vdwg.mxu0
          %v978 = vmul.f32 %v965, 0.4472136
          %v979 = vmul.f32 %v970, 0.4472136
          %v980 = vmul.f32 %v975, 0.4472136
          %981 = vrot.lane.b32.xlu0 %v756, 118
          %v982 = vpop.permute.xlu0 %981
          %983 = vrot.lane.b32.xlu0 %v761, 118
          %v984 = vpop.permute.xlu0 %983
          %985 = vrot.lane.b32.xlu0 %v766, 118
          %v986 = vpop.permute.xlu0 %985
          %987 = vrot.lane.b32.xlu0 %v756, 98
          %v988 = vpop.permute.xlu0 %987
          %989 = vrot.lane.b32.xlu0 %v761, 98
          %v990 = vpop.permute.xlu0 %989
          %991 = vrot.lane.b32.xlu0 %v766, 98
          %v992 = vpop.permute.xlu0 %991
          %v993 = vsel %vm778, %v982, 0
          %v995 = vsel %vm778, %v984, 0
          %v997 = vsel %vm778, %v986, 0
          %v999 = vsel %vm778, %v988, 0
          %v1001 = vsel %vm778, %v990, 0
          %v1003 = vsel %vm778, %v992, 0
          %1005 = vmatprep.subr.mxu0 0.0
          %1006 = vmatpush1.xpose.msra.mxu0 %v999
          %1007 = vmatprep.subr.mxu0 0.0
          %1008 = vmatpush1.xpose.msra.mxu0 %v1001
          %1009 = vmatprep.subr.mxu0 0.0
          %1010 = vmatpush1.xpose.msra.mxu0 %v1003
          %1011 = vmatprep.subr.mxu0 0.0
          %1012 = vmatpush1.xpose.msra.mxu0 0.0
          %1013 = vmatprep.subr.mxu0 0.0
          %1014 = vmatpush1.xpose.msra.mxu0 0.0
          %1015 = vmatprep.subr.mxu0 0.0
          %1016 = vmatpush1.xpose.msra.mxu0 0.0
          %1017 = vmatprep.subr.mxu0 0.0
          %1018 = vmatpush1.xpose.msra.mxu0 0.0
          %1019 = vmatprep.subr.mxu0 0.0
          %1020 = vmatpush1.xpose.msra.mxu0 0.0
          %1021 = vmatprep.subr.mxu0 0.0
          %1022 = vmatpush1.xpose.msra.mxu0 0.0
          %1023 = vmatprep.subr.mxu0 0.0
          %1024 = vmatpush1.xpose.msra.mxu0 0.0
          %1025 = vmatprep.subr.mxu0 0.0
          %1026 = vmatpush1.xpose.msra.mxu0 0.0
          %1027 = vmatprep.subr.mxu0 0.0
          %1028 = vmatpush1.xpose.msra.mxu0 0.0
          %1029 = vmatprep.subr.mxu0 0.0
          %1030 = vmatpush1.xpose.msra.mxu0 0.0
          %1031 = vmatprep.subr.mxu0 0.0
          %1032 = vmatpush1.xpose.msra.mxu0 0.0
          %1033 = vmatprep.subr.mxu0 0.0
          %1034 = vmatpush1.xpose.msra.mxu0 0.0
          %1035 = vmatprep.subr.mxu0 0.0
          %1036 = vmatpush1.xpose.msra.mxu0 0.0
          %1037 = vmatprep.subr.mxu0 0.0
          %1038 = vmatpush1.xpose.msra.mxu0 0.0
          %1039 = vmatprep.subr.mxu0 0.0
          %1040 = vmatpush1.xpose.msra.mxu0 0.0
          %1041 = vmatprep.subr.mxu0 0.0
          %1042 = vmatpush1.xpose.msra.mxu0 0.0
          %1043 = vmatprep.subr.mxu0 0.0
          %1044 = vmatpush1.xpose.msra.mxu0 0.0
          %1045 = vmatprep.subr.mxu0 0.0
          %1046 = vmatpush1.xpose.msra.mxu0 0.0
          %1047 = vmatprep.subr.mxu0 0.0
          %1048 = vmatpush1.xpose.msra.mxu0 0.0
          %1049 = vmatprep.subr.mxu0 0.0
          %1050 = vmatpush1.xpose.msra.mxu0 0.0
          %1051 = vmatprep.subr.mxu0 0.0
          %1052 = vmatpush1.xpose.msra.mxu0 0.0
          %1053 = vmatprep.subr.mxu0 0.0
          %1054 = vmatpush1.xpose.msra.mxu0 0.0
          %1055 = vmatprep.subr.mxu0 0.0
          %1056 = vmatpush1.xpose.msra.mxu0 0.0
          %1057 = vmatprep.subr.mxu0 0.0
          %1058 = vmatpush1.xpose.msra.mxu0 0.0
          %1059 = vmatprep.subr.mxu0 0.0
          %1060 = vmatpush1.xpose.msra.mxu0 0.0
          %1061 = vmatprep.subr.mxu0 0.0
          %1062 = vmatpush1.xpose.msra.mxu0 0.0
          %1063 = vmatprep.subr.mxu0 0.0
          %1064 = vmatpush1.xpose.msra.mxu0 0.0
          %1065 = vmatprep.subr.mxu0 0.0
          %1066 = vmatpush1.xpose.msra.mxu0 0.0
          %1067 = vmatprep.subr.mxu0 0.0
          %1068 = vmatpush1.xpose.msra.mxu0 0.0
          %1069 = vmatprep.mubr.f32.mxu0 0.0
          %1070 = vmatmul.mubr.f32.gmra.mrb[0].mxu0 %v993
          %v1071 = vpop.f32.mrb[0].mxu0
          %v1072 = vadd.f32 0.0, %v1071
          %v1073 = vpop.f32.mrb[0].mxu0
          %1074 = vmatprep.mubr.f32.mxu0 0.0
          %1075 = vmatmul.mubr.f32.gmra.mrb[0].mxu0 %v995
          %v1076 = vpop.f32.mrb[0].mxu0
          %v1077 = vadd.f32 0.0, %v1076
          %v1078 = vpop.f32.mrb[0].mxu0
          %1079 = vmatprep.mubr.f32.mxu0 0.0
          %1080 = vmatmul.mubr.f32.gmra.mrb[0].mxu0 %v997
          %v1081 = vpop.f32.mrb[0].mxu0
          %v1082 = vadd.f32 0.0, %v1081
          %v1083 = vpop.f32.mrb[0].mxu0
          %1084 = vdwg.mxu0
          %v1085 = vmul.f32 %v1072, 0.4472136
          %v1086 = vmul.f32 %v1077, 0.4472136
          %v1087 = vmul.f32 %v1082, 0.4472136
          %1088 = vrot.lane.b32.xlu0 %v756, 113
          %v1089 = vpop.permute.xlu0 %1088
          %1090 = vrot.lane.b32.xlu0 %v761, 113
          %v1091 = vpop.permute.xlu0 %1090
          %1092 = vrot.lane.b32.xlu0 %v766, 113
          %v1093 = vpop.permute.xlu0 %1092
          %1094 = vrot.lane.b32.xlu0 %v756, 93
          %v1095 = vpop.permute.xlu0 %1094
          %1096 = vrot.lane.b32.xlu0 %v761, 93
          %v1097 = vpop.permute.xlu0 %1096
          %1098 = vrot.lane.b32.xlu0 %v766, 93
          %v1099 = vpop.permute.xlu0 %1098
          %v1100 = vsel %vm778, %v1089, 0
          %v1102 = vsel %vm778, %v1091, 0
          %v1104 = vsel %vm778, %v1093, 0
          %v1106 = vsel %vm778, %v1095, 0
          %v1108 = vsel %vm778, %v1097, 0
          %v1110 = vsel %vm778, %v1099, 0
          %1112 = vmatprep.subr.mxu0 0.0
          %1113 = vmatpush1.xpose.msra.mxu0 %v1106
          %1114 = vmatprep.subr.mxu0 0.0
          %1115 = vmatpush1.xpose.msra.mxu0 %v1108
          %1116 = vmatprep.subr.mxu0 0.0
          %1117 = vmatpush1.xpose.msra.mxu0 %v1110
          %1118 = vmatprep.subr.mxu0 0.0
          %1119 = vmatpush1.xpose.msra.mxu0 0.0
          %1120 = vmatprep.subr.mxu0 0.0
          %1121 = vmatpush1.xpose.msra.mxu0 0.0
          %1122 = vmatprep.subr.mxu0 0.0
          %1123 = vmatpush1.xpose.msra.mxu0 0.0
          %1124 = vmatprep.subr.mxu0 0.0
          %1125 = vmatpush1.xpose.msra.mxu0 0.0
          %1126 = vmatprep.subr.mxu0 0.0
          %1127 = vmatpush1.xpose.msra.mxu0 0.0
          %1128 = vmatprep.subr.mxu0 0.0
          %1129 = vmatpush1.xpose.msra.mxu0 0.0
          %1130 = vmatprep.subr.mxu0 0.0
          %1131 = vmatpush1.xpose.msra.mxu0 0.0
          %1132 = vmatprep.subr.mxu0 0.0
          %1133 = vmatpush1.xpose.msra.mxu0 0.0
          %1134 = vmatprep.subr.mxu0 0.0
          %1135 = vmatpush1.xpose.msra.mxu0 0.0
          %1136 = vmatprep.subr.mxu0 0.0
          %1137 = vmatpush1.xpose.msra.mxu0 0.0
          %1138 = vmatprep.subr.mxu0 0.0
          %1139 = vmatpush1.xpose.msra.mxu0 0.0
          %1140 = vmatprep.subr.mxu0 0.0
          %1141 = vmatpush1.xpose.msra.mxu0 0.0
          %1142 = vmatprep.subr.mxu0 0.0
          %1143 = vmatpush1.xpose.msra.mxu0 0.0
          %1144 = vmatprep.subr.mxu0 0.0
          %1145 = vmatpush1.xpose.msra.mxu0 0.0
          %1146 = vmatprep.subr.mxu0 0.0
          %1147 = vmatpush1.xpose.msra.mxu0 0.0
          %1148 = vmatprep.subr.mxu0 0.0
          %1149 = vmatpush1.xpose.msra.mxu0 0.0
          %1150 = vmatprep.subr.mxu0 0.0
          %1151 = vmatpush1.xpose.msra.mxu0 0.0
          %1152 = vmatprep.subr.mxu0 0.0
          %1153 = vmatpush1.xpose.msra.mxu0 0.0
          %1154 = vmatprep.subr.mxu0 0.0
          %1155 = vmatpush1.xpose.msra.mxu0 0.0
          %1156 = vmatprep.subr.mxu0 0.0
          %1157 = vmatpush1.xpose.msra.mxu0 0.0
          %1158 = vmatprep.subr.mxu0 0.0
          %1159 = vmatpush1.xpose.msra.mxu0 0.0
          %1160 = vmatprep.subr.mxu0 0.0
          %1161 = vmatpush1.xpose.msra.mxu0 0.0
          %1162 = vmatprep.subr.mxu0 0.0
          %1163 = vmatpush1.xpose.msra.mxu0 0.0
          %1164 = vmatprep.subr.mxu0 0.0
          %1165 = vmatpush1.xpose.msra.mxu0 0.0
          %1166 = vmatprep.subr.mxu0 0.0
          %1167 = vmatpush1.xpose.msra.mxu0 0.0
          %1168 = vmatprep.subr.mxu0 0.0
          %1169 = vmatpush1.xpose.msra.mxu0 0.0
          %1170 = vmatprep.subr.mxu0 0.0
          %1171 = vmatpush1.xpose.msra.mxu0 0.0
          %1172 = vmatprep.subr.mxu0 0.0
          %1173 = vmatpush1.xpose.msra.mxu0 0.0
          %1174 = vmatprep.subr.mxu0 0.0
          %1175 = vmatpush1.xpose.msra.mxu0 0.0
          %1176 = vmatprep.mubr.f32.mxu0 0.0
          %1177 = vmatmul.mubr.f32.gmra.mrb[0].mxu0 %v1100
          %v1178 = vpop.f32.mrb[0].mxu0
          %v1179 = vadd.f32 0.0, %v1178
          %v1180 = vpop.f32.mrb[0].mxu0
          %1181 = vmatprep.mubr.f32.mxu0 0.0
          %1182 = vmatmul.mubr.f32.gmra.mrb[0].mxu0 %v1102
          %v1183 = vpop.f32.mrb[0].mxu0
          %v1184 = vadd.f32 0.0, %v1183
          %v1185 = vpop.f32.mrb[0].mxu0
          %1186 = vmatprep.mubr.f32.mxu0 0.0
          %1187 = vmatmul.mubr.f32.gmra.mrb[0].mxu0 %v1104
          %v1188 = vpop.f32.mrb[0].mxu0
          %v1189 = vadd.f32 0.0, %v1188
          %v1190 = vpop.f32.mrb[0].mxu0
          %1191 = vdwg.mxu0
          %v1192 = vmul.f32 %v1179, 0.4472136
          %v1193 = vmul.f32 %v1184, 0.4472136
          %v1194 = vmul.f32 %v1189, 0.4472136
          %1195 = vrot.lane.b32.xlu0 %v756, 68
          %v1196 = vpop.permute.xlu0 %1195
          %1197 = vrot.lane.b32.xlu0 %v761, 68
          %v1198 = vpop.permute.xlu0 %1197
          %1199 = vrot.lane.b32.xlu0 %v766, 68
          %v1200 = vpop.permute.xlu0 %1199
          %1201 = vrot.lane.b32.xlu0 %v756, 48
          %v1202 = vpop.permute.xlu0 %1201
          %1203 = vrot.lane.b32.xlu0 %v761, 48
          %v1204 = vpop.permute.xlu0 %1203
          %1205 = vrot.lane.b32.xlu0 %v766, 48
          %v1206 = vpop.permute.xlu0 %1205
          %v1207 = vsel %vm778, %v1196, 0
          %v1209 = vsel %vm778, %v1198, 0
          %v1211 = vsel %vm778, %v1200, 0
          %v1213 = vsel %vm778, %v1202, 0
          %v1215 = vsel %vm778, %v1204, 0
          %v1217 = vsel %vm778, %v1206, 0
          %1219 = vmatprep.subr.mxu0 0.0
          %1220 = vmatpush1.xpose.msra.mxu0 %v1213
          %1221 = vmatprep.subr.mxu0 0.0
          %1222 = vmatpush1.xpose.msra.mxu0 %v1215
          %1223 = vmatprep.subr.mxu0 0.0
          %1224 = vmatpush1.xpose.msra.mxu0 %v1217
          %1225 = vmatprep.subr.mxu0 0.0
          %1226 = vmatpush1.xpose.msra.mxu0 0.0
          %1227 = vmatprep.subr.mxu0 0.0
          %1228 = vmatpush1.xpose.msra.mxu0 0.0
          %1229 = vmatprep.subr.mxu0 0.0
          %1230 = vmatpush1.xpose.msra.mxu0 0.0
          %1231 = vmatprep.subr.mxu0 0.0
          %1232 = vmatpush1.xpose.msra.mxu0 0.0
          %1233 = vmatprep.subr.mxu0 0.0
          %1234 = vmatpush1.xpose.msra.mxu0 0.0
          %1235 = vmatprep.subr.mxu0 0.0
          %1236 = vmatpush1.xpose.msra.mxu0 0.0
          %1237 = vmatprep.subr.mxu0 0.0
          %1238 = vmatpush1.xpose.msra.mxu0 0.0
          %1239 = vmatprep.subr.mxu0 0.0
          %1240 = vmatpush1.xpose.msra.mxu0 0.0
          %1241 = vmatprep.subr.mxu0 0.0
          %1242 = vmatpush1.xpose.msra.mxu0 0.0
          %1243 = vmatprep.subr.mxu0 0.0
          %1244 = vmatpush1.xpose.msra.mxu0 0.0
          %1245 = vmatprep.subr.mxu0 0.0
          %1246 = vmatpush1.xpose.msra.mxu0 0.0
          %1247 = vmatprep.subr.mxu0 0.0
          %1248 = vmatpush1.xpose.msra.mxu0 0.0
          %1249 = vmatprep.subr.mxu0 0.0
          %1250 = vmatpush1.xpose.msra.mxu0 0.0
          %1251 = vmatprep.subr.mxu0 0.0
          %1252 = vmatpush1.xpose.msra.mxu0 0.0
          %1253 = vmatprep.subr.mxu0 0.0
          %1254 = vmatpush1.xpose.msra.mxu0 0.0
          %1255 = vmatprep.subr.mxu0 0.0
          %1256 = vmatpush1.xpose.msra.mxu0 0.0
          %1257 = vmatprep.subr.mxu0 0.0
          %1258 = vmatpush1.xpose.msra.mxu0 0.0
          %1259 = vmatprep.subr.mxu0 0.0
          %1260 = vmatpush1.xpose.msra.mxu0 0.0
          %1261 = vmatprep.subr.mxu0 0.0
          %1262 = vmatpush1.xpose.msra.mxu0 0.0
          %1263 = vmatprep.subr.mxu0 0.0
          %1264 = vmatpush1.xpose.msra.mxu0 0.0
          %1265 = vmatprep.subr.mxu0 0.0
          %1266 = vmatpush1.xpose.msra.mxu0 0.0
          %1267 = vmatprep.subr.mxu0 0.0
          %1268 = vmatpush1.xpose.msra.mxu0 0.0
          %1269 = vmatprep.subr.mxu0 0.0
          %1270 = vmatpush1.xpose.msra.mxu0 0.0
          %1271 = vmatprep.subr.mxu0 0.0
          %1272 = vmatpush1.xpose.msra.mxu0 0.0
          %1273 = vmatprep.subr.mxu0 0.0
          %1274 = vmatpush1.xpose.msra.mxu0 0.0
          %1275 = vmatprep.subr.mxu0 0.0
          %1276 = vmatpush1.xpose.msra.mxu0 0.0
          %1277 = vmatprep.subr.mxu0 0.0
          %1278 = vmatpush1.xpose.msra.mxu0 0.0
          %1279 = vmatprep.subr.mxu0 0.0
          %1280 = vmatpush1.xpose.msra.mxu0 0.0
          %1281 = vmatprep.subr.mxu0 0.0
          %1282 = vmatpush1.xpose.msra.mxu0 0.0
          %1283 = vmatprep.mubr.f32.mxu0 0.0
          %1284 = vmatmul.mubr.f32.gmra.mrb[0].mxu0 %v1207
          %v1285 = vpop.f32.mrb[0].mxu0
          %v1286 = vadd.f32 0.0, %v1285
          %v1287 = vpop.f32.mrb[0].mxu0
          %1288 = vmatprep.mubr.f32.mxu0 0.0
          %1289 = vmatmul.mubr.f32.gmra.mrb[0].mxu0 %v1209
          %v1290 = vpop.f32.mrb[0].mxu0
          %v1291 = vadd.f32 0.0, %v1290
          %v1292 = vpop.f32.mrb[0].mxu0
          %1293 = vmatprep.mubr.f32.mxu0 0.0
          %1294 = vmatmul.mubr.f32.gmra.mrb[0].mxu0 %v1211
          %v1295 = vpop.f32.mrb[0].mxu0
          %v1296 = vadd.f32 0.0, %v1295
          %v1297 = vpop.f32.mrb[0].mxu0
          %1298 = vdwg.mxu0
          %v1299 = vmul.f32 %v1286, 0.4472136
          %v1300 = vmul.f32 %v1291, 0.4472136
          %v1301 = vmul.f32 %v1296, 0.4472136
          %1302 = vrot.lane.b32.xlu0 %v756, 63
          %v1303 = vpop.permute.xlu0 %1302
          %1304 = vrot.lane.b32.xlu0 %v761, 63
          %v1305 = vpop.permute.xlu0 %1304
          %1306 = vrot.lane.b32.xlu0 %v766, 63
          %v1307 = vpop.permute.xlu0 %1306
          %1308 = vrot.lane.b32.xlu0 %v756, 43
          %v1309 = vpop.permute.xlu0 %1308
          %1310 = vrot.lane.b32.xlu0 %v761, 43
          %v1311 = vpop.permute.xlu0 %1310
          %1312 = vrot.lane.b32.xlu0 %v766, 43
          %v1313 = vpop.permute.xlu0 %1312
          %v1314 = vsel %vm778, %v1303, 0
          %v1316 = vsel %vm778, %v1305, 0
          %v1318 = vsel %vm778, %v1307, 0
          %v1320 = vsel %vm778, %v1309, 0
          %v1322 = vsel %vm778, %v1311, 0
          %v1324 = vsel %vm778, %v1313, 0
          %1326 = vmatprep.subr.mxu0 0.0
          %1327 = vmatpush1.xpose.msra.mxu0 %v1320
          %1328 = vmatprep.subr.mxu0 0.0
          %1329 = vmatpush1.xpose.msra.mxu0 %v1322
          %1330 = vmatprep.subr.mxu0 0.0
          %1331 = vmatpush1.xpose.msra.mxu0 %v1324
          %1332 = vmatprep.subr.mxu0 0.0
          %1333 = vmatpush1.xpose.msra.mxu0 0.0
          %1334 = vmatprep.subr.mxu0 0.0
          %1335 = vmatpush1.xpose.msra.mxu0 0.0
          %1336 = vmatprep.subr.mxu0 0.0
          %1337 = vmatpush1.xpose.msra.mxu0 0.0
          %1338 = vmatprep.subr.mxu0 0.0
          %1339 = vmatpush1.xpose.msra.mxu0 0.0
          %1340 = vmatprep.subr.mxu0 0.0
          %1341 = vmatpush1.xpose.msra.mxu0 0.0
          %1342 = vmatprep.subr.mxu0 0.0
          %1343 = vmatpush1.xpose.msra.mxu0 0.0
          %1344 = vmatprep.subr.mxu0 0.0
          %1345 = vmatpush1.xpose.msra.mxu0 0.0
          %1346 = vmatprep.subr.mxu0 0.0
          %1347 = vmatpush1.xpose.msra.mxu0 0.0
          %1348 = vmatprep.subr.mxu0 0.0
          %1349 = vmatpush1.xpose.msra.mxu0 0.0
          %1350 = vmatprep.subr.mxu0 0.0
          %1351 = vmatpush1.xpose.msra.mxu0 0.0
          %1352 = vmatprep.subr.mxu0 0.0
          %1353 = vmatpush1.xpose.msra.mxu0 0.0
          %1354 = vmatprep.subr.mxu0 0.0
          %1355 = vmatpush1.xpose.msra.mxu0 0.0
          %1356 = vmatprep.subr.mxu0 0.0
          %1357 = vmatpush1.xpose.msra.mxu0 0.0
          %1358 = vmatprep.subr.mxu0 0.0
          %1359 = vmatpush1.xpose.msra.mxu0 0.0
          %1360 = vmatprep.subr.mxu0 0.0
          %1361 = vmatpush1.xpose.msra.mxu0 0.0
          %1362 = vmatprep.subr.mxu0 0.0
          %1363 = vmatpush1.xpose.msra.mxu0 0.0
          %1364 = vmatprep.subr.mxu0 0.0
          %1365 = vmatpush1.xpose.msra.mxu0 0.0
          %1366 = vmatprep.subr.mxu0 0.0
          %1367 = vmatpush1.xpose.msra.mxu0 0.0
          %1368 = vmatprep.subr.mxu0 0.0
          %1369 = vmatpush1.xpose.msra.mxu0 0.0
          %1370 = vmatprep.subr.mxu0 0.0
          %1371 = vmatpush1.xpose.msra.mxu0 0.0
          %1372 = vmatprep.subr.mxu0 0.0
          %1373 = vmatpush1.xpose.msra.mxu0 0.0
          %1374 = vmatprep.subr.mxu0 0.0
          %1375 = vmatpush1.xpose.msra.mxu0 0.0
          %1376 = vmatprep.subr.mxu0 0.0
          %1377 = vmatpush1.xpose.msra.mxu0 0.0
          %1378 = vmatprep.subr.mxu0 0.0
          %1379 = vmatpush1.xpose.msra.mxu0 0.0
          %1380 = vmatprep.subr.mxu0 0.0
          %1381 = vmatpush1.xpose.msra.mxu0 0.0
          %1382 = vmatprep.subr.mxu0 0.0
          %1383 = vmatpush1.xpose.msra.mxu0 0.0
          %1384 = vmatprep.subr.mxu0 0.0
          %1385 = vmatpush1.xpose.msra.mxu0 0.0
          %1386 = vmatprep.subr.mxu0 0.0
          %1387 = vmatpush1.xpose.msra.mxu0 0.0
          %1388 = vmatprep.subr.mxu0 0.0
          %1389 = vmatpush1.xpose.msra.mxu0 0.0
          %1390 = vmatprep.mubr.f32.mxu0 0.0
          %1391 = vmatmul.mubr.f32.gmra.mrb[0].mxu0 %v1314
          %v1392 = vpop.f32.mrb[0].mxu0
          %v1393 = vadd.f32 0.0, %v1392
          %v1394 = vpop.f32.mrb[0].mxu0
          %1395 = vmatprep.mubr.f32.mxu0 0.0
          %1396 = vmatmul.mubr.f32.gmra.mrb[0].mxu0 %v1316
          %v1397 = vpop.f32.mrb[0].mxu0
          %v1398 = vadd.f32 0.0, %v1397
          %v1399 = vpop.f32.mrb[0].mxu0
          %1400 = vmatprep.mubr.f32.mxu0 0.0
          %1401 = vmatmul.mubr.f32.gmra.mrb[0].mxu0 %v1318
          %v1402 = vpop.f32.mrb[0].mxu0
          %v1403 = vadd.f32 0.0, %v1402
          %v1404 = vpop.f32.mrb[0].mxu0
          %1405 = vdwg.mxu0
          %v1406 = vmul.f32 %v1393, 0.4472136
          %v1407 = vmul.f32 %v1398, 0.4472136
          %v1408 = vmul.f32 %v1403, 0.4472136
          %1409 = vrot.lane.b32.xlu0 %v756, 58
          %v1410 = vpop.permute.xlu0 %1409
          %1411 = vrot.lane.b32.xlu0 %v761, 58
          %v1412 = vpop.permute.xlu0 %1411
          %1413 = vrot.lane.b32.xlu0 %v766, 58
          %v1414 = vpop.permute.xlu0 %1413
          %1415 = vrot.lane.b32.xlu0 %v756, 38
          %v1416 = vpop.permute.xlu0 %1415
          %1417 = vrot.lane.b32.xlu0 %v761, 38
          %v1418 = vpop.permute.xlu0 %1417
          %1419 = vrot.lane.b32.xlu0 %v766, 38
          %v1420 = vpop.permute.xlu0 %1419
          %v1421 = vsel %vm778, %v1410, 0
          %v1423 = vsel %vm778, %v1412, 0
          %v1425 = vsel %vm778, %v1414, 0
          %v1427 = vsel %vm778, %v1416, 0
          %v1429 = vsel %vm778, %v1418, 0
          %v1431 = vsel %vm778, %v1420, 0
          %1433 = vmatprep.subr.mxu0 0.0
          %1434 = vmatpush1.xpose.msra.mxu0 %v1427
          %1435 = vmatprep.subr.mxu0 0.0
          %1436 = vmatpush1.xpose.msra.mxu0 %v1429
          %1437 = vmatprep.subr.mxu0 0.0
          %1438 = vmatpush1.xpose.msra.mxu0 %v1431
          %1439 = vmatprep.subr.mxu0 0.0
          %1440 = vmatpush1.xpose.msra.mxu0 0.0
          %1441 = vmatprep.subr.mxu0 0.0
          %1442 = vmatpush1.xpose.msra.mxu0 0.0
          %1443 = vmatprep.subr.mxu0 0.0
          %1444 = vmatpush1.xpose.msra.mxu0 0.0
          %1445 = vmatprep.subr.mxu0 0.0
          %1446 = vmatpush1.xpose.msra.mxu0 0.0
          %1447 = vmatprep.subr.mxu0 0.0
          %1448 = vmatpush1.xpose.msra.mxu0 0.0
          %1449 = vmatprep.subr.mxu0 0.0
          %1450 = vmatpush1.xpose.msra.mxu0 0.0
          %1451 = vmatprep.subr.mxu0 0.0
          %1452 = vmatpush1.xpose.msra.mxu0 0.0
          %1453 = vmatprep.subr.mxu0 0.0
          %1454 = vmatpush1.xpose.msra.mxu0 0.0
          %1455 = vmatprep.subr.mxu0 0.0
          %1456 = vmatpush1.xpose.msra.mxu0 0.0
          %1457 = vmatprep.subr.mxu0 0.0
          %1458 = vmatpush1.xpose.msra.mxu0 0.0
          %1459 = vmatprep.subr.mxu0 0.0
          %1460 = vmatpush1.xpose.msra.mxu0 0.0
          %1461 = vmatprep.subr.mxu0 0.0
          %1462 = vmatpush1.xpose.msra.mxu0 0.0
          %1463 = vmatprep.subr.mxu0 0.0
          %1464 = vmatpush1.xpose.msra.mxu0 0.0
          %1465 = vmatprep.subr.mxu0 0.0
          %1466 = vmatpush1.xpose.msra.mxu0 0.0
          %1467 = vmatprep.subr.mxu0 0.0
          %1468 = vmatpush1.xpose.msra.mxu0 0.0
          %1469 = vmatprep.subr.mxu0 0.0
          %1470 = vmatpush1.xpose.msra.mxu0 0.0
          %1471 = vmatprep.subr.mxu0 0.0
          %1472 = vmatpush1.xpose.msra.mxu0 0.0
          %1473 = vmatprep.subr.mxu0 0.0
          %1474 = vmatpush1.xpose.msra.mxu0 0.0
          %1475 = vmatprep.subr.mxu0 0.0
          %1476 = vmatpush1.xpose.msra.mxu0 0.0
          %1477 = vmatprep.subr.mxu0 0.0
          %1478 = vmatpush1.xpose.msra.mxu0 0.0
          %1479 = vmatprep.subr.mxu0 0.0
          %1480 = vmatpush1.xpose.msra.mxu0 0.0
          %1481 = vmatprep.subr.mxu0 0.0
          %1482 = vmatpush1.xpose.msra.mxu0 0.0
          %1483 = vmatprep.subr.mxu0 0.0
          %1484 = vmatpush1.xpose.msra.mxu0 0.0
          %1485 = vmatprep.subr.mxu0 0.0
          %1486 = vmatpush1.xpose.msra.mxu0 0.0
          %1487 = vmatprep.subr.mxu0 0.0
          %1488 = vmatpush1.xpose.msra.mxu0 0.0
          %1489 = vmatprep.subr.mxu0 0.0
          %1490 = vmatpush1.xpose.msra.mxu0 0.0
          %1491 = vmatprep.subr.mxu0 0.0
          %1492 = vmatpush1.xpose.msra.mxu0 0.0
          %1493 = vmatprep.subr.mxu0 0.0
          %1494 = vmatpush1.xpose.msra.mxu0 0.0
          %1495 = vmatprep.subr.mxu0 0.0
          %1496 = vmatpush1.xpose.msra.mxu0 0.0
          %1497 = vmatprep.mubr.f32.mxu0 0.0
          %1498 = vmatmul.mubr.f32.gmra.mrb[0].mxu0 %v1421
          %v1499 = vpop.f32.mrb[0].mxu0
          %v1500 = vadd.f32 0.0, %v1499
          %v1501 = vpop.f32.mrb[0].mxu0
          %1502 = vmatprep.mubr.f32.mxu0 0.0
          %1503 = vmatmul.mubr.f32.gmra.mrb[0].mxu0 %v1423
          %v1504 = vpop.f32.mrb[0].mxu0
          %v1505 = vadd.f32 0.0, %v1504
          %v1506 = vpop.f32.mrb[0].mxu0
          %1507 = vmatprep.mubr.f32.mxu0 0.0
          %1508 = vmatmul.mubr.f32.gmra.mrb[0].mxu0 %v1425
          %v1509 = vpop.f32.mrb[0].mxu0
          %v1510 = vadd.f32 0.0, %v1509
          %v1511 = vpop.f32.mrb[0].mxu0
          %1512 = vdwg.mxu0
          %v1513 = vmul.f32 %v1500, 0.4472136
          %v1514 = vmul.f32 %v1505, 0.4472136
          %v1515 = vmul.f32 %v1510, 0.4472136
          %1516 = vrot.lane.b32.xlu0 %v756, 53
          %v1517 = vpop.permute.xlu0 %1516
          %1518 = vrot.lane.b32.xlu0 %v761, 53
          %v1519 = vpop.permute.xlu0 %1518
          %1520 = vrot.lane.b32.xlu0 %v766, 53
          %v1521 = vpop.permute.xlu0 %1520
          %1522 = vrot.lane.b32.xlu0 %v756, 33
          %v1523 = vpop.permute.xlu0 %1522
          %1524 = vrot.lane.b32.xlu0 %v761, 33
          %v1525 = vpop.permute.xlu0 %1524
          %1526 = vrot.lane.b32.xlu0 %v766, 33
          %v1527 = vpop.permute.xlu0 %1526
          %v1528 = vsel %vm778, %v1517, 0
          %v1530 = vsel %vm778, %v1519, 0
          %v1532 = vsel %vm778, %v1521, 0
          %v1534 = vsel %vm778, %v1523, 0
          %v1536 = vsel %vm778, %v1525, 0
          %v1538 = vsel %vm778, %v1527, 0
          %1540 = vmatprep.subr.mxu0 0.0
          %1541 = vmatpush1.xpose.msra.mxu0 %v1534
          %1542 = vmatprep.subr.mxu0 0.0
          %1543 = vmatpush1.xpose.msra.mxu0 %v1536
          %1544 = vmatprep.subr.mxu0 0.0
          %1545 = vmatpush1.xpose.msra.mxu0 %v1538
          %1546 = vmatprep.subr.mxu0 0.0
          %1547 = vmatpush1.xpose.msra.mxu0 0.0
          %1548 = vmatprep.subr.mxu0 0.0
          %1549 = vmatpush1.xpose.msra.mxu0 0.0
          %1550 = vmatprep.subr.mxu0 0.0
          %1551 = vmatpush1.xpose.msra.mxu0 0.0
          %1552 = vmatprep.subr.mxu0 0.0
          %1553 = vmatpush1.xpose.msra.mxu0 0.0
          %1554 = vmatprep.subr.mxu0 0.0
          %1555 = vmatpush1.xpose.msra.mxu0 0.0
          %1556 = vmatprep.subr.mxu0 0.0
          %1557 = vmatpush1.xpose.msra.mxu0 0.0
          %1558 = vmatprep.subr.mxu0 0.0
          %1559 = vmatpush1.xpose.msra.mxu0 0.0
          %1560 = vmatprep.subr.mxu0 0.0
          %1561 = vmatpush1.xpose.msra.mxu0 0.0
          %1562 = vmatprep.subr.mxu0 0.0
          %1563 = vmatpush1.xpose.msra.mxu0 0.0
          %1564 = vmatprep.subr.mxu0 0.0
          %1565 = vmatpush1.xpose.msra.mxu0 0.0
          %1566 = vmatprep.subr.mxu0 0.0
          %1567 = vmatpush1.xpose.msra.mxu0 0.0
          %1568 = vmatprep.subr.mxu0 0.0
          %1569 = vmatpush1.xpose.msra.mxu0 0.0
          %1570 = vmatprep.subr.mxu0 0.0
          %1571 = vmatpush1.xpose.msra.mxu0 0.0
          %1572 = vmatprep.subr.mxu0 0.0
          %1573 = vmatpush1.xpose.msra.mxu0 0.0
          %1574 = vmatprep.subr.mxu0 0.0
          %1575 = vmatpush1.xpose.msra.mxu0 0.0
          %1576 = vmatprep.subr.mxu0 0.0
          %1577 = vmatpush1.xpose.msra.mxu0 0.0
          %1578 = vmatprep.subr.mxu0 0.0
          %1579 = vmatpush1.xpose.msra.mxu0 0.0
          %1580 = vmatprep.subr.mxu0 0.0
          %1581 = vmatpush1.xpose.msra.mxu0 0.0
          %1582 = vmatprep.subr.mxu0 0.0
          %1583 = vmatpush1.xpose.msra.mxu0 0.0
          %1584 = vmatprep.subr.mxu0 0.0
          %1585 = vmatpush1.xpose.msra.mxu0 0.0
          %1586 = vmatprep.subr.mxu0 0.0
          %1587 = vmatpush1.xpose.msra.mxu0 0.0
          %1588 = vmatprep.subr.mxu0 0.0
          %1589 = vmatpush1.xpose.msra.mxu0 0.0
          %1590 = vmatprep.subr.mxu0 0.0
          %1591 = vmatpush1.xpose.msra.mxu0 0.0
          %1592 = vmatprep.subr.mxu0 0.0
          %1593 = vmatpush1.xpose.msra.mxu0 0.0
          %1594 = vmatprep.subr.mxu0 0.0
          %1595 = vmatpush1.xpose.msra.mxu0 0.0
          %1596 = vmatprep.subr.mxu0 0.0
          %1597 = vmatpush1.xpose.msra.mxu0 0.0
          %1598 = vmatprep.subr.mxu0 0.0
          %1599 = vmatpush1.xpose.msra.mxu0 0.0
          %1600 = vmatprep.subr.mxu0 0.0
          %1601 = vmatpush1.xpose.msra.mxu0 0.0
          %1602 = vmatprep.subr.mxu0 0.0
          %1603 = vmatpush1.xpose.msra.mxu0 0.0
          %1604 = vmatprep.mubr.f32.mxu0 0.0
          %1605 = vmatmul.mubr.f32.gmra.mrb[0].mxu0 %v1528
          %v1606 = vpop.f32.mrb[0].mxu0
          %v1607 = vadd.f32 0.0, %v1606
          %v1608 = vpop.f32.mrb[0].mxu0
          %1609 = vmatprep.mubr.f32.mxu0 0.0
          %1610 = vmatmul.mubr.f32.gmra.mrb[0].mxu0 %v1530
          %v1611 = vpop.f32.mrb[0].mxu0
          %v1612 = vadd.f32 0.0, %v1611
          %v1613 = vpop.f32.mrb[0].mxu0
          %1614 = vmatprep.mubr.f32.mxu0 0.0
          %1615 = vmatmul.mubr.f32.gmra.mrb[0].mxu0 %v1532
          %v1616 = vpop.f32.mrb[0].mxu0
          %v1617 = vadd.f32 0.0, %v1616
          %v1618 = vpop.f32.mrb[0].mxu0
          %1619 = vdwg.mxu0
          %v1620 = vmul.f32 %v1607, 0.4472136
          %v1621 = vmul.f32 %v1612, 0.4472136
          %v1622 = vmul.f32 %v1617, 0.4472136
          %v1626 = vrot.slane %v978, 4
          %v1627 = vrot.slane %v979, 4
          %v1628 = vsel %vm685, %v1626, %v1627
          %v1629 = vrot.slane %v980, 4
          %v1630 = vsel %vm685, %v1627, %v1629
          %v1637 = vrot.slane %v1192, 4
          %v1638 = vrot.slane %v1193, 4
          %v1639 = vsel %vm685, %v1637, %v1638
          %v1640 = vrot.slane %v1194, 4
          %v1641 = vsel %vm685, %v1638, %v1640
          %v1648 = vrot.slane %v1406, 4
          %v1649 = vrot.slane %v1407, 4
          %v1650 = vsel %vm685, %v1648, %v1649
          %v1651 = vrot.slane %v1408, 4
          %v1652 = vsel %vm685, %v1649, %v1651
          %v1659 = vrot.slane %v1620, 4
          %v1660 = vrot.slane %v1621, 4
          %v1661 = vsel %vm685, %v1659, %v1660
          %v1662 = vrot.slane %v1622, 4
          %v1663 = vsel %vm685, %v1660, %v1662
          %v1667 = vsel %vm685, %v873, %v1626
          %v1668 = vsel %vm685, %v1087, %v1637
          %v1669 = vsel %vm685, %v1301, %v1648
          %v1670 = vsel %vm685, %v1515, %v1659
          %v1671 = vsel %vm604, %v871, -inf
          %1672 = vmax.xlane.f32.xlu0 %v1671
          %v1673 = vpop.xlane.xlu0 %1672
          %v1674 = vsel %vm604, %v872, -inf
          %1675 = vmax.xlane.f32.xlu0 %v1674
          %v1676 = vpop.xlane.xlu0 %1675
          %v1677 = vsel %vm604, %v1667, -inf
          %1678 = vmax.xlane.f32.xlu0 %v1677
          %v1679 = vpop.xlane.xlu0 %1678
          %v1680 = vsel %vm604, %v1628, -inf
          %1681 = vmax.xlane.f32.xlu0 %v1680
          %v1682 = vpop.xlane.xlu0 %1681
          %v1683 = vsel %vm604, %v1630, -inf
          %1684 = vmax.xlane.f32.xlu0 %v1683
          %v1685 = vpop.xlane.xlu0 %1684
          %v1686 = vsel %vm604, %v1085, -inf
          %1687 = vmax.xlane.f32.xlu0 %v1686
          %v1688 = vpop.xlane.xlu0 %1687
          %v1689 = vsel %vm604, %v1086, -inf
          %1690 = vmax.xlane.f32.xlu0 %v1689
          %v1691 = vpop.xlane.xlu0 %1690
          %v1692 = vsel %vm604, %v1668, -inf
          %1693 = vmax.xlane.f32.xlu0 %v1692
          %v1694 = vpop.xlane.xlu0 %1693
          %v1695 = vsel %vm604, %v1639, -inf
          %1696 = vmax.xlane.f32.xlu0 %v1695
          %v1697 = vpop.xlane.xlu0 %1696
          %v1698 = vsel %vm604, %v1641, -inf
          %1699 = vmax.xlane.f32.xlu0 %v1698
          %v1700 = vpop.xlane.xlu0 %1699
          %v1701 = vsel %vm604, %v1299, -inf
          %1702 = vmax.xlane.f32.xlu0 %v1701
          %v1703 = vpop.xlane.xlu0 %1702
          %v1704 = vsel %vm604, %v1300, -inf
          %1705 = vmax.xlane.f32.xlu0 %v1704
          %v1706 = vpop.xlane.xlu0 %1705
          %v1707 = vsel %vm604, %v1669, -inf
          %1708 = vmax.xlane.f32.xlu0 %v1707
          %v1709 = vpop.xlane.xlu0 %1708
          %v1710 = vsel %vm604, %v1650, -inf
          %1711 = vmax.xlane.f32.xlu0 %v1710
          %v1712 = vpop.xlane.xlu0 %1711
          %v1713 = vsel %vm604, %v1652, -inf
          %1714 = vmax.xlane.f32.xlu0 %v1713
          %v1715 = vpop.xlane.xlu0 %1714
          %v1716 = vsel %vm604, %v1513, -inf
          %1717 = vmax.xlane.f32.xlu0 %v1716
          %v1718 = vpop.xlane.xlu0 %1717
          %v1719 = vsel %vm604, %v1514, -inf
          %1720 = vmax.xlane.f32.xlu0 %v1719
          %v1721 = vpop.xlane.xlu0 %1720
          %v1722 = vsel %vm604, %v1670, -inf
          %1723 = vmax.xlane.f32.xlu0 %v1722
          %v1724 = vpop.xlane.xlu0 %1723
          %v1725 = vsel %vm604, %v1661, -inf
          %1726 = vmax.xlane.f32.xlu0 %v1725
          %v1727 = vpop.xlane.xlu0 %1726
          %v1728 = vsel %vm604, %v1663, -inf
          %1729 = vmax.xlane.f32.xlu0 %v1728
          %v1730 = vpop.xlane.xlu0 %1729
          %v1731 = vsub.f32 %v871, %v1673
          %v1732 = vsub.f32 %v872, %v1676
          %v1733 = vsub.f32 %v1667, %v1679
          %v1734 = vsub.f32 %v1628, %v1682
          %v1735 = vsub.f32 %v1630, %v1685
          %v1736 = vsub.f32 %v1085, %v1688
          %v1737 = vsub.f32 %v1086, %v1691
          %v1738 = vsub.f32 %v1668, %v1694
          %v1739 = vsub.f32 %v1639, %v1697
          %v1740 = vsub.f32 %v1641, %v1700
          %v1741 = vsub.f32 %v1299, %v1703
          %v1742 = vsub.f32 %v1300, %v1706
          %v1743 = vsub.f32 %v1669, %v1709
          %v1744 = vsub.f32 %v1650, %v1712
          %v1745 = vsub.f32 %v1652, %v1715
          %v1746 = vsub.f32 %v1513, %v1718
          %v1747 = vsub.f32 %v1514, %v1721
          %v1748 = vsub.f32 %v1670, %v1724
          %v1749 = vsub.f32 %v1661, %v1727
          %v1750 = vsub.f32 %v1663, %v1730
          %v1751 = vmul.f32 %v1731, 1.442695
          %v1752 = vpow.pop %v1751
          %v1753 = vmul.f32 %v1732, 1.442695
          %v1754 = vpow.pop %v1753
          %v1755 = vmul.f32 %v1733, 1.442695
          %v1756 = vpow.pop %v1755
          %v1757 = vmul.f32 %v1734, 1.442695
          %v1758 = vpow.pop %v1757
          %v1759 = vmul.f32 %v1735, 1.442695
          %v1760 = vpow.pop %v1759
          %v1761 = vmul.f32 %v1736, 1.442695
          %v1762 = vpow.pop %v1761
          %v1763 = vmul.f32 %v1737, 1.442695
          %v1764 = vpow.pop %v1763
          %v1765 = vmul.f32 %v1738, 1.442695
          %v1766 = vpow.pop %v1765
          %v1767 = vmul.f32 %v1739, 1.442695
          %v1768 = vpow.pop %v1767
          %v1769 = vmul.f32 %v1740, 1.442695
          %v1770 = vpow.pop %v1769
          %v1771 = vmul.f32 %v1741, 1.442695
          %v1772 = vpow.pop %v1771
          %v1773 = vmul.f32 %v1742, 1.442695
          %v1774 = vpow.pop %v1773
          %v1775 = vmul.f32 %v1743, 1.442695
          %v1776 = vpow.pop %v1775
          %v1777 = vmul.f32 %v1744, 1.442695
          %v1778 = vpow.pop %v1777
          %v1779 = vmul.f32 %v1745, 1.442695
          %v1780 = vpow.pop %v1779
          %v1781 = vmul.f32 %v1746, 1.442695
          %v1782 = vpow.pop %v1781
          %v1783 = vmul.f32 %v1747, 1.442695
          %v1784 = vpow.pop %v1783
          %v1785 = vmul.f32 %v1748, 1.442695
          %v1786 = vpow.pop %v1785
          %v1787 = vmul.f32 %v1749, 1.442695
          %v1788 = vpow.pop %v1787
          %v1789 = vmul.f32 %v1750, 1.442695
          %v1790 = vpow.pop %v1789
          %v1791 = vsel %vm604, %v1752, 0.0
          %1792 = vadd.xlane.f32.xlu0 %v1791
          %v1793 = vpop.xlane.xlu0 %1792
          %v1794 = vsel %vm604, %v1754, 0.0
          %1795 = vadd.xlane.f32.xlu0 %v1794
          %v1796 = vpop.xlane.xlu0 %1795
          %v1797 = vsel %vm604, %v1756, 0.0
          %1798 = vadd.xlane.f32.xlu0 %v1797
          %v1799 = vpop.xlane.xlu0 %1798
          %v1800 = vsel %vm604, %v1758, 0.0
          %1801 = vadd.xlane.f32.xlu0 %v1800
          %v1802 = vpop.xlane.xlu0 %1801
          %v1803 = vsel %vm604, %v1760, 0.0
          %1804 = vadd.xlane.f32.xlu0 %v1803
          %v1805 = vpop.xlane.xlu0 %1804
          %v1806 = vsel %vm604, %v1762, 0.0
          %1807 = vadd.xlane.f32.xlu0 %v1806
          %v1808 = vpop.xlane.xlu0 %1807
          %v1809 = vsel %vm604, %v1764, 0.0
          %1810 = vadd.xlane.f32.xlu0 %v1809
          %v1811 = vpop.xlane.xlu0 %1810
          %v1812 = vsel %vm604, %v1766, 0.0
          %1813 = vadd.xlane.f32.xlu0 %v1812
          %v1814 = vpop.xlane.xlu0 %1813
          %v1815 = vsel %vm604, %v1768, 0.0
          %1816 = vadd.xlane.f32.xlu0 %v1815
          %v1817 = vpop.xlane.xlu0 %1816
          %v1818 = vsel %vm604, %v1770, 0.0
          %1819 = vadd.xlane.f32.xlu0 %v1818
          %v1820 = vpop.xlane.xlu0 %1819
          %v1821 = vsel %vm604, %v1772, 0.0
          %1822 = vadd.xlane.f32.xlu0 %v1821
          %v1823 = vpop.xlane.xlu0 %1822
          %v1824 = vsel %vm604, %v1774, 0.0
          %1825 = vadd.xlane.f32.xlu0 %v1824
          %v1826 = vpop.xlane.xlu0 %1825
          %v1827 = vsel %vm604, %v1776, 0.0
          %1828 = vadd.xlane.f32.xlu0 %v1827
          %v1829 = vpop.xlane.xlu0 %1828
          %v1830 = vsel %vm604, %v1778, 0.0
          %1831 = vadd.xlane.f32.xlu0 %v1830
          %v1832 = vpop.xlane.xlu0 %1831
          %v1833 = vsel %vm604, %v1780, 0.0
          %1834 = vadd.xlane.f32.xlu0 %v1833
          %v1835 = vpop.xlane.xlu0 %1834
          %v1836 = vsel %vm604, %v1782, 0.0
          %1837 = vadd.xlane.f32.xlu0 %v1836
          %v1838 = vpop.xlane.xlu0 %1837
          %v1839 = vsel %vm604, %v1784, 0.0
          %1840 = vadd.xlane.f32.xlu0 %v1839
          %v1841 = vpop.xlane.xlu0 %1840
          %v1842 = vsel %vm604, %v1786, 0.0
          %1843 = vadd.xlane.f32.xlu0 %v1842
          %v1844 = vpop.xlane.xlu0 %1843
          %v1845 = vsel %vm604, %v1788, 0.0
          %1846 = vadd.xlane.f32.xlu0 %v1845
          %v1847 = vpop.xlane.xlu0 %1846
          %v1848 = vsel %vm604, %v1790, 0.0
          %1849 = vadd.xlane.f32.xlu0 %v1848
          %v1850 = vpop.xlane.xlu0 %1849
          %v1851 = vrcp.pop %v1793
          %v1852 = vrcp.pop %v1796
          %v1853 = vrcp.pop %v1799
          %v1854 = vrcp.pop %v1802
          %v1855 = vrcp.pop %v1805
          %v1856 = vrcp.pop %v1808
          %v1857 = vrcp.pop %v1811
          %v1858 = vrcp.pop %v1814
          %v1859 = vrcp.pop %v1817
          %v1860 = vrcp.pop %v1820
          %v1861 = vrcp.pop %v1823
          %v1862 = vrcp.pop %v1826
          %v1863 = vrcp.pop %v1829
          %v1864 = vrcp.pop %v1832
          %v1865 = vrcp.pop %v1835
          %v1866 = vrcp.pop %v1838
          %v1867 = vrcp.pop %v1841
          %v1868 = vrcp.pop %v1844
          %v1869 = vrcp.pop %v1847
          %v1870 = vrcp.pop %v1850
          %v1871 = vmul.f32 %v1752, %v1851
          %v1872 = vmul.f32 %v1754, %v1852
          %v1873 = vmul.f32 %v1756, %v1853
          %v1874 = vmul.f32 %v1758, %v1854
          %v1875 = vmul.f32 %v1760, %v1855
          %v1876 = vmul.f32 %v1762, %v1856
          %v1877 = vmul.f32 %v1764, %v1857
          %v1878 = vmul.f32 %v1766, %v1858
          %v1879 = vmul.f32 %v1768, %v1859
          %v1880 = vmul.f32 %v1770, %v1860
          %v1881 = vmul.f32 %v1772, %v1861
          %v1882 = vmul.f32 %v1774, %v1862
          %v1883 = vmul.f32 %v1776, %v1863
          %v1884 = vmul.f32 %v1778, %v1864
          %v1885 = vmul.f32 %v1780, %v1865
          %v1886 = vmul.f32 %v1782, %v1866
          %v1887 = vmul.f32 %v1784, %v1867
          %v1888 = vmul.f32 %v1786, %v1868
          %v1889 = vmul.f32 %v1788, %v1869
          %v1890 = vmul.f32 %v1790, %v1870
          %1891 = vrot.lane.b32.xlu0 %v756, 88
          %v1892 = vpop.permute.xlu0 %1891
          %1893 = vrot.lane.b32.xlu0 %v761, 88
          %v1894 = vpop.permute.xlu0 %1893
          %1895 = vrot.lane.b32.xlu0 %v766, 88
          %v1896 = vpop.permute.xlu0 %1895
          %v1900 = vsel %vm604, %v1871, 0
          %v1903 = vsel %vm604, %v1872, 0
          %v1906 = vsel %vm604, %v1873, 0
          %v1908 = vsel %vm685, %v1896, 0
          %1910 = vmatprep.subr.mxu0 0.0
          %1911 = vmatpush1.msra.mxu0 %v1892
          %1912 = vmatprep.subr.mxu0 0.0
          %1913 = vmatpush1.msra.mxu0 %v1894
          %1914 = vmatprep.subr.mxu0 0.0
          %1915 = vmatpush1.msra.mxu0 %v1908
          %1916 = vmatprep.subr.mxu0 0.0
          %1917 = vmatpush1.msra.mxu0 0.0
          %1918 = vmatprep.subr.mxu0 0.0
          %1919 = vmatpush1.msra.mxu0 0.0
          %1920 = vmatprep.subr.mxu0 0.0
          %1921 = vmatpush1.msra.mxu0 0.0
          %1922 = vmatprep.subr.mxu0 0.0
          %1923 = vmatpush1.msra.mxu0 0.0
          %1924 = vmatprep.subr.mxu0 0.0
          %1925 = vmatpush1.msra.mxu0 0.0
          %1926 = vmatprep.subr.mxu0 0.0
          %1927 = vmatpush1.msra.mxu0 0.0
          %1928 = vmatprep.subr.mxu0 0.0
          %1929 = vmatpush1.msra.mxu0 0.0
          %1930 = vmatprep.subr.mxu0 0.0
          %1931 = vmatpush1.msra.mxu0 0.0
          %1932 = vmatprep.subr.mxu0 0.0
          %1933 = vmatpush1.msra.mxu0 0.0
          %1934 = vmatprep.subr.mxu0 0.0
          %1935 = vmatpush1.msra.mxu0 0.0
          %1936 = vmatprep.subr.mxu0 0.0
          %1937 = vmatpush1.msra.mxu0 0.0
          %1938 = vmatprep.subr.mxu0 0.0
          %1939 = vmatpush1.msra.mxu0 0.0
          %1940 = vmatprep.subr.mxu0 0.0
          %1941 = vmatpush1.msra.mxu0 0.0
          %1942 = vmatprep.subr.mxu0 0.0
          %1943 = vmatpush1.msra.mxu0 0.0
          %1944 = vmatprep.subr.mxu0 0.0
          %1945 = vmatpush1.msra.mxu0 0.0
          %1946 = vmatprep.subr.mxu0 0.0
          %1947 = vmatpush1.msra.mxu0 0.0
          %1948 = vmatprep.subr.mxu0 0.0
          %1949 = vmatpush1.msra.mxu0 0.0
          %1950 = vmatprep.subr.mxu0 0.0
          %1951 = vmatpush1.msra.mxu0 0.0
          %1952 = vmatprep.subr.mxu0 0.0
          %1953 = vmatpush1.msra.mxu0 0.0
          %1954 = vmatprep.subr.mxu0 0.0
          %1955 = vmatpush1.msra.mxu0 0.0
          %1956 = vmatprep.subr.mxu0 0.0
          %1957 = vmatpush1.msra.mxu0 0.0
          %1958 = vmatprep.subr.mxu0 0.0
          %1959 = vmatpush1.msra.mxu0 0.0
          %1960 = vmatprep.subr.mxu0 0.0
          %1961 = vmatpush1.msra.mxu0 0.0
          %1962 = vmatprep.subr.mxu0 0.0
          %1963 = vmatpush1.msra.mxu0 0.0
          %1964 = vmatprep.subr.mxu0 0.0
          %1965 = vmatpush1.msra.mxu0 0.0
          %1966 = vmatprep.subr.mxu0 0.0
          %1967 = vmatpush1.msra.mxu0 0.0
          %1968 = vmatprep.subr.mxu0 0.0
          %1969 = vmatpush1.msra.mxu0 0.0
          %1970 = vmatprep.subr.mxu0 0.0
          %1971 = vmatpush1.msra.mxu0 0.0
          %1972 = vmatprep.subr.mxu0 0.0
          %1973 = vmatpush1.msra.mxu0 0.0
          %1974 = vmatprep.mubr.f32.mxu0 0.0
          %1975 = vmatmul.mubr.f32.gmra.mrb[0].mxu0 %v1900
          %v1976 = vpop.f32.mrb[0].mxu0
          %v1977 = vadd.f32 0.0, %v1976
          %v1978 = vpop.f32.mrb[0].mxu0
          %1979 = vmatprep.mubr.f32.mxu0 0.0
          %1980 = vmatmul.mubr.f32.gmra.mrb[0].mxu0 %v1903
          %v1981 = vpop.f32.mrb[0].mxu0
          %v1982 = vadd.f32 0.0, %v1981
          %v1983 = vpop.f32.mrb[0].mxu0
          %1984 = vmatprep.mubr.f32.mxu0 0.0
          %1985 = vmatmul.mubr.f32.gmra.mrb[0].mxu0 %v1906
          %v1986 = vpop.f32.mrb[0].mxu0
          %v1987 = vadd.f32 0.0, %v1986
          %v1988 = vpop.f32.mrb[0].mxu0
          %1989 = vdwg.mxu0
          %v1992 = vrot.slane %v1873, 4
          %v1993 = vrot.slane %v1874, 4
          %v1994 = vsel %vm685, %v1992, %v1993
          %v1995 = vrot.slane %v1875, 4
          %v1996 = vsel %vm685, %v1993, %v1995
          %1997 = vrot.lane.b32.xlu0 %v756, 83
          %v1998 = vpop.permute.xlu0 %1997
          %1999 = vrot.lane.b32.xlu0 %v761, 83
          %v2000 = vpop.permute.xlu0 %1999
          %2001 = vrot.lane.b32.xlu0 %v766, 83
          %v2002 = vpop.permute.xlu0 %2001
          %v2005 = vsel %vm604, %v1994, 0
          %v2007 = vsel %vm604, %v1996, 0
          %v2009 = vsel %vm604, %v1995, 0
          %v2011 = vsel %vm685, %v2002, 0
          %2013 = vmatprep.subr.mxu0 0.0
          %2014 = vmatpush1.msra.mxu0 %v1998
          %2015 = vmatprep.subr.mxu0 0.0
          %2016 = vmatpush1.msra.mxu0 %v2000
          %2017 = vmatprep.subr.mxu0 0.0
          %2018 = vmatpush1.msra.mxu0 %v2011
          %2019 = vmatprep.subr.mxu0 0.0
          %2020 = vmatpush1.msra.mxu0 0.0
          %2021 = vmatprep.subr.mxu0 0.0
          %2022 = vmatpush1.msra.mxu0 0.0
          %2023 = vmatprep.subr.mxu0 0.0
          %2024 = vmatpush1.msra.mxu0 0.0
          %2025 = vmatprep.subr.mxu0 0.0
          %2026 = vmatpush1.msra.mxu0 0.0
          %2027 = vmatprep.subr.mxu0 0.0
          %2028 = vmatpush1.msra.mxu0 0.0
          %2029 = vmatprep.subr.mxu0 0.0
          %2030 = vmatpush1.msra.mxu0 0.0
          %2031 = vmatprep.subr.mxu0 0.0
          %2032 = vmatpush1.msra.mxu0 0.0
          %2033 = vmatprep.subr.mxu0 0.0
          %2034 = vmatpush1.msra.mxu0 0.0
          %2035 = vmatprep.subr.mxu0 0.0
          %2036 = vmatpush1.msra.mxu0 0.0
          %2037 = vmatprep.subr.mxu0 0.0
          %2038 = vmatpush1.msra.mxu0 0.0
          %2039 = vmatprep.subr.mxu0 0.0
          %2040 = vmatpush1.msra.mxu0 0.0
          %2041 = vmatprep.subr.mxu0 0.0
          %2042 = vmatpush1.msra.mxu0 0.0
          %2043 = vmatprep.subr.mxu0 0.0
          %2044 = vmatpush1.msra.mxu0 0.0
          %2045 = vmatprep.subr.mxu0 0.0
          %2046 = vmatpush1.msra.mxu0 0.0
          %2047 = vmatprep.subr.mxu0 0.0
          %2048 = vmatpush1.msra.mxu0 0.0
          %2049 = vmatprep.subr.mxu0 0.0
          %2050 = vmatpush1.msra.mxu0 0.0
          %2051 = vmatprep.subr.mxu0 0.0
          %2052 = vmatpush1.msra.mxu0 0.0
          %2053 = vmatprep.subr.mxu0 0.0
          %2054 = vmatpush1.msra.mxu0 0.0
          %2055 = vmatprep.subr.mxu0 0.0
          %2056 = vmatpush1.msra.mxu0 0.0
          %2057 = vmatprep.subr.mxu0 0.0
          %2058 = vmatpush1.msra.mxu0 0.0
          %2059 = vmatprep.subr.mxu0 0.0
          %2060 = vmatpush1.msra.mxu0 0.0
          %2061 = vmatprep.subr.mxu0 0.0
          %2062 = vmatpush1.msra.mxu0 0.0
          %2063 = vmatprep.subr.mxu0 0.0
          %2064 = vmatpush1.msra.mxu0 0.0
          %2065 = vmatprep.subr.mxu0 0.0
          %2066 = vmatpush1.msra.mxu0 0.0
          %2067 = vmatprep.subr.mxu0 0.0
          %2068 = vmatpush1.msra.mxu0 0.0
          %2069 = vmatprep.subr.mxu0 0.0
          %2070 = vmatpush1.msra.mxu0 0.0
          %2071 = vmatprep.subr.mxu0 0.0
          %2072 = vmatpush1.msra.mxu0 0.0
          %2073 = vmatprep.subr.mxu0 0.0
          %2074 = vmatpush1.msra.mxu0 0.0
          %2075 = vmatprep.subr.mxu0 0.0
          %2076 = vmatpush1.msra.mxu0 0.0
          %2077 = vmatprep.mubr.f32.mxu0 0.0
          %2078 = vmatmul.mubr.f32.gmra.mrb[0].mxu0 %v2005
          %v2079 = vpop.f32.mrb[0].mxu0
          %v2080 = vadd.f32 0.0, %v2079
          %v2081 = vpop.f32.mrb[0].mxu0
          %2082 = vmatprep.mubr.f32.mxu0 0.0
          %2083 = vmatmul.mubr.f32.gmra.mrb[0].mxu0 %v2007
          %v2084 = vpop.f32.mrb[0].mxu0
          %v2085 = vadd.f32 0.0, %v2084
          %v2086 = vpop.f32.mrb[0].mxu0
          %2087 = vmatprep.mubr.f32.mxu0 0.0
          %2088 = vmatmul.mubr.f32.gmra.mrb[0].mxu0 %v2009
          %v2089 = vpop.f32.mrb[0].mxu0
          %v2090 = vadd.f32 0.0, %v2089
          %v2091 = vpop.f32.mrb[0].mxu0
          %2092 = vdwg.mxu0
          %2093 = vrot.lane.b32.xlu0 %v756, 78
          %v2094 = vpop.permute.xlu0 %2093
          %2095 = vrot.lane.b32.xlu0 %v761, 78
          %v2096 = vpop.permute.xlu0 %2095
          %2097 = vrot.lane.b32.xlu0 %v766, 78
          %v2098 = vpop.permute.xlu0 %2097
          %v2102 = vsel %vm604, %v1876, 0
          %v2105 = vsel %vm604, %v1877, 0
          %v2108 = vsel %vm604, %v1878, 0
          %v2110 = vsel %vm685, %v2098, 0
          %2112 = vmatprep.subr.mxu0 0.0
          %2113 = vmatpush1.msra.mxu0 %v2094
          %2114 = vmatprep.subr.mxu0 0.0
          %2115 = vmatpush1.msra.mxu0 %v2096
          %2116 = vmatprep.subr.mxu0 0.0
          %2117 = vmatpush1.msra.mxu0 %v2110
          %2118 = vmatprep.subr.mxu0 0.0
          %2119 = vmatpush1.msra.mxu0 0.0
          %2120 = vmatprep.subr.mxu0 0.0
          %2121 = vmatpush1.msra.mxu0 0.0
          %2122 = vmatprep.subr.mxu0 0.0
          %2123 = vmatpush1.msra.mxu0 0.0
          %2124 = vmatprep.subr.mxu0 0.0
          %2125 = vmatpush1.msra.mxu0 0.0
          %2126 = vmatprep.subr.mxu0 0.0
          %2127 = vmatpush1.msra.mxu0 0.0
          %2128 = vmatprep.subr.mxu0 0.0
          %2129 = vmatpush1.msra.mxu0 0.0
          %2130 = vmatprep.subr.mxu0 0.0
          %2131 = vmatpush1.msra.mxu0 0.0
          %2132 = vmatprep.subr.mxu0 0.0
          %2133 = vmatpush1.msra.mxu0 0.0
          %2134 = vmatprep.subr.mxu0 0.0
          %2135 = vmatpush1.msra.mxu0 0.0
          %2136 = vmatprep.subr.mxu0 0.0
          %2137 = vmatpush1.msra.mxu0 0.0
          %2138 = vmatprep.subr.mxu0 0.0
          %2139 = vmatpush1.msra.mxu0 0.0
          %2140 = vmatprep.subr.mxu0 0.0
          %2141 = vmatpush1.msra.mxu0 0.0
          %2142 = vmatprep.subr.mxu0 0.0
          %2143 = vmatpush1.msra.mxu0 0.0
          %2144 = vmatprep.subr.mxu0 0.0
          %2145 = vmatpush1.msra.mxu0 0.0
          %2146 = vmatprep.subr.mxu0 0.0
          %2147 = vmatpush1.msra.mxu0 0.0
          %2148 = vmatprep.subr.mxu0 0.0
          %2149 = vmatpush1.msra.mxu0 0.0
          %2150 = vmatprep.subr.mxu0 0.0
          %2151 = vmatpush1.msra.mxu0 0.0
          %2152 = vmatprep.subr.mxu0 0.0
          %2153 = vmatpush1.msra.mxu0 0.0
          %2154 = vmatprep.subr.mxu0 0.0
          %2155 = vmatpush1.msra.mxu0 0.0
          %2156 = vmatprep.subr.mxu0 0.0
          %2157 = vmatpush1.msra.mxu0 0.0
          %2158 = vmatprep.subr.mxu0 0.0
          %2159 = vmatpush1.msra.mxu0 0.0
          %2160 = vmatprep.subr.mxu0 0.0
          %2161 = vmatpush1.msra.mxu0 0.0
          %2162 = vmatprep.subr.mxu0 0.0
          %2163 = vmatpush1.msra.mxu0 0.0
          %2164 = vmatprep.subr.mxu0 0.0
          %2165 = vmatpush1.msra.mxu0 0.0
          %2166 = vmatprep.subr.mxu0 0.0
          %2167 = vmatpush1.msra.mxu0 0.0
          %2168 = vmatprep.subr.mxu0 0.0
          %2169 = vmatpush1.msra.mxu0 0.0
          %2170 = vmatprep.subr.mxu0 0.0
          %2171 = vmatpush1.msra.mxu0 0.0
          %2172 = vmatprep.subr.mxu0 0.0
          %2173 = vmatpush1.msra.mxu0 0.0
          %2174 = vmatprep.subr.mxu0 0.0
          %2175 = vmatpush1.msra.mxu0 0.0
          %2176 = vmatprep.mubr.f32.mxu0 0.0
          %2177 = vmatmul.mubr.f32.gmra.mrb[0].mxu0 %v2102
          %v2178 = vpop.f32.mrb[0].mxu0
          %v2179 = vadd.f32 0.0, %v2178
          %v2180 = vpop.f32.mrb[0].mxu0
          %2181 = vmatprep.mubr.f32.mxu0 0.0
          %2182 = vmatmul.mubr.f32.gmra.mrb[0].mxu0 %v2105
          %v2183 = vpop.f32.mrb[0].mxu0
          %v2184 = vadd.f32 0.0, %v2183
          %v2185 = vpop.f32.mrb[0].mxu0
          %2186 = vmatprep.mubr.f32.mxu0 0.0
          %2187 = vmatmul.mubr.f32.gmra.mrb[0].mxu0 %v2108
          %v2188 = vpop.f32.mrb[0].mxu0
          %v2189 = vadd.f32 0.0, %v2188
          %v2190 = vpop.f32.mrb[0].mxu0
          %2191 = vdwg.mxu0
          %v2194 = vrot.slane %v1878, 4
          %v2195 = vrot.slane %v1879, 4
          %v2196 = vsel %vm685, %v2194, %v2195
          %v2197 = vrot.slane %v1880, 4
          %v2198 = vsel %vm685, %v2195, %v2197
          %2199 = vrot.lane.b32.xlu0 %v756, 73
          %v2200 = vpop.permute.xlu0 %2199
          %2201 = vrot.lane.b32.xlu0 %v761, 73
          %v2202 = vpop.permute.xlu0 %2201
          %2203 = vrot.lane.b32.xlu0 %v766, 73
          %v2204 = vpop.permute.xlu0 %2203
          %v2207 = vsel %vm604, %v2196, 0
          %v2209 = vsel %vm604, %v2198, 0
          %v2211 = vsel %vm604, %v2197, 0
          %v2213 = vsel %vm685, %v2204, 0
          %2215 = vmatprep.subr.mxu0 0.0
          %2216 = vmatpush1.msra.mxu0 %v2200
          %2217 = vmatprep.subr.mxu0 0.0
          %2218 = vmatpush1.msra.mxu0 %v2202
          %2219 = vmatprep.subr.mxu0 0.0
          %2220 = vmatpush1.msra.mxu0 %v2213
          %2221 = vmatprep.subr.mxu0 0.0
          %2222 = vmatpush1.msra.mxu0 0.0
          %2223 = vmatprep.subr.mxu0 0.0
          %2224 = vmatpush1.msra.mxu0 0.0
          %2225 = vmatprep.subr.mxu0 0.0
          %2226 = vmatpush1.msra.mxu0 0.0
          %2227 = vmatprep.subr.mxu0 0.0
          %2228 = vmatpush1.msra.mxu0 0.0
          %2229 = vmatprep.subr.mxu0 0.0
          %2230 = vmatpush1.msra.mxu0 0.0
          %2231 = vmatprep.subr.mxu0 0.0
          %2232 = vmatpush1.msra.mxu0 0.0
          %2233 = vmatprep.subr.mxu0 0.0
          %2234 = vmatpush1.msra.mxu0 0.0
          %2235 = vmatprep.subr.mxu0 0.0
          %2236 = vmatpush1.msra.mxu0 0.0
          %2237 = vmatprep.subr.mxu0 0.0
          %2238 = vmatpush1.msra.mxu0 0.0
          %2239 = vmatprep.subr.mxu0 0.0
          %2240 = vmatpush1.msra.mxu0 0.0
          %2241 = vmatprep.subr.mxu0 0.0
          %2242 = vmatpush1.msra.mxu0 0.0
          %2243 = vmatprep.subr.mxu0 0.0
          %2244 = vmatpush1.msra.mxu0 0.0
          %2245 = vmatprep.subr.mxu0 0.0
          %2246 = vmatpush1.msra.mxu0 0.0
          %2247 = vmatprep.subr.mxu0 0.0
          %2248 = vmatpush1.msra.mxu0 0.0
          %2249 = vmatprep.subr.mxu0 0.0
          %2250 = vmatpush1.msra.mxu0 0.0
          %2251 = vmatprep.subr.mxu0 0.0
          %2252 = vmatpush1.msra.mxu0 0.0
          %2253 = vmatprep.subr.mxu0 0.0
          %2254 = vmatpush1.msra.mxu0 0.0
          %2255 = vmatprep.subr.mxu0 0.0
          %2256 = vmatpush1.msra.mxu0 0.0
          %2257 = vmatprep.subr.mxu0 0.0
          %2258 = vmatpush1.msra.mxu0 0.0
          %2259 = vmatprep.subr.mxu0 0.0
          %2260 = vmatpush1.msra.mxu0 0.0
          %2261 = vmatprep.subr.mxu0 0.0
          %2262 = vmatpush1.msra.mxu0 0.0
          %2263 = vmatprep.subr.mxu0 0.0
          %2264 = vmatpush1.msra.mxu0 0.0
          %2265 = vmatprep.subr.mxu0 0.0
          %2266 = vmatpush1.msra.mxu0 0.0
          %2267 = vmatprep.subr.mxu0 0.0
          %2268 = vmatpush1.msra.mxu0 0.0
          %2269 = vmatprep.subr.mxu0 0.0
          %2270 = vmatpush1.msra.mxu0 0.0
          %2271 = vmatprep.subr.mxu0 0.0
          %2272 = vmatpush1.msra.mxu0 0.0
          %2273 = vmatprep.subr.mxu0 0.0
          %2274 = vmatpush1.msra.mxu0 0.0
          %2275 = vmatprep.subr.mxu0 0.0
          %2276 = vmatpush1.msra.mxu0 0.0
          %2277 = vmatprep.subr.mxu0 0.0
          %2278 = vmatpush1.msra.mxu0 0.0
          %2279 = vmatprep.mubr.f32.mxu0 0.0
          %2280 = vmatmul.mubr.f32.gmra.mrb[0].mxu0 %v2207
          %v2281 = vpop.f32.mrb[0].mxu0
          %v2282 = vadd.f32 0.0, %v2281
          %v2283 = vpop.f32.mrb[0].mxu0
          %2284 = vmatprep.mubr.f32.mxu0 0.0
          %2285 = vmatmul.mubr.f32.gmra.mrb[0].mxu0 %v2209
          %v2286 = vpop.f32.mrb[0].mxu0
          %v2287 = vadd.f32 0.0, %v2286
          %v2288 = vpop.f32.mrb[0].mxu0
          %2289 = vmatprep.mubr.f32.mxu0 0.0
          %2290 = vmatmul.mubr.f32.gmra.mrb[0].mxu0 %v2211
          %v2291 = vpop.f32.mrb[0].mxu0
          %v2292 = vadd.f32 0.0, %v2291
          %v2293 = vpop.f32.mrb[0].mxu0
          %2294 = vdwg.mxu0
          %2295 = vrot.lane.b32.xlu0 %v756, 28
          %v2296 = vpop.permute.xlu0 %2295
          %2297 = vrot.lane.b32.xlu0 %v761, 28
          %v2298 = vpop.permute.xlu0 %2297
          %2299 = vrot.lane.b32.xlu0 %v766, 28
          %v2300 = vpop.permute.xlu0 %2299
          %v2304 = vsel %vm604, %v1881, 0
          %v2307 = vsel %vm604, %v1882, 0
          %v2310 = vsel %vm604, %v1883, 0
          %v2312 = vsel %vm685, %v2300, 0
          %2314 = vmatprep.subr.mxu0 0.0
          %2315 = vmatpush1.msra.mxu0 %v2296
          %2316 = vmatprep.subr.mxu0 0.0
          %2317 = vmatpush1.msra.mxu0 %v2298
          %2318 = vmatprep.subr.mxu0 0.0
          %2319 = vmatpush1.msra.mxu0 %v2312
          %2320 = vmatprep.subr.mxu0 0.0
          %2321 = vmatpush1.msra.mxu0 0.0
          %2322 = vmatprep.subr.mxu0 0.0
          %2323 = vmatpush1.msra.mxu0 0.0
          %2324 = vmatprep.subr.mxu0 0.0
          %2325 = vmatpush1.msra.mxu0 0.0
          %2326 = vmatprep.subr.mxu0 0.0
          %2327 = vmatpush1.msra.mxu0 0.0
          %2328 = vmatprep.subr.mxu0 0.0
          %2329 = vmatpush1.msra.mxu0 0.0
          %2330 = vmatprep.subr.mxu0 0.0
          %2331 = vmatpush1.msra.mxu0 0.0
          %2332 = vmatprep.subr.mxu0 0.0
          %2333 = vmatpush1.msra.mxu0 0.0
          %2334 = vmatprep.subr.mxu0 0.0
          %2335 = vmatpush1.msra.mxu0 0.0
          %2336 = vmatprep.subr.mxu0 0.0
          %2337 = vmatpush1.msra.mxu0 0.0
          %2338 = vmatprep.subr.mxu0 0.0
          %2339 = vmatpush1.msra.mxu0 0.0
          %2340 = vmatprep.subr.mxu0 0.0
          %2341 = vmatpush1.msra.mxu0 0.0
          %2342 = vmatprep.subr.mxu0 0.0
          %2343 = vmatpush1.msra.mxu0 0.0
          %2344 = vmatprep.subr.mxu0 0.0
          %2345 = vmatpush1.msra.mxu0 0.0
          %2346 = vmatprep.subr.mxu0 0.0
          %2347 = vmatpush1.msra.mxu0 0.0
          %2348 = vmatprep.subr.mxu0 0.0
          %2349 = vmatpush1.msra.mxu0 0.0
          %2350 = vmatprep.subr.mxu0 0.0
          %2351 = vmatpush1.msra.mxu0 0.0
          %2352 = vmatprep.subr.mxu0 0.0
          %2353 = vmatpush1.msra.mxu0 0.0
          %2354 = vmatprep.subr.mxu0 0.0
          %2355 = vmatpush1.msra.mxu0 0.0
          %2356 = vmatprep.subr.mxu0 0.0
          %2357 = vmatpush1.msra.mxu0 0.0
          %2358 = vmatprep.subr.mxu0 0.0
          %2359 = vmatpush1.msra.mxu0 0.0
          %2360 = vmatprep.subr.mxu0 0.0
          %2361 = vmatpush1.msra.mxu0 0.0
          %2362 = vmatprep.subr.mxu0 0.0
          %2363 = vmatpush1.msra.mxu0 0.0
          %2364 = vmatprep.subr.mxu0 0.0
          %2365 = vmatpush1.msra.mxu0 0.0
          %2366 = vmatprep.subr.mxu0 0.0
          %2367 = vmatpush1.msra.mxu0 0.0
          %2368 = vmatprep.subr.mxu0 0.0
          %2369 = vmatpush1.msra.mxu0 0.0
          %2370 = vmatprep.subr.mxu0 0.0
          %2371 = vmatpush1.msra.mxu0 0.0
          %2372 = vmatprep.subr.mxu0 0.0
          %2373 = vmatpush1.msra.mxu0 0.0
          %2374 = vmatprep.subr.mxu0 0.0
          %2375 = vmatpush1.msra.mxu0 0.0
          %2376 = vmatprep.subr.mxu0 0.0
          %2377 = vmatpush1.msra.mxu0 0.0
          %2378 = vmatprep.mubr.f32.mxu0 0.0
          %2379 = vmatmul.mubr.f32.gmra.mrb[0].mxu0 %v2304
          %v2380 = vpop.f32.mrb[0].mxu0
          %v2381 = vadd.f32 0.0, %v2380
          %v2382 = vpop.f32.mrb[0].mxu0
          %2383 = vmatprep.mubr.f32.mxu0 0.0
          %2384 = vmatmul.mubr.f32.gmra.mrb[0].mxu0 %v2307
          %v2385 = vpop.f32.mrb[0].mxu0
          %v2386 = vadd.f32 0.0, %v2385
          %v2387 = vpop.f32.mrb[0].mxu0
          %2388 = vmatprep.mubr.f32.mxu0 0.0
          %2389 = vmatmul.mubr.f32.gmra.mrb[0].mxu0 %v2310
          %v2390 = vpop.f32.mrb[0].mxu0
          %v2391 = vadd.f32 0.0, %v2390
          %v2392 = vpop.f32.mrb[0].mxu0
          %2393 = vdwg.mxu0
          %v2396 = vrot.slane %v1883, 4
          %v2397 = vrot.slane %v1884, 4
          %v2398 = vsel %vm685, %v2396, %v2397
          %v2399 = vrot.slane %v1885, 4
          %v2400 = vsel %vm685, %v2397, %v2399
          %2401 = vrot.lane.b32.xlu0 %v756, 23
          %v2402 = vpop.permute.xlu0 %2401
          %2403 = vrot.lane.b32.xlu0 %v761, 23
          %v2404 = vpop.permute.xlu0 %2403
          %2405 = vrot.lane.b32.xlu0 %v766, 23
          %v2406 = vpop.permute.xlu0 %2405
          %v2409 = vsel %vm604, %v2398, 0
          %v2411 = vsel %vm604, %v2400, 0
          %v2413 = vsel %vm604, %v2399, 0
          %v2415 = vsel %vm685, %v2406, 0
          %2417 = vmatprep.subr.mxu0 0.0
          %2418 = vmatpush1.msra.mxu0 %v2402
          %2419 = vmatprep.subr.mxu0 0.0
          %2420 = vmatpush1.msra.mxu0 %v2404
          %2421 = vmatprep.subr.mxu0 0.0
          %2422 = vmatpush1.msra.mxu0 %v2415
          %2423 = vmatprep.subr.mxu0 0.0
          %2424 = vmatpush1.msra.mxu0 0.0
          %2425 = vmatprep.subr.mxu0 0.0
          %2426 = vmatpush1.msra.mxu0 0.0
          %2427 = vmatprep.subr.mxu0 0.0
          %2428 = vmatpush1.msra.mxu0 0.0
          %2429 = vmatprep.subr.mxu0 0.0
          %2430 = vmatpush1.msra.mxu0 0.0
          %2431 = vmatprep.subr.mxu0 0.0
          %2432 = vmatpush1.msra.mxu0 0.0
          %2433 = vmatprep.subr.mxu0 0.0
          %2434 = vmatpush1.msra.mxu0 0.0
          %2435 = vmatprep.subr.mxu0 0.0
          %2436 = vmatpush1.msra.mxu0 0.0
          %2437 = vmatprep.subr.mxu0 0.0
          %2438 = vmatpush1.msra.mxu0 0.0
          %2439 = vmatprep.subr.mxu0 0.0
          %2440 = vmatpush1.msra.mxu0 0.0
          %2441 = vmatprep.subr.mxu0 0.0
          %2442 = vmatpush1.msra.mxu0 0.0
          %2443 = vmatprep.subr.mxu0 0.0
          %2444 = vmatpush1.msra.mxu0 0.0
          %2445 = vmatprep.subr.mxu0 0.0
          %2446 = vmatpush1.msra.mxu0 0.0
          %2447 = vmatprep.subr.mxu0 0.0
          %2448 = vmatpush1.msra.mxu0 0.0
          %2449 = vmatprep.subr.mxu0 0.0
          %2450 = vmatpush1.msra.mxu0 0.0
          %2451 = vmatprep.subr.mxu0 0.0
          %2452 = vmatpush1.msra.mxu0 0.0
          %2453 = vmatprep.subr.mxu0 0.0
          %2454 = vmatpush1.msra.mxu0 0.0
          %2455 = vmatprep.subr.mxu0 0.0
          %2456 = vmatpush1.msra.mxu0 0.0
          %2457 = vmatprep.subr.mxu0 0.0
          %2458 = vmatpush1.msra.mxu0 0.0
          %2459 = vmatprep.subr.mxu0 0.0
          %2460 = vmatpush1.msra.mxu0 0.0
          %2461 = vmatprep.subr.mxu0 0.0
          %2462 = vmatpush1.msra.mxu0 0.0
          %2463 = vmatprep.subr.mxu0 0.0
          %2464 = vmatpush1.msra.mxu0 0.0
          %2465 = vmatprep.subr.mxu0 0.0
          %2466 = vmatpush1.msra.mxu0 0.0
          %2467 = vmatprep.subr.mxu0 0.0
          %2468 = vmatpush1.msra.mxu0 0.0
          %2469 = vmatprep.subr.mxu0 0.0
          %2470 = vmatpush1.msra.mxu0 0.0
          %2471 = vmatprep.subr.mxu0 0.0
          %2472 = vmatpush1.msra.mxu0 0.0
          %2473 = vmatprep.subr.mxu0 0.0
          %2474 = vmatpush1.msra.mxu0 0.0
          %2475 = vmatprep.subr.mxu0 0.0
          %2476 = vmatpush1.msra.mxu0 0.0
          %2477 = vmatprep.subr.mxu0 0.0
          %2478 = vmatpush1.msra.mxu0 0.0
          %2479 = vmatprep.subr.mxu0 0.0
          %2480 = vmatpush1.msra.mxu0 0.0
          %2481 = vmatprep.mubr.f32.mxu0 0.0
          %2482 = vmatmul.mubr.f32.gmra.mrb[0].mxu0 %v2409
          %v2483 = vpop.f32.mrb[0].mxu0
          %v2484 = vadd.f32 0.0, %v2483
          %v2485 = vpop.f32.mrb[0].mxu0
          %2486 = vmatprep.mubr.f32.mxu0 0.0
          %2487 = vmatmul.mubr.f32.gmra.mrb[0].mxu0 %v2411
          %v2488 = vpop.f32.mrb[0].mxu0
          %v2489 = vadd.f32 0.0, %v2488
          %v2490 = vpop.f32.mrb[0].mxu0
          %2491 = vmatprep.mubr.f32.mxu0 0.0
          %2492 = vmatmul.mubr.f32.gmra.mrb[0].mxu0 %v2413
          %v2493 = vpop.f32.mrb[0].mxu0
          %v2494 = vadd.f32 0.0, %v2493
          %v2495 = vpop.f32.mrb[0].mxu0
          %2496 = vdwg.mxu0
          %2497 = vrot.lane.b32.xlu0 %v756, 18
          %v2498 = vpop.permute.xlu0 %2497
          %2499 = vrot.lane.b32.xlu0 %v761, 18
          %v2500 = vpop.permute.xlu0 %2499
          %2501 = vrot.lane.b32.xlu0 %v766, 18
          %v2502 = vpop.permute.xlu0 %2501
          %v2506 = vsel %vm604, %v1886, 0
          %v2509 = vsel %vm604, %v1887, 0
          %v2512 = vsel %vm604, %v1888, 0
          %v2514 = vsel %vm685, %v2502, 0
          %2516 = vmatprep.subr.mxu0 0.0
          %2517 = vmatpush1.msra.mxu0 %v2498
          %2518 = vmatprep.subr.mxu0 0.0
          %2519 = vmatpush1.msra.mxu0 %v2500
          %2520 = vmatprep.subr.mxu0 0.0
          %2521 = vmatpush1.msra.mxu0 %v2514
          %2522 = vmatprep.subr.mxu0 0.0
          %2523 = vmatpush1.msra.mxu0 0.0
          %2524 = vmatprep.subr.mxu0 0.0
          %2525 = vmatpush1.msra.mxu0 0.0
          %2526 = vmatprep.subr.mxu0 0.0
          %2527 = vmatpush1.msra.mxu0 0.0
          %2528 = vmatprep.subr.mxu0 0.0
          %2529 = vmatpush1.msra.mxu0 0.0
          %2530 = vmatprep.subr.mxu0 0.0
          %2531 = vmatpush1.msra.mxu0 0.0
          %2532 = vmatprep.subr.mxu0 0.0
          %2533 = vmatpush1.msra.mxu0 0.0
          %2534 = vmatprep.subr.mxu0 0.0
          %2535 = vmatpush1.msra.mxu0 0.0
          %2536 = vmatprep.subr.mxu0 0.0
          %2537 = vmatpush1.msra.mxu0 0.0
          %2538 = vmatprep.subr.mxu0 0.0
          %2539 = vmatpush1.msra.mxu0 0.0
          %2540 = vmatprep.subr.mxu0 0.0
          %2541 = vmatpush1.msra.mxu0 0.0
          %2542 = vmatprep.subr.mxu0 0.0
          %2543 = vmatpush1.msra.mxu0 0.0
          %2544 = vmatprep.subr.mxu0 0.0
          %2545 = vmatpush1.msra.mxu0 0.0
          %2546 = vmatprep.subr.mxu0 0.0
          %2547 = vmatpush1.msra.mxu0 0.0
          %2548 = vmatprep.subr.mxu0 0.0
          %2549 = vmatpush1.msra.mxu0 0.0
          %2550 = vmatprep.subr.mxu0 0.0
          %2551 = vmatpush1.msra.mxu0 0.0
          %2552 = vmatprep.subr.mxu0 0.0
          %2553 = vmatpush1.msra.mxu0 0.0
          %2554 = vmatprep.subr.mxu0 0.0
          %2555 = vmatpush1.msra.mxu0 0.0
          %2556 = vmatprep.subr.mxu0 0.0
          %2557 = vmatpush1.msra.mxu0 0.0
          %2558 = vmatprep.subr.mxu0 0.0
          %2559 = vmatpush1.msra.mxu0 0.0
          %2560 = vmatprep.subr.mxu0 0.0
          %2561 = vmatpush1.msra.mxu0 0.0
          %2562 = vmatprep.subr.mxu0 0.0
          %2563 = vmatpush1.msra.mxu0 0.0
          %2564 = vmatprep.subr.mxu0 0.0
          %2565 = vmatpush1.msra.mxu0 0.0
          %2566 = vmatprep.subr.mxu0 0.0
          %2567 = vmatpush1.msra.mxu0 0.0
          %2568 = vmatprep.subr.mxu0 0.0
          %2569 = vmatpush1.msra.mxu0 0.0
          %2570 = vmatprep.subr.mxu0 0.0
          %2571 = vmatpush1.msra.mxu0 0.0
          %2572 = vmatprep.subr.mxu0 0.0
          %2573 = vmatpush1.msra.mxu0 0.0
          %2574 = vmatprep.subr.mxu0 0.0
          %2575 = vmatpush1.msra.mxu0 0.0
          %2576 = vmatprep.subr.mxu0 0.0
          %2577 = vmatpush1.msra.mxu0 0.0
          %2578 = vmatprep.subr.mxu0 0.0
          %2579 = vmatpush1.msra.mxu0 0.0
          %2580 = vmatprep.mubr.f32.mxu0 0.0
          %2581 = vmatmul.mubr.f32.gmra.mrb[0].mxu0 %v2506
          %v2582 = vpop.f32.mrb[0].mxu0
          %v2583 = vadd.f32 0.0, %v2582
          %v2584 = vpop.f32.mrb[0].mxu0
          %2585 = vmatprep.mubr.f32.mxu0 0.0
          %2586 = vmatmul.mubr.f32.gmra.mrb[0].mxu0 %v2509
          %v2587 = vpop.f32.mrb[0].mxu0
          %v2588 = vadd.f32 0.0, %v2587
          %v2589 = vpop.f32.mrb[0].mxu0
          %2590 = vmatprep.mubr.f32.mxu0 0.0
          %2591 = vmatmul.mubr.f32.gmra.mrb[0].mxu0 %v2512
          %v2592 = vpop.f32.mrb[0].mxu0
          %v2593 = vadd.f32 0.0, %v2592
          %v2594 = vpop.f32.mrb[0].mxu0
          %2595 = vdwg.mxu0
          %v2598 = vrot.slane %v1888, 4
          %v2599 = vrot.slane %v1889, 4
          %v2600 = vsel %vm685, %v2598, %v2599
          %v2601 = vrot.slane %v1890, 4
          %v2602 = vsel %vm685, %v2599, %v2601
          %2603 = vrot.lane.b32.xlu0 %v756, 13
          %v2604 = vpop.permute.xlu0 %2603
          %2605 = vrot.lane.b32.xlu0 %v761, 13
          %v2606 = vpop.permute.xlu0 %2605
          %2607 = vrot.lane.b32.xlu0 %v766, 13
          %v2608 = vpop.permute.xlu0 %2607
          %v2611 = vsel %vm604, %v2600, 0
          %v2613 = vsel %vm604, %v2602, 0
          %v2615 = vsel %vm604, %v2601, 0
          %v2617 = vsel %vm685, %v2608, 0
          %2619 = vmatprep.subr.mxu0 0.0
          %2620 = vmatpush1.msra.mxu0 %v2604
          %2621 = vmatprep.subr.mxu0 0.0
          %2622 = vmatpush1.msra.mxu0 %v2606
          %2623 = vmatprep.subr.mxu0 0.0
          %2624 = vmatpush1.msra.mxu0 %v2617
          %2625 = vmatprep.subr.mxu0 0.0
          %2626 = vmatpush1.msra.mxu0 0.0
          %2627 = vmatprep.subr.mxu0 0.0
          %2628 = vmatpush1.msra.mxu0 0.0
          %2629 = vmatprep.subr.mxu0 0.0
          %2630 = vmatpush1.msra.mxu0 0.0
          %2631 = vmatprep.subr.mxu0 0.0
          %2632 = vmatpush1.msra.mxu0 0.0
          %2633 = vmatprep.subr.mxu0 0.0
          %2634 = vmatpush1.msra.mxu0 0.0
          %2635 = vmatprep.subr.mxu0 0.0
          %2636 = vmatpush1.msra.mxu0 0.0
          %2637 = vmatprep.subr.mxu0 0.0
          %2638 = vmatpush1.msra.mxu0 0.0
          %2639 = vmatprep.subr.mxu0 0.0
          %2640 = vmatpush1.msra.mxu0 0.0
          %2641 = vmatprep.subr.mxu0 0.0
          %2642 = vmatpush1.msra.mxu0 0.0
          %2643 = vmatprep.subr.mxu0 0.0
          %2644 = vmatpush1.msra.mxu0 0.0
          %2645 = vmatprep.subr.mxu0 0.0
          %2646 = vmatpush1.msra.mxu0 0.0
          %2647 = vmatprep.subr.mxu0 0.0
          %2648 = vmatpush1.msra.mxu0 0.0
          %2649 = vmatprep.subr.mxu0 0.0
          %2650 = vmatpush1.msra.mxu0 0.0
          %2651 = vmatprep.subr.mxu0 0.0
          %2652 = vmatpush1.msra.mxu0 0.0
          %2653 = vmatprep.subr.mxu0 0.0
          %2654 = vmatpush1.msra.mxu0 0.0
          %2655 = vmatprep.subr.mxu0 0.0
          %2656 = vmatpush1.msra.mxu0 0.0
          %2657 = vmatprep.subr.mxu0 0.0
          %2658 = vmatpush1.msra.mxu0 0.0
          %2659 = vmatprep.subr.mxu0 0.0
          %2660 = vmatpush1.msra.mxu0 0.0
          %2661 = vmatprep.subr.mxu0 0.0
          %2662 = vmatpush1.msra.mxu0 0.0
          %2663 = vmatprep.subr.mxu0 0.0
          %2664 = vmatpush1.msra.mxu0 0.0
          %2665 = vmatprep.subr.mxu0 0.0
          %2666 = vmatpush1.msra.mxu0 0.0
          %2667 = vmatprep.subr.mxu0 0.0
          %2668 = vmatpush1.msra.mxu0 0.0
          %2669 = vmatprep.subr.mxu0 0.0
          %2670 = vmatpush1.msra.mxu0 0.0
          %2671 = vmatprep.subr.mxu0 0.0
          %2672 = vmatpush1.msra.mxu0 0.0
          %2673 = vmatprep.subr.mxu0 0.0
          %2674 = vmatpush1.msra.mxu0 0.0
          %2675 = vmatprep.subr.mxu0 0.0
          %2676 = vmatpush1.msra.mxu0 0.0
          %2677 = vmatprep.subr.mxu0 0.0
          %2678 = vmatpush1.msra.mxu0 0.0
          %2679 = vmatprep.subr.mxu0 0.0
          %2680 = vmatpush1.msra.mxu0 0.0
          %2681 = vmatprep.subr.mxu0 0.0
          %2682 = vmatpush1.msra.mxu0 0.0
          %2683 = vmatprep.mubr.f32.mxu0 0.0
          %2684 = vmatmul.mubr.f32.gmra.mrb[0].mxu0 %v2611
          %v2685 = vpop.f32.mrb[0].mxu0
          %v2686 = vadd.f32 0.0, %v2685
          %v2687 = vpop.f32.mrb[0].mxu0
          %2688 = vmatprep.mubr.f32.mxu0 0.0
          %2689 = vmatmul.mubr.f32.gmra.mrb[0].mxu0 %v2613
          %v2690 = vpop.f32.mrb[0].mxu0
          %v2691 = vadd.f32 0.0, %v2690
          %v2692 = vpop.f32.mrb[0].mxu0
          %2693 = vmatprep.mubr.f32.mxu0 0.0
          %2694 = vmatmul.mubr.f32.gmra.mrb[0].mxu0 %v2615
          %v2695 = vpop.f32.mrb[0].mxu0
          %v2696 = vadd.f32 0.0, %v2695
          %v2697 = vpop.f32.mrb[0].mxu0
          %2698 = vdwg.mxu0
          %2702 = vrot.lane.b32.xlu0 %v2080, 5
          %v2703 = vpop.permute.xlu0 %2702
          %2704 = vrot.lane.b32.xlu0 %v2085, 5
          %v2705 = vpop.permute.xlu0 %2704
          %2706 = vrot.lane.b32.xlu0 %v2090, 5
          %v2707 = vpop.permute.xlu0 %2706
          %2714 = vrot.lane.b32.xlu0 %v2179, 10
          %v2715 = vpop.permute.xlu0 %2714
          %2716 = vrot.lane.b32.xlu0 %v2184, 10
          %v2717 = vpop.permute.xlu0 %2716
          %2718 = vrot.lane.b32.xlu0 %v2189, 10
          %v2719 = vpop.permute.xlu0 %2718
          %2726 = vrot.lane.b32.xlu0 %v2282, 15
          %v2727 = vpop.permute.xlu0 %2726
          %2728 = vrot.lane.b32.xlu0 %v2287, 15
          %v2729 = vpop.permute.xlu0 %2728
          %2730 = vrot.lane.b32.xlu0 %v2292, 15
          %v2731 = vpop.permute.xlu0 %2730
          %v2735 = vsel %vm778, %v1977, %v2703
          %v2736 = vsel %vm778, %v1982, %v2705
          %v2737 = vsel %vm778, %v1987, %v2707
          %vm2738 = vcmask 80896
          %v2739 = vsel %vm2738, %v2735, %v2715
          %v2740 = vsel %vm2738, %v2736, %v2717
          %v2741 = vsel %vm2738, %v2737, %v2719
          %vm2742 = vcmask 121856
          %v2743 = vsel %vm2742, %v2739, %v2727
          %v2744 = vsel %vm2742, %v2740, %v2729
          %v2745 = vsel %vm2742, %v2741, %v2731
          %v2746 = vld [vmem:[%s5] sm:$0xff]
          %v2747 = vld [vmem:[%s5 + $0x8] sm:$0xff]
          %v2748 = vld [vmem:[%s5 + $0x10] sm:$0xf]
          %v2749 = vld [vmem:[%s6] sm:$0x1]
          %v2751 = vlaneseq
          %v2752 = vshrl.u32 %v2751, 7
          %v2753 = vsub.s32 0, %v2752
          %v2754 = vrot.slane %v2749, %v2753
          %v2757 = vsel %vm604, %v2743, 0
          %v2760 = vsel %vm604, %v2744, 0
          %v2763 = vsel %vm604, %v2745, 0
          %v2766 = vsel %vm685, %v2748, 0
          %2768 = vmatprep.subr.mxu0 0.0
          %2769 = vmatpush1.msra.mxu0 %v2746
          %2770 = vmatprep.subr.mxu0 0.0
          %2771 = vmatpush1.msra.mxu0 %v2747
          %2772 = vmatprep.subr.mxu0 0.0
          %2773 = vmatpush1.msra.mxu0 %v2766
          %2774 = vmatprep.subr.mxu0 0.0
          %2775 = vmatpush1.msra.mxu0 0.0
          %2776 = vmatprep.subr.mxu0 0.0
          %2777 = vmatpush1.msra.mxu0 0.0
          %2778 = vmatprep.subr.mxu0 0.0
          %2779 = vmatpush1.msra.mxu0 0.0
          %2780 = vmatprep.subr.mxu0 0.0
          %2781 = vmatpush1.msra.mxu0 0.0
          %2782 = vmatprep.subr.mxu0 0.0
          %2783 = vmatpush1.msra.mxu0 0.0
          %2784 = vmatprep.subr.mxu0 0.0
          %2785 = vmatpush1.msra.mxu0 0.0
          %2786 = vmatprep.subr.mxu0 0.0
          %2787 = vmatpush1.msra.mxu0 0.0
          %2788 = vmatprep.subr.mxu0 0.0
          %2789 = vmatpush1.msra.mxu0 0.0
          %2790 = vmatprep.subr.mxu0 0.0
          %2791 = vmatpush1.msra.mxu0 0.0
          %2792 = vmatprep.subr.mxu0 0.0
          %2793 = vmatpush1.msra.mxu0 0.0
          %2794 = vmatprep.subr.mxu0 0.0
          %2795 = vmatpush1.msra.mxu0 0.0
          %2796 = vmatprep.subr.mxu0 0.0
          %2797 = vmatpush1.msra.mxu0 0.0
          %2798 = vmatprep.subr.mxu0 0.0
          %2799 = vmatpush1.msra.mxu0 0.0
          %2800 = vmatprep.subr.mxu0 0.0
          %2801 = vmatpush1.msra.mxu0 0.0
          %2802 = vmatprep.subr.mxu0 0.0
          %2803 = vmatpush1.msra.mxu0 0.0
          %2804 = vmatprep.subr.mxu0 0.0
          %2805 = vmatpush1.msra.mxu0 0.0
          %2806 = vmatprep.subr.mxu0 0.0
          %2807 = vmatpush1.msra.mxu0 0.0
          %2808 = vmatprep.subr.mxu0 0.0
          %2809 = vmatpush1.msra.mxu0 0.0
          %2810 = vmatprep.subr.mxu0 0.0
          %2811 = vmatpush1.msra.mxu0 0.0
          %2812 = vmatprep.subr.mxu0 0.0
          %2813 = vmatpush1.msra.mxu0 0.0
          %2814 = vmatprep.subr.mxu0 0.0
          %2815 = vmatpush1.msra.mxu0 0.0
          %2816 = vmatprep.subr.mxu0 0.0
          %2817 = vmatpush1.msra.mxu0 0.0
          %2818 = vmatprep.subr.mxu0 0.0
          %2819 = vmatpush1.msra.mxu0 0.0
          %2820 = vmatprep.subr.mxu0 0.0
          %2821 = vmatpush1.msra.mxu0 0.0
          %2822 = vmatprep.subr.mxu0 0.0
          %2823 = vmatpush1.msra.mxu0 0.0
          %2824 = vmatprep.subr.mxu0 0.0
          %2825 = vmatpush1.msra.mxu0 0.0
          %2826 = vmatprep.subr.mxu0 0.0
          %2827 = vmatpush1.msra.mxu0 0.0
          %2828 = vmatprep.subr.mxu0 0.0
          %2829 = vmatpush1.msra.mxu0 0.0
          %2830 = vmatprep.subr.mxu0 0.0
          %2831 = vmatpush1.msra.mxu0 0.0
          %2832 = vmatprep.mubr.f32.mxu0 0.0
          %2833 = vmatmul.mubr.f32.gmra.mrb[0].mxu0 %v2757
          %v2834 = vpop.f32.mrb[0].mxu0
          %v2835 = vadd.f32 %v2754, %v2834
          %v2836 = vpop.f32.mrb[0].mxu0
          %2837 = vmatprep.mubr.f32.mxu0 0.0
          %2838 = vmatmul.mubr.f32.gmra.mrb[0].mxu0 %v2760
          %v2839 = vpop.f32.mrb[0].mxu0
          %v2840 = vadd.f32 %v2754, %v2839
          %v2841 = vpop.f32.mrb[0].mxu0
          %2842 = vmatprep.mubr.f32.mxu0 0.0
          %2843 = vmatmul.mubr.f32.gmra.mrb[0].mxu0 %v2763
          %v2844 = vpop.f32.mrb[0].mxu0
          %v2845 = vadd.f32 %v2754, %v2844
          %v2846 = vpop.f32.mrb[0].mxu0
          %2847 = vdwg.mxu0
          %2851 = vrot.lane.b32.xlu0 %v2484, 5
          %v2852 = vpop.permute.xlu0 %2851
          %2853 = vrot.lane.b32.xlu0 %v2489, 5
          %v2854 = vpop.permute.xlu0 %2853
          %2855 = vrot.lane.b32.xlu0 %v2494, 5
          %v2856 = vpop.permute.xlu0 %2855
          %2863 = vrot.lane.b32.xlu0 %v2583, 10
          %v2864 = vpop.permute.xlu0 %2863
          %2865 = vrot.lane.b32.xlu0 %v2588, 10
          %v2866 = vpop.permute.xlu0 %2865
          %2867 = vrot.lane.b32.xlu0 %v2593, 10
          %v2868 = vpop.permute.xlu0 %2867
          %2875 = vrot.lane.b32.xlu0 %v2686, 15
          %v2876 = vpop.permute.xlu0 %2875
          %2877 = vrot.lane.b32.xlu0 %v2691, 15
          %v2878 = vpop.permute.xlu0 %2877
          %2879 = vrot.lane.b32.xlu0 %v2696, 15
          %v2880 = vpop.permute.xlu0 %2879
          %v2884 = vsel %vm778, %v2381, %v2852
          %v2885 = vsel %vm778, %v2386, %v2854
          %v2886 = vsel %vm778, %v2391, %v2856
          %v2887 = vsel %vm2738, %v2884, %v2864
          %v2888 = vsel %vm2738, %v2885, %v2866
          %v2889 = vsel %vm2738, %v2886, %v2868
          %v2890 = vsel %vm2742, %v2887, %v2876
          %v2891 = vsel %vm2742, %v2888, %v2878
          %v2892 = vsel %vm2742, %v2889, %v2880
          %v2893 = vld [vmem:[%s7] sm:$0xff]
          %v2894 = vld [vmem:[%s7 + $0x8] sm:$0xff]
          %v2895 = vld [vmem:[%s7 + $0x10] sm:$0xf]
          %v2896 = vld [vmem:[%s8] sm:$0x1]
          %v2898 = vlaneseq
          %v2899 = vshrl.u32 %v2898, 7
          %v2900 = vsub.s32 0, %v2899
          %v2901 = vrot.slane %v2896, %v2900
          %v2904 = vsel %vm604, %v2890, 0
          %v2907 = vsel %vm604, %v2891, 0
          %v2910 = vsel %vm604, %v2892, 0
          %v2913 = vsel %vm685, %v2895, 0
          %2915 = vmatprep.subr.mxu0 0.0
          %2916 = vmatpush1.msra.mxu0 %v2893
          %2917 = vmatprep.subr.mxu0 0.0
          %2918 = vmatpush1.msra.mxu0 %v2894
          %2919 = vmatprep.subr.mxu0 0.0
          %2920 = vmatpush1.msra.mxu0 %v2913
          %2921 = vmatprep.subr.mxu0 0.0
          %2922 = vmatpush1.msra.mxu0 0.0
          %2923 = vmatprep.subr.mxu0 0.0
          %2924 = vmatpush1.msra.mxu0 0.0
          %2925 = vmatprep.subr.mxu0 0.0
          %2926 = vmatpush1.msra.mxu0 0.0
          %2927 = vmatprep.subr.mxu0 0.0
          %2928 = vmatpush1.msra.mxu0 0.0
          %2929 = vmatprep.subr.mxu0 0.0
          %2930 = vmatpush1.msra.mxu0 0.0
          %2931 = vmatprep.subr.mxu0 0.0
          %2932 = vmatpush1.msra.mxu0 0.0
          %2933 = vmatprep.subr.mxu0 0.0
          %2934 = vmatpush1.msra.mxu0 0.0
          %2935 = vmatprep.subr.mxu0 0.0
          %2936 = vmatpush1.msra.mxu0 0.0
          %2937 = vmatprep.subr.mxu0 0.0
          %2938 = vmatpush1.msra.mxu0 0.0
          %2939 = vmatprep.subr.mxu0 0.0
          %2940 = vmatpush1.msra.mxu0 0.0
          %2941 = vmatprep.subr.mxu0 0.0
          %2942 = vmatpush1.msra.mxu0 0.0
          %2943 = vmatprep.subr.mxu0 0.0
          %2944 = vmatpush1.msra.mxu0 0.0
          %2945 = vmatprep.subr.mxu0 0.0
          %2946 = vmatpush1.msra.mxu0 0.0
          %2947 = vmatprep.subr.mxu0 0.0
          %2948 = vmatpush1.msra.mxu0 0.0
          %2949 = vmatprep.subr.mxu0 0.0
          %2950 = vmatpush1.msra.mxu0 0.0
          %2951 = vmatprep.subr.mxu0 0.0
          %2952 = vmatpush1.msra.mxu0 0.0
          %2953 = vmatprep.subr.mxu0 0.0
          %2954 = vmatpush1.msra.mxu0 0.0
          %2955 = vmatprep.subr.mxu0 0.0
          %2956 = vmatpush1.msra.mxu0 0.0
          %2957 = vmatprep.subr.mxu0 0.0
          %2958 = vmatpush1.msra.mxu0 0.0
          %2959 = vmatprep.subr.mxu0 0.0
          %2960 = vmatpush1.msra.mxu0 0.0
          %2961 = vmatprep.subr.mxu0 0.0
          %2962 = vmatpush1.msra.mxu0 0.0
          %2963 = vmatprep.subr.mxu0 0.0
          %2964 = vmatpush1.msra.mxu0 0.0
          %2965 = vmatprep.subr.mxu0 0.0
          %2966 = vmatpush1.msra.mxu0 0.0
          %2967 = vmatprep.subr.mxu0 0.0
          %2968 = vmatpush1.msra.mxu0 0.0
          %2969 = vmatprep.subr.mxu0 0.0
          %2970 = vmatpush1.msra.mxu0 0.0
          %2971 = vmatprep.subr.mxu0 0.0
          %2972 = vmatpush1.msra.mxu0 0.0
          %2973 = vmatprep.subr.mxu0 0.0
          %2974 = vmatpush1.msra.mxu0 0.0
          %2975 = vmatprep.subr.mxu0 0.0
          %2976 = vmatpush1.msra.mxu0 0.0
          %2977 = vmatprep.subr.mxu0 0.0
          %2978 = vmatpush1.msra.mxu0 0.0
          %2979 = vmatprep.mubr.f32.mxu0 0.0
          %2980 = vmatmul.mubr.f32.gmra.mrb[0].mxu0 %v2904
          %v2981 = vpop.f32.mrb[0].mxu0
          %v2982 = vadd.f32 %v2901, %v2981
          %v2983 = vpop.f32.mrb[0].mxu0
          %2984 = vmatprep.mubr.f32.mxu0 0.0
          %2985 = vmatmul.mubr.f32.gmra.mrb[0].mxu0 %v2907
          %v2986 = vpop.f32.mrb[0].mxu0
          %v2987 = vadd.f32 %v2901, %v2986
          %v2988 = vpop.f32.mrb[0].mxu0
          %2989 = vmatprep.mubr.f32.mxu0 0.0
          %2990 = vmatmul.mubr.f32.gmra.mrb[0].mxu0 %v2910
          %v2991 = vpop.f32.mrb[0].mxu0
          %v2992 = vadd.f32 %v2901, %v2991
          %v2993 = vpop.f32.mrb[0].mxu0
          %2994 = vdwg.mxu0
          %v2995 = vlaneseq
          %v2996 = vshrl.u32 %v2995, 7
          %v2997 = vadd.s32 %v2996, 8
          %v2998 = vadd.s32 %v2996, 16
          %v2999 = vlaneseq
          %v3000 = vand.u32 %v2999, 127
          %vm3001 = vcmp.eq.s32.totalorder %v2996, %v3000
          %vm3002 = vcmp.eq.s32.totalorder %v2997, %v3000
          %vm3003 = vcmp.eq.s32.totalorder %v2998, %v3000
          %v3004 = vsel %vm3001, 1.0, 0.0
          %v3005 = vsel %vm3002, 1.0, 0.0
          %v3006 = vsel %vm3003, 1.0, 0.0
          %v3008 = vsel %vm604, %v2835, 0
          %v3011 = vsel %vm604, %v2840, 0
          %v3014 = vsel %vm604, %v2845, 0
          %v3017 = vsel %vm685, %v2992, 0
          %3019 = vmatprep.subr.mxu0 0.0
          %3020 = vmatpush1.msra.mxu0 %v2982
          %3021 = vmatprep.subr.mxu0 0.0
          %3022 = vmatpush1.msra.mxu0 %v2987
          %3023 = vmatprep.subr.mxu0 0.0
          %3024 = vmatpush1.msra.mxu0 %v3017
          %3025 = vmatprep.subr.mxu0 0.0
          %3026 = vmatpush1.msra.mxu0 0.0
          %3027 = vmatprep.subr.mxu0 0.0
          %3028 = vmatpush1.msra.mxu0 0.0
          %3029 = vmatprep.subr.mxu0 0.0
          %3030 = vmatpush1.msra.mxu0 0.0
          %3031 = vmatprep.subr.mxu0 0.0
          %3032 = vmatpush1.msra.mxu0 0.0
          %3033 = vmatprep.subr.mxu0 0.0
          %3034 = vmatpush1.msra.mxu0 0.0
          %3035 = vmatprep.subr.mxu0 0.0
          %3036 = vmatpush1.msra.mxu0 0.0
          %3037 = vmatprep.subr.mxu0 0.0
          %3038 = vmatpush1.msra.mxu0 0.0
          %3039 = vmatprep.subr.mxu0 0.0
          %3040 = vmatpush1.msra.mxu0 0.0
          %3041 = vmatprep.subr.mxu0 0.0
          %3042 = vmatpush1.msra.mxu0 0.0
          %3043 = vmatprep.subr.mxu0 0.0
          %3044 = vmatpush1.msra.mxu0 0.0
          %3045 = vmatprep.subr.mxu0 0.0
          %3046 = vmatpush1.msra.mxu0 0.0
          %3047 = vmatprep.subr.mxu0 0.0
          %3048 = vmatpush1.msra.mxu0 0.0
          %3049 = vmatprep.subr.mxu0 0.0
          %3050 = vmatpush1.msra.mxu0 0.0
          %3051 = vmatprep.subr.mxu0 0.0
          %3052 = vmatpush1.msra.mxu0 0.0
          %3053 = vmatprep.subr.mxu0 0.0
          %3054 = vmatpush1.msra.mxu0 0.0
          %3055 = vmatprep.subr.mxu0 0.0
          %3056 = vmatpush1.msra.mxu0 0.0
          %3057 = vmatprep.subr.mxu0 0.0
          %3058 = vmatpush1.msra.mxu0 0.0
          %3059 = vmatprep.subr.mxu0 0.0
          %3060 = vmatpush1.msra.mxu0 0.0
          %3061 = vmatprep.subr.mxu0 0.0
          %3062 = vmatpush1.msra.mxu0 0.0
          %3063 = vmatprep.subr.mxu0 0.0
          %3064 = vmatpush1.msra.mxu0 0.0
          %3065 = vmatprep.subr.mxu0 0.0
          %3066 = vmatpush1.msra.mxu0 0.0
          %3067 = vmatprep.subr.mxu0 0.0
          %3068 = vmatpush1.msra.mxu0 0.0
          %3069 = vmatprep.subr.mxu0 0.0
          %3070 = vmatpush1.msra.mxu0 0.0
          %3071 = vmatprep.subr.mxu0 0.0
          %3072 = vmatpush1.msra.mxu0 0.0
          %3073 = vmatprep.subr.mxu0 0.0
          %3074 = vmatpush1.msra.mxu0 0.0
          %3075 = vmatprep.subr.mxu0 0.0
          %3076 = vmatpush1.msra.mxu0 0.0
          %3077 = vmatprep.subr.mxu0 0.0
          %3078 = vmatpush1.msra.mxu0 0.0
          %3079 = vmatprep.subr.mxu0 0.0
          %3080 = vmatpush1.msra.mxu0 0.0
          %3081 = vmatprep.subr.mxu0 0.0
          %3082 = vmatpush1.msra.mxu0 0.0
          %3083 = vmatprep.mubr.f32.mxu0 0.0
          %3084 = vmatmul.mubr.f32.gmra.mrb[0].mxu0 %v3008
          %v3085 = vpop.f32.mrb[0].mxu0
          %v3086 = vadd.f32 %v3004, %v3085
          %v3087 = vpop.f32.mrb[0].mxu0
          %3088 = vmatprep.mubr.f32.mxu0 0.0
          %3089 = vmatmul.mubr.f32.gmra.mrb[0].mxu0 %v3011
          %v3090 = vpop.f32.mrb[0].mxu0
          %v3091 = vadd.f32 %v3005, %v3090
          %v3092 = vpop.f32.mrb[0].mxu0
          %3093 = vmatprep.mubr.f32.mxu0 0.0
          %3094 = vmatmul.mubr.f32.gmra.mrb[0].mxu0 %v3014
          %v3095 = vpop.f32.mrb[0].mxu0
          %v3096 = vadd.f32 %v3006, %v3095
          %v3097 = vpop.f32.mrb[0].mxu0
          %3098 = vdwg.mxu0
          %v3099 = vsel %vm604, %v3086, 0.0
          %3100 = vadd.xlane.f32.xlu0 %v3099
          %v3101 = vpop.xlane.xlu0 %3100
          %v3102 = vsel %vm604, %v3091, 0.0
          %3103 = vadd.xlane.f32.xlu0 %v3102
          %v3104 = vpop.xlane.xlu0 %3103
          %v3105 = vsel %vm611, %v3096, 0.0
          %3106 = vadd.xlane.f32.xlu0 %v3105
          %v3107 = vpop.xlane.xlu0 %3106
          %v3108 = vrsqrt.pop %v3101
          %v3109 = vrsqrt.pop %v3104
          %v3110 = vrsqrt.pop %v3107
          %v3111 = vmul.f32 %v3086, %v3108
          %v3112 = vmul.f32 %v3091, %v3109
          %v3113 = vmul.f32 %v3096, %v3110
          %3114 = vxpose.xlu0.b32.start [1/16] %v3108, 128
          %3115 = vxpose.xlu0.b32.cont [2/16] %v3109, 128
          %3116 = vxpose.xlu0.b32.cont [3/16] %v3110, 128
          %3117 = vxpose.xlu0.b32.cont [4/16] 0.0, 128
          %3118 = vxpose.xlu0.b32.cont [5/16] 0.0, 128
          %3119 = vxpose.xlu0.b32.cont [6/16] 0.0, 128
          %3120 = vxpose.xlu0.b32.cont [7/16] 0.0, 128
          %3121 = vxpose.xlu0.b32.cont [8/16] 0.0, 128
          %3122 = vxpose.xlu0.b32.cont [9/16] 0.0, 128
          %3123 = vxpose.xlu0.b32.cont [10/16] 0.0, 128
          %3124 = vxpose.xlu0.b32.cont [11/16] 0.0, 128
          %3125 = vxpose.xlu0.b32.cont [12/16] 0.0, 128
          %3126 = vxpose.xlu0.b32.cont [13/16] 0.0, 128
          %3127 = vxpose.xlu0.b32.cont [14/16] 0.0, 128
          %3128 = vxpose.xlu0.b32.cont [15/16] 0.0, 128
          %3129 = vxpose.xlu0.b32.end [16/16] 0.0, 128
          %v3130 = vpop.trf.xlu0
          %v3131 = vpop.trf.xlu0
          %v3132 = vpop.trf.xlu0
          %v3133 = vpop.trf.xlu0
          %v3134 = vpop.trf.xlu0
          %v3135 = vpop.trf.xlu0
          %v3136 = vpop.trf.xlu0
          %v3137 = vpop.trf.xlu0
          %v3138 = vpop.trf.xlu0
          %v3139 = vpop.trf.xlu0
          %v3140 = vpop.trf.xlu0
          %v3141 = vpop.trf.xlu0
          %v3142 = vpop.trf.xlu0
          %v3143 = vpop.trf.xlu0
          %v3144 = vpop.trf.xlu0
          %v3145 = vpop.trf.xlu0
          %v3146 = vlaneseq
          %v3147 = vshrl.u32 %v3146, 7
          %v3148 = vsub.s32 0, %v3147
          %v3149 = vrot.slane %v3130, %v3148
          %v3150 = vmul.f32 %v3111, %v3149
          %v3151 = vmul.f32 %v3112, %v3149
          %v3152 = vmul.f32 %v3113, %v3149
          %3153 = vxpose.xlu0.b32.start [1/16] %v3150, 128
          %3154 = vxpose.xlu0.b32.cont [2/16] %v3151, 128
          %3155 = vxpose.xlu0.b32.cont [3/16] %v3152, 128
          %3156 = vxpose.xlu0.b32.cont [4/16] 0.0, 128
          %3157 = vxpose.xlu0.b32.cont [5/16] 0.0, 128
          %3158 = vxpose.xlu0.b32.cont [6/16] 0.0, 128
          %3159 = vxpose.xlu0.b32.cont [7/16] 0.0, 128
          %3160 = vxpose.xlu0.b32.cont [8/16] 0.0, 128
          %3161 = vxpose.xlu0.b32.cont [9/16] 0.0, 128
          %3162 = vxpose.xlu0.b32.cont [10/16] 0.0, 128
          %3163 = vxpose.xlu0.b32.cont [11/16] 0.0, 128
          %3164 = vxpose.xlu0.b32.cont [12/16] 0.0, 128
          %3165 = vxpose.xlu0.b32.cont [13/16] 0.0, 128
          %3166 = vxpose.xlu0.b32.cont [14/16] 0.0, 128
          %3167 = vxpose.xlu0.b32.cont [15/16] 0.0, 128
          %3168 = vxpose.xlu0.b32.end [16/16] 0.0, 128
          %v3169 = vpop.trf.xlu0
          %v3170 = vpop.trf.xlu0
          %v3171 = vpop.trf.xlu0
          %v3172 = vpop.trf.xlu0
          %v3173 = vpop.trf.xlu0
          %v3174 = vpop.trf.xlu0
          %v3175 = vpop.trf.xlu0
          %v3176 = vpop.trf.xlu0
          %v3177 = vpop.trf.xlu0
          %v3178 = vpop.trf.xlu0
          %v3179 = vpop.trf.xlu0
          %v3180 = vpop.trf.xlu0
          %v3181 = vpop.trf.xlu0
          %v3182 = vpop.trf.xlu0
          %v3183 = vpop.trf.xlu0
          %v3184 = vpop.trf.xlu0
          %3185 = vst.msk [vmem:[#allocation2] sm:$0xff] %vm604, %v3169
          %3186 = vst.msk [vmem:[#allocation2 + $0x8] sm:$0xff] %vm604, %v3170
          %3187 = vst.msk [vmem:[#allocation2 + $0x10] sm:$0xf] %vm611, %v3171
          %v3188 = vld [vmem:[%s9] sm:$0xff]
          %v3189 = vld [vmem:[%s9 + $0x8] sm:$0xf]
          %v3190 = vld [vmem:[%s9 + $0xc] sm:$0xff]
          %v3191 = vld [vmem:[%s9 + $0x14] sm:$0xf]
          %v3192 = vld [vmem:[%s9 + $0x18] sm:$0x33]
          %v3193 = vld [vmem:[%s9 + $0x20] sm:$0x3]
          %v3194 = vunpack.c.l.bf16 %v3188
          %v3195 = vunpack.c.h.bf16 %v3188
          %v3196 = vunpack.c.l.bf16 %v3189
          %v3197 = vunpack.c.l.bf16 %v3190
          %v3198 = vunpack.c.h.bf16 %v3190
          %v3199 = vunpack.c.l.bf16 %v3191
          %v3200 = vunpack.c.l.bf16 %v3192
          %v3201 = vunpack.c.h.bf16 %v3192
          %v3202 = vunpack.c.l.bf16 %v3193
          %v3204 = vsel %vm604, %v3169, 0
          %v3207 = vsel %vm604, %v3170, 0
          %v3210 = vsel %vm604, %v3171, 0
          %v3213 = vsel %vm685, %v3200, 0
          %v3216 = vsel %vm685, %v3201, 0
          %v3219 = vsel %vm685, %v3202, 0
          %3221 = vmatprep.subr.mxu0 %v3195
          %3222 = vmatpush1.msra.mxu0 %v3194
          %3223 = vmatprep.subr.mxu0 %v3198
          %3224 = vmatpush1.msra.mxu0 %v3197
          %3225 = vmatprep.subr.mxu0 %v3216
          %3226 = vmatpush1.msra.mxu0 %v3213
          %3227 = vmatprep.subr.mxu0 0.0
          %3228 = vmatpush1.msra.mxu0 0.0
          %3229 = vmatprep.subr.mxu0 0.0
          %3230 = vmatpush1.msra.mxu0 0.0
          %3231 = vmatprep.subr.mxu0 0.0
          %3232 = vmatpush1.msra.mxu0 0.0
          %3233 = vmatprep.subr.mxu0 0.0
          %3234 = vmatpush1.msra.mxu0 0.0
          %3235 = vmatprep.subr.mxu0 0.0
          %3236 = vmatpush1.msra.mxu0 0.0
          %3237 = vmatprep.subr.mxu0 0.0
          %3238 = vmatpush1.msra.mxu0 0.0
          %3239 = vmatprep.subr.mxu0 0.0
          %3240 = vmatpush1.msra.mxu0 0.0
          %3241 = vmatprep.subr.mxu0 0.0
          %3242 = vmatpush1.msra.mxu0 0.0
          %3243 = vmatprep.subr.mxu0 0.0
          %3244 = vmatpush1.msra.mxu0 0.0
          %3245 = vmatprep.subr.mxu0 0.0
          %3246 = vmatpush1.msra.mxu0 0.0
          %3247 = vmatprep.subr.mxu0 0.0
          %3248 = vmatpush1.msra.mxu0 0.0
          %3249 = vmatprep.subr.mxu0 0.0
          %3250 = vmatpush1.msra.mxu0 0.0
          %3251 = vmatprep.subr.mxu0 0.0
          %3252 = vmatpush1.msra.mxu0 0.0
          %3253 = vmatprep.subr.mxu0 0.0
          %3254 = vmatpush1.msra.mxu0 0.0
          %3255 = vmatprep.subr.mxu0 0.0
          %3256 = vmatpush1.msra.mxu0 0.0
          %3257 = vmatprep.subr.mxu0 0.0
          %3258 = vmatpush1.msra.mxu0 0.0
          %3259 = vmatprep.subr.mxu0 0.0
          %3260 = vmatpush1.msra.mxu0 0.0
          %3261 = vmatprep.subr.mxu0 0.0
          %3262 = vmatpush1.msra.mxu0 0.0
          %3263 = vmatprep.subr.mxu0 0.0
          %3264 = vmatpush1.msra.mxu0 0.0
          %3265 = vmatprep.subr.mxu0 0.0
          %3266 = vmatpush1.msra.mxu0 0.0
          %3267 = vmatprep.subr.mxu0 0.0
          %3268 = vmatpush1.msra.mxu0 0.0
          %3269 = vmatprep.subr.mxu0 0.0
          %3270 = vmatpush1.msra.mxu0 0.0
          %3271 = vmatprep.subr.mxu0 0.0
          %3272 = vmatpush1.msra.mxu0 0.0
          %3273 = vmatprep.subr.mxu0 0.0
          %3274 = vmatpush1.msra.mxu0 0.0
          %3275 = vmatprep.subr.mxu0 0.0
          %3276 = vmatpush1.msra.mxu0 0.0
          %3277 = vmatprep.subr.mxu0 0.0
          %3278 = vmatpush1.msra.mxu0 0.0
          %3279 = vmatprep.subr.mxu0 0.0
          %3280 = vmatpush1.msra.mxu0 0.0
          %3281 = vmatprep.subr.mxu0 0.0
          %3282 = vmatpush1.msra.mxu0 0.0
          %3283 = vmatprep.subr.mxu0 0.0
          %3284 = vmatpush1.msra.mxu0 0.0
          %3285 = vmatprep.mubr.f32.mxu0 0.0
          %3286 = vmatmul.mubr.f32.gmra.mrb[0].mxu0 %v3204
          %v3287 = vpop.f32.mrb[0].mxu0
          %v3288 = vadd.f32 0.0, %v3287
          %v3289 = vpop.f32.mrb[0].mxu0
          %v3290 = vadd.f32 0.0, %v3289
          %3291 = vmatprep.mubr.f32.mxu0 0.0
          %3292 = vmatmul.mubr.f32.gmra.mrb[0].mxu0 %v3207
          %v3293 = vpop.f32.mrb[0].mxu0
          %v3294 = vadd.f32 0.0, %v3293
          %v3295 = vpop.f32.mrb[0].mxu0
          %v3296 = vadd.f32 0.0, %v3295
          %3297 = vmatprep.mubr.f32.mxu0 0.0
          %3298 = vmatmul.mubr.f32.gmra.mrb[0].mxu0 %v3210
          %v3299 = vpop.f32.mrb[0].mxu0
          %v3300 = vadd.f32 0.0, %v3299
          %v3301 = vpop.f32.mrb[0].mxu0
          %v3302 = vadd.f32 0.0, %v3301
          %3303 = vdwg.mxu0
          %3304 = vmatprep.subr.mxu0 0.0
          %3305 = vmatpush1.msra.mxu0 %v3196
          %3306 = vmatprep.subr.mxu0 0.0
          %3307 = vmatpush1.msra.mxu0 %v3199
          %3308 = vmatprep.subr.mxu0 0.0
          %3309 = vmatpush1.msra.mxu0 %v3219
          %3310 = vmatprep.subr.mxu0 0.0
          %3311 = vmatpush1.msra.mxu0 0.0
          %3312 = vmatprep.subr.mxu0 0.0
          %3313 = vmatpush1.msra.mxu0 0.0
          %3314 = vmatprep.subr.mxu0 0.0
          %3315 = vmatpush1.msra.mxu0 0.0
          %3316 = vmatprep.subr.mxu0 0.0
          %3317 = vmatpush1.msra.mxu0 0.0
          %3318 = vmatprep.subr.mxu0 0.0
          %3319 = vmatpush1.msra.mxu0 0.0
          %3320 = vmatprep.subr.mxu0 0.0
          %3321 = vmatpush1.msra.mxu0 0.0
          %3322 = vmatprep.subr.mxu0 0.0
          %3323 = vmatpush1.msra.mxu0 0.0
          %3324 = vmatprep.subr.mxu0 0.0
          %3325 = vmatpush1.msra.mxu0 0.0
          %3326 = vmatprep.subr.mxu0 0.0
          %3327 = vmatpush1.msra.mxu0 0.0
          %3328 = vmatprep.subr.mxu0 0.0
          %3329 = vmatpush1.msra.mxu0 0.0
          %3330 = vmatprep.subr.mxu0 0.0
          %3331 = vmatpush1.msra.mxu0 0.0
          %3332 = vmatprep.subr.mxu0 0.0
          %3333 = vmatpush1.msra.mxu0 0.0
          %3334 = vmatprep.subr.mxu0 0.0
          %3335 = vmatpush1.msra.mxu0 0.0
          %3336 = vmatprep.subr.mxu0 0.0
          %3337 = vmatpush1.msra.mxu0 0.0
          %3338 = vmatprep.subr.mxu0 0.0
          %3339 = vmatpush1.msra.mxu0 0.0
          %3340 = vmatprep.subr.mxu0 0.0
          %3341 = vmatpush1.msra.mxu0 0.0
          %3342 = vmatprep.subr.mxu0 0.0
          %3343 = vmatpush1.msra.mxu0 0.0
          %3344 = vmatprep.subr.mxu0 0.0
          %3345 = vmatpush1.msra.mxu0 0.0
          %3346 = vmatprep.subr.mxu0 0.0
          %3347 = vmatpush1.msra.mxu0 0.0
          %3348 = vmatprep.subr.mxu0 0.0
          %3349 = vmatpush1.msra.mxu0 0.0
          %3350 = vmatprep.subr.mxu0 0.0
          %3351 = vmatpush1.msra.mxu0 0.0
          %3352 = vmatprep.subr.mxu0 0.0
          %3353 = vmatpush1.msra.mxu0 0.0
          %3354 = vmatprep.subr.mxu0 0.0
          %3355 = vmatpush1.msra.mxu0 0.0
          %3356 = vmatprep.subr.mxu0 0.0
          %3357 = vmatpush1.msra.mxu0 0.0
          %3358 = vmatprep.subr.mxu0 0.0
          %3359 = vmatpush1.msra.mxu0 0.0
          %3360 = vmatprep.subr.mxu0 0.0
          %3361 = vmatpush1.msra.mxu0 0.0
          %3362 = vmatprep.subr.mxu0 0.0
          %3363 = vmatpush1.msra.mxu0 0.0
          %3364 = vmatprep.subr.mxu0 0.0
          %3365 = vmatpush1.msra.mxu0 0.0
          %3366 = vmatprep.subr.mxu0 0.0
          %3367 = vmatpush1.msra.mxu0 0.0
          %3368 = vmatprep.mubr.f32.mxu0 0.0
          %3369 = vmatmul.mubr.f32.gmra.mrb[0].mxu0 %v3204
          %v3370 = vpop.f32.mrb[0].mxu0
          %v3371 = vadd.f32 0.0, %v3370
          %v3372 = vpop.f32.mrb[0].mxu0
          %3373 = vmatprep.mubr.f32.mxu0 0.0
          %3374 = vmatmul.mubr.f32.gmra.mrb[0].mxu0 %v3207
          %v3375 = vpop.f32.mrb[0].mxu0
          %v3376 = vadd.f32 0.0, %v3375
          %v3377 = vpop.f32.mrb[0].mxu0
          %3378 = vmatprep.mubr.f32.mxu0 0.0
          %3379 = vmatmul.mubr.f32.gmra.mrb[0].mxu0 %v3210
          %v3380 = vpop.f32.mrb[0].mxu0
          %v3381 = vadd.f32 0.0, %v3380
          %v3382 = vpop.f32.mrb[0].mxu0
          %3383 = vdwg.mxu0
          %v3384 = vpack.c.bf16 %v3294, %v3288
          %v3385 = vpack.c.bf16 %v3296, %v3290
          %v3386 = vpack.c.bf16 %v3376, %v3371
          %v3387 = vpack.c.bf16 %v3300, %v3300
          %v3388 = vpack.c.bf16 %v3302, %v3302
          %v3389 = vpack.c.bf16 %v3381, %v3381
          %v3396 = vunpack.c.l.b16 %v3384
          %v3397 = vunpack.c.l.b16 %v3385
          %v3398 = vunpack.c.l.b16 %v3386
          %v3399 = vunpack.c.h.b16 %v3384
          %v3400 = vunpack.c.h.b16 %v3385
          %v3401 = vunpack.c.h.b16 %v3386
          %v3402 = vunpack.c.l.b16 %v3387
          %v3403 = vunpack.c.l.b16 %v3388
          %v3404 = vunpack.c.l.b16 %v3389
          %v3405 = vpack.c.b16 %v3397, %v3396
          %v3406 = vpack.c.b16 %v3398, %v3398
          %v3407 = vpack.c.b16 %v3400, %v3399
          %v3408 = vpack.c.b16 %v3401, %v3401
          %v3409 = vpack.c.b16 %v3403, %v3402
          %v3410 = vpack.c.b16 %v3404, %v3404
          %3417 = vst [vmem:[#allocation3] sm:$0xff] %v3405
          %vm3418 = vcmask 355328
          %3419 = vst.msk [vmem:[#allocation3 + $0x8] sm:$0xf] %vm3418, %v3406
          %3420 = vst [vmem:[#allocation3 + $0xc] sm:$0xff] %v3407
          %3421 = vst.msk [vmem:[#allocation3 + $0x14] sm:$0xf] %vm3418, %v3408
          %3422 = vst [vmem:[#allocation3 + $0x18] sm:$0x33] %v3409
          %vm3423 = vcmask 353280
          %3424 = vst.msk [vmem:[#allocation3 + $0x20] sm:$0x3] %vm3423, %v3410
          %3425 = vst [vmem:[#allocation4] sm:$0xff] 0.0
          %3426 = vst [vmem:[#allocation4 + $0x8] sm:$0xff] 0.0
          %vm3427 = vcmask 359424
          %3428 = vst.msk [vmem:[#allocation4 + $0x10] sm:$0xff] %vm3427, 0.0
          %3429 = vst [vmem:[#allocation4 + $0x18] sm:$0xff] 0.0
          %3430 = vst [vmem:[#allocation4 + $0x20] sm:$0xff] 0.0
          %3431 = vst.msk [vmem:[#allocation4 + $0x28] sm:$0xff] %vm3427, 0.0
          %3432 = vst [vmem:[#allocation4 + $0x30] sm:$0xf] 0.0
          %3433 = vst [vmem:[#allocation4 + $0x38] sm:$0xf] 0.0
          %3434 = vst.msk [vmem:[#allocation4 + $0x40] sm:$0xf] %vm3418, 0.0
        $region95: #{gatn_forward.1} parent=86 // pred_fallthru
          _
        %v3435 = vld [vmem:[#allocation3] sm:$0xff]
        %v3436 = vld [vmem:[#allocation3 + $0x8] sm:$0xf]
        %v3437 = vld [vmem:[#allocation3 + $0xc] sm:$0xff]
        %v3438 = vld [vmem:[#allocation3 + $0x14] sm:$0xf]
        %v3439 = vld [vmem:[#allocation3 + $0x18] sm:$0x33]
        %v3440 = vld [vmem:[#allocation3 + $0x20] sm:$0x3]
        %v3441 = vld [vmem:[%s548] sm:$0xff]
        %v3442 = vld [vmem:[%s548 + $0x8] sm:$0xff]
        %v3443 = vld [vmem:[%s548 + $0x10] sm:$0xff]
        %v3444 = vld [vmem:[%s548 + $0x18] sm:$0xff]
        %v3445 = vld [vmem:[%s548 + $0x20] sm:$0xff]
        %v3446 = vld [vmem:[%s548 + $0x28] sm:$0xff]
        %v3447 = vld [vmem:[%s548 + $0x30] sm:$0xff]
        %v3448 = vld [vmem:[%s548 + $0x38] sm:$0xff]
        %v3449 = vld [vmem:[%s548 + $0x40] sm:$0xff]
        %v3450 = vld [vmem:[%s548 + $0x48] sm:$0xff]
        %v3451 = vld [vmem:[%s548 + $0x50] sm:$0xff]
        %v3452 = vld [vmem:[%s548 + $0x58] sm:$0xff]
        %v3453 = vld [vmem:[%s548 + $0x60] sm:$0xff]
        %v3454 = vld [vmem:[%s548 + $0x68] sm:$0xff]
        %v3455 = vld [vmem:[%s548 + $0x70] sm:$0xff]
        %v3456 = vld [vmem:[%s548 + $0x78] sm:$0xff]
        %v3457 = vld [vmem:[%s548 + $0x80] sm:$0xff]
        %v3458 = vld [vmem:[%s548 + $0x88] sm:$0xff]
        %v3459 = vld [vmem:[%s548 + $0x90] sm:$0xff]
        %v3460 = vld [vmem:[%s548 + $0x98] sm:$0xff]
        %v3461 = vld [vmem:[%s548 + $0xa0] sm:$0xff]
        %v3462 = vld [vmem:[%s548 + $0xa8] sm:$0xff]
        %v3463 = vld [vmem:[%s548 + $0xb0] sm:$0xff]
        %v3464 = vld [vmem:[%s548 + $0xb8] sm:$0xff]
        %v3465 = vld [vmem:[%s548 + $0xc0] sm:$0xff]
        %v3466 = vld [vmem:[%s548 + $0xc8] sm:$0xff]
        %v3467 = vld [vmem:[%s548 + $0xd0] sm:$0xff]
        %v3468 = vld [vmem:[%s548 + $0xd8] sm:$0xff]
        %v3469 = vld [vmem:[%s548 + $0xe0] sm:$0xff]
        %v3470 = vld [vmem:[%s548 + $0xe8] sm:$0xff]
        %v3471 = vld [vmem:[%s548 + $0xf0] sm:$0xff]
        %v3472 = vld [vmem:[%s548 + $0xf8] sm:$0xff]
        %v3473 = vld [vmem:[%s548 + $0x100] sm:$0xff]
        %v3474 = vld [vmem:[%s548 + $0x108] sm:$0xff]
        %v3475 = vld [vmem:[%s548 + $0x110] sm:$0xff]
        %v3476 = vld [vmem:[%s548 + $0x118] sm:$0xff]
        %v3477 = vld [vmem:[%s548 + $0x120] sm:$0xff]
        %v3478 = vld [vmem:[%s548 + $0x128] sm:$0xff]
        %v3479 = vld [vmem:[%s548 + $0x130] sm:$0xff]
        %v3480 = vld [vmem:[%s548 + $0x138] sm:$0xff]
        %v3481 = vld [vmem:[%s548 + $0x140] sm:$0xff]
        %v3482 = vld [vmem:[%s548 + $0x148] sm:$0xff]
        %v3483 = vld [vmem:[%s548 + $0x150] sm:$0xff]
        %v3484 = vld [vmem:[%s548 + $0x158] sm:$0xff]
        %v3485 = vld [vmem:[%s548 + $0x160] sm:$0xff]
        %v3486 = vld [vmem:[%s548 + $0x168] sm:$0xff]
        %v3487 = vld [vmem:[%s548 + $0x170] sm:$0xff]
        %v3488 = vld [vmem:[%s548 + $0x178] sm:$0xff]
        %v3489 = vld [vmem:[%s548 + $0x180] sm:$0xff]
        %v3490 = vld [vmem:[%s548 + $0x188] sm:$0xff]
        %v3491 = vld [vmem:[%s548 + $0x190] sm:$0xff]
        %v3492 = vld [vmem:[%s548 + $0x198] sm:$0xff]
        %v3493 = vld [vmem:[%s548 + $0x1a0] sm:$0xff]
        %v3494 = vld [vmem:[%s548 + $0x1a8] sm:$0xff]
        %v3495 = vld [vmem:[%s548 + $0x1b0] sm:$0xff]
        %v3496 = vld [vmem:[%s548 + $0x1b8] sm:$0xff]
        %v3497 = vld [vmem:[%s548 + $0x1c0] sm:$0xff]
        %v3498 = vld [vmem:[%s548 + $0x1c8] sm:$0xff]
        %v3499 = vld [vmem:[%s548 + $0x1d0] sm:$0xff]
        %v3500 = vld [vmem:[%s548 + $0x1d8] sm:$0xff]
        %v3501 = vld [vmem:[%s548 + $0x1e0] sm:$0xff]
        %v3502 = vld [vmem:[%s548 + $0x1e8] sm:$0xff]
        %v3503 = vld [vmem:[%s548 + $0x1f0] sm:$0xff]
        %v3504 = vld [vmem:[%s548 + $0x1f8] sm:$0xff]
        %v3505 = vld [vmem:[%s548 + $0x200] sm:$0xff]
        %v3506 = vld [vmem:[%s548 + $0x208] sm:$0xff]
        %v3507 = vld [vmem:[%s548 + $0x210] sm:$0xff]
        %v3508 = vld [vmem:[%s548 + $0x218] sm:$0xff]
        %v3509 = vld [vmem:[%s548 + $0x220] sm:$0xff]
        %v3510 = vld [vmem:[%s548 + $0x228] sm:$0xff]
        %v3511 = vld [vmem:[%s548 + $0x230] sm:$0xff]
        %v3512 = vld [vmem:[%s548 + $0x238] sm:$0xff]
        %v3513 = vld [vmem:[%s548 + $0x240] sm:$0xff]
        %v3514 = vld [vmem:[%s548 + $0x248] sm:$0xff]
        %v3515 = vld [vmem:[%s548 + $0x250] sm:$0x33]
        %v3516 = vld [vmem:[%s548 + $0x258] sm:$0x33]
        %v3523 = vunpack.c.l.b16 %v3435
        %v3524 = vunpack.c.h.b16 %v3435
        %v3525 = vunpack.c.l.b16 %v3436
        %v3526 = vunpack.c.l.b16 %v3437
        %v3527 = vunpack.c.h.b16 %v3437
        %v3528 = vunpack.c.l.b16 %v3438
        %v3529 = vunpack.c.l.b16 %v3439
        %v3530 = vunpack.c.h.b16 %v3439
        %v3531 = vunpack.c.l.b16 %v3440
        %v3532 = vpack.c.b16 %v3526, %v3523
        %v3533 = vpack.c.b16 %v3527, %v3524
        %v3534 = vpack.c.b16 %v3528, %v3525
        %v3535 = vpack.c.b16 %v3529, %v3529
        %v3536 = vpack.c.b16 %v3530, %v3530
        %v3537 = vpack.c.b16 %v3531, %v3531
        %v3618 = vunpack.c.l.b16 %v3441
        %v3619 = vunpack.c.h.b16 %v3441
        %v3620 = vunpack.c.l.b16 %v3442
        %v3621 = vunpack.c.h.b16 %v3442
        %v3622 = vunpack.c.l.b16 %v3443
        %v3623 = vunpack.c.h.b16 %v3443
        %v3624 = vunpack.c.l.b16 %v3444
        %v3625 = vunpack.c.h.b16 %v3444
        %v3626 = vunpack.c.l.b16 %v3445
        %v3627 = vunpack.c.h.b16 %v3445
        %v3628 = vunpack.c.l.b16 %v3446
        %v3629 = vunpack.c.h.b16 %v3446
        %v3630 = vunpack.c.l.b16 %v3447
        %v3631 = vunpack.c.h.b16 %v3447
        %v3632 = vunpack.c.l.b16 %v3448
        %v3633 = vunpack.c.h.b16 %v3448
        %v3634 = vunpack.c.l.b16 %v3449
        %v3635 = vunpack.c.h.b16 %v3449
        %v3636 = vunpack.c.l.b16 %v3450
        %v3637 = vunpack.c.h.b16 %v3450
        %v3638 = vunpack.c.l.b16 %v3451
        %v3639 = vunpack.c.h.b16 %v3451
        %v3640 = vunpack.c.l.b16 %v3452
        %v3641 = vunpack.c.h.b16 %v3452
        %v3642 = vunpack.c.l.b16 %v3453
        %v3643 = vunpack.c.h.b16 %v3453
        %v3644 = vunpack.c.l.b16 %v3454
        %v3645 = vunpack.c.h.b16 %v3454
        %v3646 = vunpack.c.l.b16 %v3455
        %v3647 = vunpack.c.h.b16 %v3455
        %v3648 = vunpack.c.l.b16 %v3456
        %v3649 = vunpack.c.h.b16 %v3456
        %v3650 = vunpack.c.l.b16 %v3457
        %v3651 = vunpack.c.h.b16 %v3457
        %v3652 = vunpack.c.l.b16 %v3458
        %v3653 = vunpack.c.h.b16 %v3458
        %v3654 = vunpack.c.l.b16 %v3459
        %v3655 = vunpack.c.h.b16 %v3459
        %v3656 = vunpack.c.l.b16 %v3460
        %v3657 = vunpack.c.h.b16 %v3460
        %v3658 = vunpack.c.l.b16 %v3461
        %v3659 = vunpack.c.h.b16 %v3461
        %v3660 = vunpack.c.l.b16 %v3462
        %v3661 = vunpack.c.h.b16 %v3462
        %v3662 = vunpack.c.l.b16 %v3463
        %v3663 = vunpack.c.h.b16 %v3463
        %v3664 = vunpack.c.l.b16 %v3464
        %v3665 = vunpack.c.h.b16 %v3464
        %v3666 = vunpack.c.l.b16 %v3465
        %v3667 = vunpack.c.h.b16 %v3465
        %v3668 = vunpack.c.l.b16 %v3466
        %v3669 = vunpack.c.h.b16 %v3466
        %v3670 = vunpack.c.l.b16 %v3467
        %v3671 = vunpack.c.h.b16 %v3467
        %v3672 = vunpack.c.l.b16 %v3468
        %v3673 = vunpack.c.h.b16 %v3468
        %v3674 = vunpack.c.l.b16 %v3469
        %v3675 = vunpack.c.h.b16 %v3469
        %v3676 = vunpack.c.l.b16 %v3470
        %v3677 = vunpack.c.h.b16 %v3470
        %v3678 = vunpack.c.l.b16 %v3471
        %v3679 = vunpack.c.h.b16 %v3471
        %v3680 = vunpack.c.l.b16 %v3472
        %v3681 = vunpack.c.h.b16 %v3472
        %v3682 = vunpack.c.l.b16 %v3473
        %v3683 = vunpack.c.h.b16 %v3473
        %v3684 = vunpack.c.l.b16 %v3474
        %v3685 = vunpack.c.h.b16 %v3474
        %v3686 = vunpack.c.l.b16 %v3475
        %v3687 = vunpack.c.h.b16 %v3475
        %v3688 = vunpack.c.l.b16 %v3476
        %v3689 = vunpack.c.h.b16 %v3476
        %v3690 = vunpack.c.l.b16 %v3477
        %v3691 = vunpack.c.h.b16 %v3477
        %v3692 = vunpack.c.l.b16 %v3478
        %v3693 = vunpack.c.h.b16 %v3478
        %v3694 = vunpack.c.l.b16 %v3479
        %v3695 = vunpack.c.h.b16 %v3479
        %v3696 = vunpack.c.l.b16 %v3480
        %v3697 = vunpack.c.h.b16 %v3480
        %v3698 = vunpack.c.l.b16 %v3481
        %v3699 = vunpack.c.h.b16 %v3481
        %v3700 = vunpack.c.l.b16 %v3482
        %v3701 = vunpack.c.h.b16 %v3482
        %v3702 = vunpack.c.l.b16 %v3483
        %v3703 = vunpack.c.h.b16 %v3483
        %v3704 = vunpack.c.l.b16 %v3484
        %v3705 = vunpack.c.h.b16 %v3484
        %v3706 = vunpack.c.l.b16 %v3485
        %v3707 = vunpack.c.h.b16 %v3485
        %v3708 = vunpack.c.l.b16 %v3486
        %v3709 = vunpack.c.h.b16 %v3486
        %v3710 = vunpack.c.l.b16 %v3487
        %v3711 = vunpack.c.h.b16 %v3487
        %v3712 = vunpack.c.l.b16 %v3488
        %v3713 = vunpack.c.h.b16 %v3488
        %v3714 = vunpack.c.l.b16 %v3489
        %v3715 = vunpack.c.h.b16 %v3489
        %v3716 = vunpack.c.l.b16 %v3490
        %v3717 = vunpack.c.h.b16 %v3490
        %v3718 = vunpack.c.l.b16 %v3491
        %v3719 = vunpack.c.h.b16 %v3491
        %v3720 = vunpack.c.l.b16 %v3492
        %v3721 = vunpack.c.h.b16 %v3492
        %v3722 = vunpack.c.l.b16 %v3493
        %v3723 = vunpack.c.h.b16 %v3493
        %v3724 = vunpack.c.l.b16 %v3494
        %v3725 = vunpack.c.h.b16 %v3494
        %v3726 = vunpack.c.l.b16 %v3495
        %v3727 = vunpack.c.h.b16 %v3495
        %v3728 = vunpack.c.l.b16 %v3496
        %v3729 = vunpack.c.h.b16 %v3496
        %v3730 = vunpack.c.l.b16 %v3497
        %v3731 = vunpack.c.h.b16 %v3497
        %v3732 = vunpack.c.l.b16 %v3498
        %v3733 = vunpack.c.h.b16 %v3498
        %v3734 = vunpack.c.l.b16 %v3499
        %v3735 = vunpack.c.h.b16 %v3499
        %v3736 = vunpack.c.l.b16 %v3500
        %v3737 = vunpack.c.h.b16 %v3500
        %v3738 = vunpack.c.l.b16 %v3501
        %v3739 = vunpack.c.h.b16 %v3501
        %v3740 = vunpack.c.l.b16 %v3502
        %v3741 = vunpack.c.h.b16 %v3502
        %v3742 = vunpack.c.l.b16 %v3503
        %v3743 = vunpack.c.h.b16 %v3503
        %v3744 = vunpack.c.l.b16 %v3504
        %v3745 = vunpack.c.h.b16 %v3504
        %v3746 = vunpack.c.l.b16 %v3505
        %v3747 = vunpack.c.h.b16 %v3505
        %v3748 = vunpack.c.l.b16 %v3506
        %v3749 = vunpack.c.h.b16 %v3506
        %v3750 = vunpack.c.l.b16 %v3507
        %v3751 = vunpack.c.h.b16 %v3507
        %v3752 = vunpack.c.l.b16 %v3508
        %v3753 = vunpack.c.h.b16 %v3508
        %v3754 = vunpack.c.l.b16 %v3509
        %v3755 = vunpack.c.h.b16 %v3509
        %v3756 = vunpack.c.l.b16 %v3510
        %v3757 = vunpack.c.h.b16 %v3510
        %v3758 = vunpack.c.l.b16 %v3511
        %v3759 = vunpack.c.h.b16 %v3511
        %v3760 = vunpack.c.l.b16 %v3512
        %v3761 = vunpack.c.h.b16 %v3512
        %v3762 = vunpack.c.l.b16 %v3513
        %v3763 = vunpack.c.h.b16 %v3513
        %v3764 = vunpack.c.l.b16 %v3514
        %v3765 = vunpack.c.h.b16 %v3514
        %v3766 = vunpack.c.l.b16 %v3515
        %v3767 = vunpack.c.h.b16 %v3515
        %v3768 = vunpack.c.l.b16 %v3516
        %v3769 = vunpack.c.h.b16 %v3516
        %v3770 = vpack.c.b16 %v3622, %v3618
        %v3771 = vpack.c.b16 %v3623, %v3619
        %v3772 = vpack.c.b16 %v3624, %v3620
        %v3773 = vpack.c.b16 %v3625, %v3621
        %v3774 = vpack.c.b16 %v3630, %v3626
        %v3775 = vpack.c.b16 %v3631, %v3627
        %v3776 = vpack.c.b16 %v3632, %v3628
        %v3777 = vpack.c.b16 %v3633, %v3629
        %v3778 = vpack.c.b16 %v3638, %v3634
        %v3779 = vpack.c.b16 %v3639, %v3635
        %v3780 = vpack.c.b16 %v3640, %v3636
        %v3781 = vpack.c.b16 %v3641, %v3637
        %v3782 = vpack.c.b16 %v3646, %v3642
        %v3783 = vpack.c.b16 %v3647, %v3643
        %v3784 = vpack.c.b16 %v3648, %v3644
        %v3785 = vpack.c.b16 %v3649, %v3645
        %v3786 = vpack.c.b16 %v3654, %v3650
        %v3787 = vpack.c.b16 %v3655, %v3651
        %v3788 = vpack.c.b16 %v3656, %v3652
        %v3789 = vpack.c.b16 %v3657, %v3653
        %v3790 = vpack.c.b16 %v3662, %v3658
        %v3791 = vpack.c.b16 %v3663, %v3659
        %v3792 = vpack.c.b16 %v3664, %v3660
        %v3793 = vpack.c.b16 %v3665, %v3661
        %v3794 = vpack.c.b16 %v3670, %v3666
        %v3795 = vpack.c.b16 %v3671, %v3667
        %v3796 = vpack.c.b16 %v3672, %v3668
        %v3797 = vpack.c.b16 %v3673, %v3669
        %v3798 = vpack.c.b16 %v3678, %v3674
        %v3799 = vpack.c.b16 %v3679, %v3675
        %v3800 = vpack.c.b16 %v3680, %v3676
        %v3801 = vpack.c.b16 %v3681, %v3677
        %v3802 = vpack.c.b16 %v3686, %v3682
        %v3803 = vpack.c.b16 %v3687, %v3683
        %v3804 = vpack.c.b16 %v3688, %v3684
        %v3805 = vpack.c.b16 %v3689, %v3685
        %v3806 = vpack.c.b16 %v3694, %v3690
        %v3807 = vpack.c.b16 %v3695, %v3691
        %v3808 = vpack.c.b16 %v3696, %v3692
        %v3809 = vpack.c.b16 %v3697, %v3693
        %v3810 = vpack.c.b16 %v3702, %v3698
        %v3811 = vpack.c.b16 %v3703, %v3699
        %v3812 = vpack.c.b16 %v3704, %v3700
        %v3813 = vpack.c.b16 %v3705, %v3701
        %v3814 = vpack.c.b16 %v3710, %v3706
        %v3815 = vpack.c.b16 %v3711, %v3707
        %v3816 = vpack.c.b16 %v3712, %v3708
        %v3817 = vpack.c.b16 %v3713, %v3709
        %v3818 = vpack.c.b16 %v3718, %v3714
        %v3819 = vpack.c.b16 %v3719, %v3715
        %v3820 = vpack.c.b16 %v3720, %v3716
        %v3821 = vpack.c.b16 %v3721, %v3717
        %v3822 = vpack.c.b16 %v3726, %v3722
        %v3823 = vpack.c.b16 %v3727, %v3723
        %v3824 = vpack.c.b16 %v3728, %v3724
        %v3825 = vpack.c.b16 %v3729, %v3725
        %v3826 = vpack.c.b16 %v3734, %v3730
        %v3827 = vpack.c.b16 %v3735, %v3731
        %v3828 = vpack.c.b16 %v3736, %v3732
        %v3829 = vpack.c.b16 %v3737, %v3733
        %v3830 = vpack.c.b16 %v3742, %v3738
        %v3831 = vpack.c.b16 %v3743, %v3739
        %v3832 = vpack.c.b16 %v3744, %v3740
        %v3833 = vpack.c.b16 %v3745, %v3741
        %v3834 = vpack.c.b16 %v3750, %v3746
        %v3835 = vpack.c.b16 %v3751, %v3747
        %v3836 = vpack.c.b16 %v3752, %v3748
        %v3837 = vpack.c.b16 %v3753, %v3749
        %v3838 = vpack.c.b16 %v3758, %v3754
        %v3839 = vpack.c.b16 %v3759, %v3755
        %v3840 = vpack.c.b16 %v3760, %v3756
        %v3841 = vpack.c.b16 %v3761, %v3757
        %v3842 = vpack.c.b16 %v3766, %v3762
        %v3843 = vpack.c.b16 %v3767, %v3763
        %v3844 = vpack.c.b16 %v3768, %v3764
        %v3845 = vpack.c.b16 %v3769, %v3765
        %vm3918 = vcmask 359424
        %v3920 = vsel %vm3918, %v3534, 0
        %v3923 = vsel %vm3918, %v3537, 0
        %vm3925 = vcmask 1045504
        %v3927 = vsel %vm3925, %v3842, 0
        %v3930 = vsel %vm3925, %v3843, 0
        %v3933 = vsel %vm3925, %v3844, 0
        %v3936 = vsel %vm3925, %v3845, 0
        %3938 = vmatprep.subr.bf16.mxu0 %v3771
        %3939 = vmatpush1.bf16.msra.mxu0 %v3770
        %3940 = vmatprep.subr.bf16.mxu0 %v3775
        %3941 = vmatpush1.bf16.msra.mxu0 %v3774
        %3942 = vmatprep.subr.bf16.mxu0 %v3779
        %3943 = vmatpush1.bf16.msra.mxu0 %v3778
        %3944 = vmatprep.subr.bf16.mxu0 %v3783
        %3945 = vmatpush1.bf16.msra.mxu0 %v3782
        %3946 = vmatprep.subr.bf16.mxu0 %v3787
        %3947 = vmatpush1.bf16.msra.mxu0 %v3786
        %3948 = vmatprep.subr.bf16.mxu0 %v3791
        %3949 = vmatpush1.bf16.msra.mxu0 %v3790
        %3950 = vmatprep.subr.bf16.mxu0 %v3795
        %3951 = vmatpush1.bf16.msra.mxu0 %v3794
        %3952 = vmatprep.subr.bf16.mxu0 %v3799
        %3953 = vmatpush1.bf16.msra.mxu0 %v3798
        %3954 = vmatprep.subr.bf16.mxu0 %v3803
        %3955 = vmatpush1.bf16.msra.mxu0 %v3802
        %3956 = vmatprep.subr.bf16.mxu0 %v3807
        %3957 = vmatpush1.bf16.msra.mxu0 %v3806
        %3958 = vmatprep.subr.bf16.mxu0 %v3811
        %3959 = vmatpush1.bf16.msra.mxu0 %v3810
        %3960 = vmatprep.subr.bf16.mxu0 %v3815
        %3961 = vmatpush1.bf16.msra.mxu0 %v3814
        %3962 = vmatprep.subr.bf16.mxu0 %v3819
        %3963 = vmatpush1.bf16.msra.mxu0 %v3818
        %3964 = vmatprep.subr.bf16.mxu0 %v3823
        %3965 = vmatpush1.bf16.msra.mxu0 %v3822
        %3966 = vmatprep.subr.bf16.mxu0 %v3827
        %3967 = vmatpush1.bf16.msra.mxu0 %v3826
        %3968 = vmatprep.subr.bf16.mxu0 %v3831
        %3969 = vmatpush1.bf16.msra.mxu0 %v3830
        %3970 = vmatprep.mubr.bf16.mxu0 %v3533
        %3971 = vmatmul.mubr.bf16.gmra.mrb[0].mxu0 %v3532
        %v3972 = vpop.f32.mrb[0].mxu0
        %v3973 = vadd.f32 0.0, %v3972
        %v3974 = vpop.f32.mrb[0].mxu0
        %v3975 = vadd.f32 0.0, %v3974
        %v3976 = vpop.f32.mrb[0].mxu0
        %v3977 = vadd.f32 0.0, %v3976
        %v3978 = vpop.f32.mrb[0].mxu0
        %v3979 = vadd.f32 0.0, %v3978
        %3980 = vmatprep.mubr.bf16.mxu0 %v3536
        %3981 = vmatmul.mubr.bf16.gmra.mrb[0].mxu0 %v3535
        %v3982 = vpop.f32.mrb[0].mxu0
        %v3983 = vadd.f32 0.0, %v3982
        %v3984 = vpop.f32.mrb[0].mxu0
        %v3985 = vadd.f32 0.0, %v3984
        %v3986 = vpop.f32.mrb[0].mxu0
        %v3987 = vpop.f32.mrb[0].mxu0
        %3988 = vdwg.mxu0
        %3989 = vmatprep.subr.bf16.mxu0 %v3835
        %3990 = vmatpush1.bf16.msra.mxu0 %v3834
        %3991 = vmatprep.subr.bf16.mxu0 %v3839
        %3992 = vmatpush1.bf16.msra.mxu0 %v3838
        %3993 = vmatprep.subr.bf16.mxu0 %v3930
        %3994 = vmatpush1.bf16.msra.mxu0 %v3927
        %3995 = vmatprep.subr.bf16.mxu0 0
        %3996 = vmatpush1.bf16.msra.mxu0 0
        %3997 = vmatprep.subr.bf16.mxu0 0
        %3998 = vmatpush1.bf16.msra.mxu0 0
        %3999 = vmatprep.subr.bf16.mxu0 0
        %4000 = vmatpush1.bf16.msra.mxu0 0
        %4001 = vmatprep.subr.bf16.mxu0 0
        %4002 = vmatpush1.bf16.msra.mxu0 0
        %4003 = vmatprep.subr.bf16.mxu0 0
        %4004 = vmatpush1.bf16.msra.mxu0 0
        %4005 = vmatprep.subr.bf16.mxu0 0
        %4006 = vmatpush1.bf16.msra.mxu0 0
        %4007 = vmatprep.subr.bf16.mxu0 0
        %4008 = vmatpush1.bf16.msra.mxu0 0
        %4009 = vmatprep.subr.bf16.mxu0 0
        %4010 = vmatpush1.bf16.msra.mxu0 0
        %4011 = vmatprep.subr.bf16.mxu0 0
        %4012 = vmatpush1.bf16.msra.mxu0 0
        %4013 = vmatprep.subr.bf16.mxu0 0
        %4014 = vmatpush1.bf16.msra.mxu0 0
        %4015 = vmatprep.subr.bf16.mxu0 0
        %4016 = vmatpush1.bf16.msra.mxu0 0
        %4017 = vmatprep.subr.bf16.mxu0 0
        %4018 = vmatpush1.bf16.msra.mxu0 0
        %4019 = vmatprep.subr.bf16.mxu0 0
        %4020 = vmatpush1.bf16.msra.mxu0 0
        %4021 = vmatprep.mubr.bf16.mxu0 0
        %4022 = vmatmul.mubr.bf16.gmra.mrb[0].mxu0 %v3920
        %v4023 = vpop.f32.mrb[0].mxu0
        %v4024 = vadd.f32 %v3973, %v4023
        %v4025 = vpop.f32.mrb[0].mxu0
        %v4026 = vadd.f32 %v3975, %v4025
        %v4027 = vpop.f32.mrb[0].mxu0
        %v4028 = vadd.f32 %v3977, %v4027
        %v4029 = vpop.f32.mrb[0].mxu0
        %v4030 = vadd.f32 %v3979, %v4029
        %4031 = vmatprep.mubr.bf16.mxu0 0
        %4032 = vmatmul.mubr.bf16.gmra.mrb[0].mxu0 %v3923
        %v4033 = vpop.f32.mrb[0].mxu0
        %v4034 = vadd.f32 %v3983, %v4033
        %v4035 = vpop.f32.mrb[0].mxu0
        %v4036 = vadd.f32 %v3985, %v4035
        %v4037 = vpop.f32.mrb[0].mxu0
        %v4038 = vpop.f32.mrb[0].mxu0
        %4039 = vdwg.mxu0
        %4040 = vmatprep.subr.bf16.mxu0 %v3773
        %4041 = vmatpush1.bf16.msra.mxu0 %v3772
        %4042 = vmatprep.subr.bf16.mxu0 %v3777
        %4043 = vmatpush1.bf16.msra.mxu0 %v3776
        %4044 = vmatprep.subr.bf16.mxu0 %v3781
        %4045 = vmatpush1.bf16.msra.mxu0 %v3780
        %4046 = vmatprep.subr.bf16.mxu0 %v3785
        %4047 = vmatpush1.bf16.msra.mxu0 %v3784
        %4048 = vmatprep.subr.bf16.mxu0 %v3789
        %4049 = vmatpush1.bf16.msra.mxu0 %v3788
        %4050 = vmatprep.subr.bf16.mxu0 %v3793
        %4051 = vmatpush1.bf16.msra.mxu0 %v3792
        %4052 = vmatprep.subr.bf16.mxu0 %v3797
        %4053 = vmatpush1.bf16.msra.mxu0 %v3796
        %4054 = vmatprep.subr.bf16.mxu0 %v3801
        %4055 = vmatpush1.bf16.msra.mxu0 %v3800
        %4056 = vmatprep.subr.bf16.mxu0 %v3805
        %4057 = vmatpush1.bf16.msra.mxu0 %v3804
        %4058 = vmatprep.subr.bf16.mxu0 %v3809
        %4059 = vmatpush1.bf16.msra.mxu0 %v3808
        %4060 = vmatprep.subr.bf16.mxu0 %v3813
        %4061 = vmatpush1.bf16.msra.mxu0 %v3812
        %4062 = vmatprep.subr.bf16.mxu0 %v3817
        %4063 = vmatpush1.bf16.msra.mxu0 %v3816
        %4064 = vmatprep.subr.bf16.mxu0 %v3821
        %4065 = vmatpush1.bf16.msra.mxu0 %v3820
        %4066 = vmatprep.subr.bf16.mxu0 %v3825
        %4067 = vmatpush1.bf16.msra.mxu0 %v3824
        %4068 = vmatprep.subr.bf16.mxu0 %v3829
        %4069 = vmatpush1.bf16.msra.mxu0 %v3828
        %4070 = vmatprep.subr.bf16.mxu0 %v3833
        %4071 = vmatpush1.bf16.msra.mxu0 %v3832
        %4072 = vmatprep.mubr.bf16.mxu0 %v3533
        %4073 = vmatmul.mubr.bf16.gmra.mrb[0].mxu0 %v3532
        %v4074 = vpop.f32.mrb[0].mxu0
        %v4075 = vadd.f32 0.0, %v4074
        %v4076 = vpop.f32.mrb[0].mxu0
        %v4077 = vadd.f32 0.0, %v4076
        %v4078 = vpop.f32.mrb[0].mxu0
        %v4079 = vadd.f32 0.0, %v4078
        %v4080 = vpop.f32.mrb[0].mxu0
        %v4081 = vadd.f32 0.0, %v4080
        %4082 = vmatprep.mubr.bf16.mxu0 %v3536
        %4083 = vmatmul.mubr.bf16.gmra.mrb[0].mxu0 %v3535
        %v4084 = vpop.f32.mrb[0].mxu0
        %v4085 = vadd.f32 0.0, %v4084
        %v4086 = vpop.f32.mrb[0].mxu0
        %v4087 = vadd.f32 0.0, %v4086
        %v4088 = vpop.f32.mrb[0].mxu0
        %v4089 = vpop.f32.mrb[0].mxu0
        %4090 = vdwg.mxu0
        %4091 = vmatprep.subr.bf16.mxu0 %v3837
        %4092 = vmatpush1.bf16.msra.mxu0 %v3836
        %4093 = vmatprep.subr.bf16.mxu0 %v3841
        %4094 = vmatpush1.bf16.msra.mxu0 %v3840
        %4095 = vmatprep.subr.bf16.mxu0 %v3936
        %4096 = vmatpush1.bf16.msra.mxu0 %v3933
        %4097 = vmatprep.subr.bf16.mxu0 0
        %4098 = vmatpush1.bf16.msra.mxu0 0
        %4099 = vmatprep.subr.bf16.mxu0 0
        %4100 = vmatpush1.bf16.msra.mxu0 0
        %4101 = vmatprep.subr.bf16.mxu0 0
        %4102 = vmatpush1.bf16.msra.mxu0 0
        %4103 = vmatprep.subr.bf16.mxu0 0
        %4104 = vmatpush1.bf16.msra.mxu0 0
        %4105 = vmatprep.subr.bf16.mxu0 0
        %4106 = vmatpush1.bf16.msra.mxu0 0
        %4107 = vmatprep.subr.bf16.mxu0 0
        %4108 = vmatpush1.bf16.msra.mxu0 0
        %4109 = vmatprep.subr.bf16.mxu0 0
        %4110 = vmatpush1.bf16.msra.mxu0 0
        %4111 = vmatprep.subr.bf16.mxu0 0
        %4112 = vmatpush1.bf16.msra.mxu0 0
        %4113 = vmatprep.subr.bf16.mxu0 0
        %4114 = vmatpush1.bf16.msra.mxu0 0
        %4115 = vmatprep.subr.bf16.mxu0 0
        %4116 = vmatpush1.bf16.msra.mxu0 0
        %4117 = vmatprep.subr.bf16.mxu0 0
        %4118 = vmatpush1.bf16.msra.mxu0 0
        %4119 = vmatprep.subr.bf16.mxu0 0
        %4120 = vmatpush1.bf16.msra.mxu0 0
        %4121 = vmatprep.subr.bf16.mxu0 0
        %4122 = vmatpush1.bf16.msra.mxu0 0
        %4123 = vmatprep.mubr.bf16.mxu0 0
        %4124 = vmatmul.mubr.bf16.gmra.mrb[0].mxu0 %v3920
        %v4125 = vpop.f32.mrb[0].mxu0
        %v4126 = vadd.f32 %v4075, %v4125
        %v4127 = vpop.f32.mrb[0].mxu0
        %v4128 = vadd.f32 %v4077, %v4127
        %v4129 = vpop.f32.mrb[0].mxu0
        %v4130 = vadd.f32 %v4079, %v4129
        %v4131 = vpop.f32.mrb[0].mxu0
        %v4132 = vadd.f32 %v4081, %v4131
        %4133 = vmatprep.mubr.bf16.mxu0 0
        %4134 = vmatmul.mubr.bf16.gmra.mrb[0].mxu0 %v3923
        %v4135 = vpop.f32.mrb[0].mxu0
        %v4136 = vadd.f32 %v4085, %v4135
        %v4137 = vpop.f32.mrb[0].mxu0
        %v4138 = vadd.f32 %v4087, %v4137
        %v4139 = vpop.f32.mrb[0].mxu0
        %v4140 = vpop.f32.mrb[0].mxu0
        %4141 = vdwg.mxu0
        %vm4142 = vcmp.gt.f32.partialorder %v4024, 0.0
        %vm4143 = vcmp.gt.f32.partialorder %v4026, 0.0
        %vm4144 = vcmp.gt.f32.partialorder %v4126, 0.0
        %vm4145 = vcmp.gt.f32.partialorder %v4128, 0.0
        %vm4146 = vcmp.gt.f32.partialorder %v4028, 0.0
        %vm4147 = vcmp.gt.f32.partialorder %v4030, 0.0
        %vm4148 = vcmp.gt.f32.partialorder %v4130, 0.0
        %vm4149 = vcmp.gt.f32.partialorder %v4132, 0.0
        %vm4150 = vcmp.gt.f32.partialorder %v4034, 0.0
        %vm4151 = vcmp.gt.f32.partialorder %v4036, 0.0
        %vm4152 = vcmp.gt.f32.partialorder %v4136, 0.0
        %vm4153 = vcmp.gt.f32.partialorder %v4138, 0.0
        %v4154 = vmul.f32 %v4024, 0.2
        %v4155 = vmul.f32 %v4026, 0.2
        %v4156 = vmul.f32 %v4126, 0.2
        %v4157 = vmul.f32 %v4128, 0.2
        %v4158 = vmul.f32 %v4028, 0.2
        %v4159 = vmul.f32 %v4030, 0.2
        %v4160 = vmul.f32 %v4130, 0.2
        %v4161 = vmul.f32 %v4132, 0.2
        %v4162 = vmul.f32 %v4034, 0.2
        %v4163 = vmul.f32 %v4036, 0.2
        %v4164 = vmul.f32 %v4136, 0.2
        %v4165 = vmul.f32 %v4138, 0.2
        %v4166 = vsel %vm4142, %v4024, %v4154
        %v4167 = vsel %vm4143, %v4026, %v4155
        %v4168 = vsel %vm4144, %v4126, %v4156
        %v4169 = vsel %vm4145, %v4128, %v4157
        %v4170 = vsel %vm4146, %v4028, %v4158
        %v4171 = vsel %vm4147, %v4030, %v4159
        %v4172 = vsel %vm4148, %v4130, %v4160
        %v4173 = vsel %vm4149, %v4132, %v4161
        %v4174 = vsel %vm4150, %v4034, %v4162
        %v4175 = vsel %vm4151, %v4036, %v4163
        %v4176 = vsel %vm4152, %v4136, %v4164
        %v4177 = vsel %vm4153, %v4138, %v4165
        %v4178 = vld [vmem:[#allocation4] sm:$0xff]
        %v4179 = vld [vmem:[#allocation4 + $0x8] sm:$0xff]
        %v4180 = vld [vmem:[#allocation4 + $0x10] sm:$0xff]
        %v4181 = vld [vmem:[#allocation4 + $0x18] sm:$0xff]
        %v4182 = vld [vmem:[#allocation4 + $0x20] sm:$0xff]
        %v4183 = vld [vmem:[#allocation4 + $0x28] sm:$0xff]
        %v4184 = vld [vmem:[#allocation4 + $0x30] sm:$0xf]
        %v4185 = vld [vmem:[#allocation4 + $0x38] sm:$0xf]
        %v4186 = vld [vmem:[#allocation4 + $0x40] sm:$0xf]
        %v4187 = vpack.c.bf16 %v4170, %v4166
        %v4188 = vpack.c.bf16 %v4171, %v4167
        %v4189 = vpack.c.bf16 %v4172, %v4168
        %v4190 = vpack.c.bf16 %v4173, %v4169
        %v4191 = vpack.c.bf16 %v4174, %v4174
        %v4192 = vpack.c.bf16 %v4175, %v4175
        %v4193 = vpack.c.bf16 %v4176, %v4176
        %v4194 = vpack.c.bf16 %v4177, %v4177
        %v4195 = vld [vmem:[%s594] sm:$0xff]
        %v4196 = vld [vmem:[%s594 + $0x8] sm:$0xf]
        %v4197 = vld [vmem:[%s594 + $0xc] sm:$0xff]
        %v4198 = vld [vmem:[%s594 + $0x14] sm:$0xf]
        %v4199 = vld [vmem:[%s594 + $0x18] sm:$0xff]
        %v4200 = vld [vmem:[%s594 + $0x20] sm:$0xf]
        %v4201 = vld [vmem:[%s594 + $0x24] sm:$0xff]
        %v4202 = vld [vmem:[%s594 + $0x2c] sm:$0xf]
        %v4203 = vld [vmem:[%s594 + $0x30] sm:$0xff]
        %v4204 = vld [vmem:[%s594 + $0x38] sm:$0xf]
        %v4205 = vld [vmem:[%s594 + $0x3c] sm:$0xff]
        %v4206 = vld [vmem:[%s594 + $0x44] sm:$0xf]
        %v4207 = vld [vmem:[%s594 + $0x48] sm:$0xff]
        %v4208 = vld [vmem:[%s594 + $0x50] sm:$0xf]
        %v4209 = vld [vmem:[%s594 + $0x54] sm:$0xff]
        %v4210 = vld [vmem:[%s594 + $0x5c] sm:$0xf]
        %v4211 = vld [vmem:[%s594 + $0x60] sm:$0xff]
        %v4212 = vld [vmem:[%s594 + $0x68] sm:$0xf]
        %v4213 = vld [vmem:[%s594 + $0x6c] sm:$0xff]
        %v4214 = vld [vmem:[%s594 + $0x74] sm:$0xf]
        %v4215 = vld [vmem:[%s594 + $0x78] sm:$0xff]
        %v4216 = vld [vmem:[%s594 + $0x80] sm:$0xf]
        %v4217 = vld [vmem:[%s594 + $0x84] sm:$0xff]
        %v4218 = vld [vmem:[%s594 + $0x8c] sm:$0xf]
        %v4219 = vld [vmem:[%s594 + $0x90] sm:$0xff]
        %v4220 = vld [vmem:[%s594 + $0x98] sm:$0xf]
        %v4221 = vld [vmem:[%s594 + $0x9c] sm:$0xff]
        %v4222 = vld [vmem:[%s594 + $0xa4] sm:$0xf]
        %v4223 = vld [vmem:[%s594 + $0xa8] sm:$0xff]
        %v4224 = vld [vmem:[%s594 + $0xb0] sm:$0xf]
        %v4225 = vld [vmem:[%s594 + $0xb4] sm:$0xff]
        %v4226 = vld [vmem:[%s594 + $0xbc] sm:$0xf]
        %v4227 = vld [vmem:[%s594 + $0xc0] sm:$0xff]
        %v4228 = vld [vmem:[%s594 + $0xc8] sm:$0xf]
        %v4229 = vld [vmem:[%s594 + $0xcc] sm:$0xff]
        %v4230 = vld [vmem:[%s594 + $0xd4] sm:$0xf]
        %v4231 = vld [vmem:[%s594 + $0xd8] sm:$0xff]
        %v4232 = vld [vmem:[%s594 + $0xe0] sm:$0xf]
        %v4233 = vld [vmem:[%s594 + $0xe4] sm:$0xff]
        %v4234 = vld [vmem:[%s594 + $0xec] sm:$0xf]
        %v4235 = vld [vmem:[%s594 + $0xf0] sm:$0xff]
        %v4236 = vld [vmem:[%s594 + $0xf8] sm:$0xf]
        %v4237 = vld [vmem:[%s594 + $0xfc] sm:$0xff]
        %v4238 = vld [vmem:[%s594 + $0x104] sm:$0xf]
        %v4239 = vld [vmem:[%s594 + $0x108] sm:$0xff]
        %v4240 = vld [vmem:[%s594 + $0x110] sm:$0xf]
        %v4241 = vld [vmem:[%s594 + $0x114] sm:$0xff]
        %v4242 = vld [vmem:[%s594 + $0x11c] sm:$0xf]
        %v4243 = vld [vmem:[%s594 + $0x120] sm:$0xff]
        %v4244 = vld [vmem:[%s594 + $0x128] sm:$0xf]
        %v4245 = vld [vmem:[%s594 + $0x12c] sm:$0xff]
        %v4246 = vld [vmem:[%s594 + $0x134] sm:$0xf]
        %v4247 = vld [vmem:[%s594 + $0x138] sm:$0xff]
        %v4248 = vld [vmem:[%s594 + $0x140] sm:$0xf]
        %v4249 = vld [vmem:[%s594 + $0x144] sm:$0xff]
        %v4250 = vld [vmem:[%s594 + $0x14c] sm:$0xf]
        %v4251 = vld [vmem:[%s594 + $0x150] sm:$0xff]
        %v4252 = vld [vmem:[%s594 + $0x158] sm:$0xf]
        %v4253 = vld [vmem:[%s594 + $0x15c] sm:$0xff]
        %v4254 = vld [vmem:[%s594 + $0x164] sm:$0xf]
        %v4255 = vld [vmem:[%s594 + $0x168] sm:$0xff]
        %v4256 = vld [vmem:[%s594 + $0x170] sm:$0xf]
        %v4257 = vld [vmem:[%s594 + $0x174] sm:$0xff]
        %v4258 = vld [vmem:[%s594 + $0x17c] sm:$0xf]
        %v4259 = vld [vmem:[%s594 + $0x180] sm:$0xff]
        %v4260 = vld [vmem:[%s594 + $0x188] sm:$0xf]
        %v4261 = vld [vmem:[%s594 + $0x18c] sm:$0xff]
        %v4262 = vld [vmem:[%s594 + $0x194] sm:$0xf]
        %v4263 = vld [vmem:[%s594 + $0x198] sm:$0xff]
        %v4264 = vld [vmem:[%s594 + $0x1a0] sm:$0xf]
        %v4265 = vld [vmem:[%s594 + $0x1a4] sm:$0xff]
        %v4266 = vld [vmem:[%s594 + $0x1ac] sm:$0xf]
        %v4267 = vld [vmem:[%s594 + $0x1b0] sm:$0xff]
        %v4268 = vld [vmem:[%s594 + $0x1b8] sm:$0xf]
        %v4269 = vld [vmem:[%s594 + $0x1bc] sm:$0xff]
        %v4270 = vld [vmem:[%s594 + $0x1c4] sm:$0xf]
        %v4271 = vld [vmem:[%s594 + $0x1c8] sm:$0xff]
        %v4272 = vld [vmem:[%s594 + $0x1d0] sm:$0xf]
        %v4273 = vld [vmem:[%s594 + $0x1d4] sm:$0xff]
        %v4274 = vld [vmem:[%s594 + $0x1dc] sm:$0xf]
        %v4275 = vld [vmem:[%s594 + $0x1e0] sm:$0xff]
        %v4276 = vld [vmem:[%s594 + $0x1e8] sm:$0xf]
        %v4277 = vld [vmem:[%s594 + $0x1ec] sm:$0xff]
        %v4278 = vld [vmem:[%s594 + $0x1f4] sm:$0xf]
        %v4279 = vld [vmem:[%s594 + $0x1f8] sm:$0xff]
        %v4280 = vld [vmem:[%s594 + $0x200] sm:$0xf]
        %v4281 = vld [vmem:[%s594 + $0x204] sm:$0xff]
        %v4282 = vld [vmem:[%s594 + $0x20c] sm:$0xf]
        %v4283 = vld [vmem:[%s594 + $0x210] sm:$0xff]
        %v4284 = vld [vmem:[%s594 + $0x218] sm:$0xf]
        %v4285 = vld [vmem:[%s594 + $0x21c] sm:$0xff]
        %v4286 = vld [vmem:[%s594 + $0x224] sm:$0xf]
        %v4287 = vld [vmem:[%s594 + $0x228] sm:$0xff]
        %v4288 = vld [vmem:[%s594 + $0x230] sm:$0xf]
        %v4289 = vld [vmem:[%s594 + $0x234] sm:$0xff]
        %v4290 = vld [vmem:[%s594 + $0x23c] sm:$0xf]
        %v4291 = vld [vmem:[%s594 + $0x240] sm:$0xff]
        %v4292 = vld [vmem:[%s594 + $0x248] sm:$0xf]
        %v4293 = vld [vmem:[%s594 + $0x24c] sm:$0xff]
        %v4294 = vld [vmem:[%s594 + $0x254] sm:$0xf]
        %v4295 = vld [vmem:[%s594 + $0x258] sm:$0xff]
        %v4296 = vld [vmem:[%s594 + $0x260] sm:$0xf]
        %v4297 = vld [vmem:[%s594 + $0x264] sm:$0xff]
        %v4298 = vld [vmem:[%s594 + $0x26c] sm:$0xf]
        %v4299 = vld [vmem:[%s594 + $0x270] sm:$0xff]
        %v4300 = vld [vmem:[%s594 + $0x278] sm:$0xf]
        %v4301 = vld [vmem:[%s594 + $0x27c] sm:$0xff]
        %v4302 = vld [vmem:[%s594 + $0x284] sm:$0xf]
        %v4303 = vld [vmem:[%s594 + $0x288] sm:$0xff]
        %v4304 = vld [vmem:[%s594 + $0x290] sm:$0xf]
        %v4305 = vld [vmem:[%s594 + $0x294] sm:$0xff]
        %v4306 = vld [vmem:[%s594 + $0x29c] sm:$0xf]
        %v4307 = vld [vmem:[%s594 + $0x2a0] sm:$0xff]
        %v4308 = vld [vmem:[%s594 + $0x2a8] sm:$0xf]
        %v4309 = vld [vmem:[%s594 + $0x2ac] sm:$0xff]
        %v4310 = vld [vmem:[%s594 + $0x2b4] sm:$0xf]
        %v4311 = vld [vmem:[%s594 + $0x2b8] sm:$0xff]
        %v4312 = vld [vmem:[%s594 + $0x2c0] sm:$0xf]
        %v4313 = vld [vmem:[%s594 + $0x2c4] sm:$0xff]
        %v4314 = vld [vmem:[%s594 + $0x2cc] sm:$0xf]
        %v4315 = vld [vmem:[%s594 + $0x2d0] sm:$0xff]
        %v4316 = vld [vmem:[%s594 + $0x2d8] sm:$0xf]
        %v4317 = vld [vmem:[%s594 + $0x2dc] sm:$0xff]
        %v4318 = vld [vmem:[%s594 + $0x2e4] sm:$0xf]
        %v4319 = vld [vmem:[%s594 + $0x2e8] sm:$0xff]
        %v4320 = vld [vmem:[%s594 + $0x2f0] sm:$0xf]
        %v4321 = vld [vmem:[%s594 + $0x2f4] sm:$0xff]
        %v4322 = vld [vmem:[%s594 + $0x2fc] sm:$0xf]
        %v4451 = vunpack.c.l.b16 %v4195
        %v4452 = vunpack.c.h.b16 %v4195
        %v4453 = vunpack.c.l.b16 %v4196
        %v4454 = vunpack.c.l.b16 %v4197
        %v4455 = vunpack.c.h.b16 %v4197
        %v4456 = vunpack.c.l.b16 %v4198
        %v4457 = vunpack.c.l.b16 %v4199
        %v4458 = vunpack.c.h.b16 %v4199
        %v4459 = vunpack.c.l.b16 %v4200
        %v4460 = vunpack.c.l.b16 %v4201
        %v4461 = vunpack.c.h.b16 %v4201
        %v4462 = vunpack.c.l.b16 %v4202
        %v4463 = vunpack.c.l.b16 %v4203
        %v4464 = vunpack.c.h.b16 %v4203
        %v4465 = vunpack.c.l.b16 %v4204
        %v4466 = vunpack.c.l.b16 %v4205
        %v4467 = vunpack.c.h.b16 %v4205
        %v4468 = vunpack.c.l.b16 %v4206
        %v4469 = vunpack.c.l.b16 %v4207
        %v4470 = vunpack.c.h.b16 %v4207
        %v4471 = vunpack.c.l.b16 %v4208
        %v4472 = vunpack.c.l.b16 %v4209
        %v4473 = vunpack.c.h.b16 %v4209
        %v4474 = vunpack.c.l.b16 %v4210
        %v4475 = vunpack.c.l.b16 %v4211
        %v4476 = vunpack.c.h.b16 %v4211
        %v4477 = vunpack.c.l.b16 %v4212
        %v4478 = vunpack.c.l.b16 %v4213
        %v4479 = vunpack.c.h.b16 %v4213
        %v4480 = vunpack.c.l.b16 %v4214
        %v4481 = vunpack.c.l.b16 %v4215
        %v4482 = vunpack.c.h.b16 %v4215
        %v4483 = vunpack.c.l.b16 %v4216
        %v4484 = vunpack.c.l.b16 %v4217
        %v4485 = vunpack.c.h.b16 %v4217
        %v4486 = vunpack.c.l.b16 %v4218
        %v4487 = vunpack.c.l.b16 %v4219
        %v4488 = vunpack.c.h.b16 %v4219
        %v4489 = vunpack.c.l.b16 %v4220
        %v4490 = vunpack.c.l.b16 %v4221
        %v4491 = vunpack.c.h.b16 %v4221
        %v4492 = vunpack.c.l.b16 %v4222
        %v4493 = vunpack.c.l.b16 %v4223
        %v4494 = vunpack.c.h.b16 %v4223
        %v4495 = vunpack.c.l.b16 %v4224
        %v4496 = vunpack.c.l.b16 %v4225
        %v4497 = vunpack.c.h.b16 %v4225
        %v4498 = vunpack.c.l.b16 %v4226
        %v4499 = vunpack.c.l.b16 %v4227
        %v4500 = vunpack.c.h.b16 %v4227
        %v4501 = vunpack.c.l.b16 %v4228
        %v4502 = vunpack.c.l.b16 %v4229
        %v4503 = vunpack.c.h.b16 %v4229
        %v4504 = vunpack.c.l.b16 %v4230
        %v4505 = vunpack.c.l.b16 %v4231
        %v4506 = vunpack.c.h.b16 %v4231
        %v4507 = vunpack.c.l.b16 %v4232
        %v4508 = vunpack.c.l.b16 %v4233
        %v4509 = vunpack.c.h.b16 %v4233
        %v4510 = vunpack.c.l.b16 %v4234
        %v4511 = vunpack.c.l.b16 %v4235
        %v4512 = vunpack.c.h.b16 %v4235
        %v4513 = vunpack.c.l.b16 %v4236
        %v4514 = vunpack.c.l.b16 %v4237
        %v4515 = vunpack.c.h.b16 %v4237
        %v4516 = vunpack.c.l.b16 %v4238
        %v4517 = vunpack.c.l.b16 %v4239
        %v4518 = vunpack.c.h.b16 %v4239
        %v4519 = vunpack.c.l.b16 %v4240
        %v4520 = vunpack.c.l.b16 %v4241
        %v4521 = vunpack.c.h.b16 %v4241
        %v4522 = vunpack.c.l.b16 %v4242
        %v4523 = vunpack.c.l.b16 %v4243
        %v4524 = vunpack.c.h.b16 %v4243
        %v4525 = vunpack.c.l.b16 %v4244
        %v4526 = vunpack.c.l.b16 %v4245
        %v4527 = vunpack.c.h.b16 %v4245
        %v4528 = vunpack.c.l.b16 %v4246
        %v4529 = vunpack.c.l.b16 %v4247
        %v4530 = vunpack.c.h.b16 %v4247
        %v4531 = vunpack.c.l.b16 %v4248
        %v4532 = vunpack.c.l.b16 %v4249
        %v4533 = vunpack.c.h.b16 %v4249
        %v4534 = vunpack.c.l.b16 %v4250
        %v4535 = vunpack.c.l.b16 %v4251
        %v4536 = vunpack.c.h.b16 %v4251
        %v4537 = vunpack.c.l.b16 %v4252
        %v4538 = vunpack.c.l.b16 %v4253
        %v4539 = vunpack.c.h.b16 %v4253
        %v4540 = vunpack.c.l.b16 %v4254
        %v4541 = vunpack.c.l.b16 %v4255
        %v4542 = vunpack.c.h.b16 %v4255
        %v4543 = vunpack.c.l.b16 %v4256
        %v4544 = vunpack.c.l.b16 %v4257
        %v4545 = vunpack.c.h.b16 %v4257
        %v4546 = vunpack.c.l.b16 %v4258
        %v4547 = vunpack.c.l.b16 %v4259
        %v4548 = vunpack.c.h.b16 %v4259
        %v4549 = vunpack.c.l.b16 %v4260
        %v4550 = vunpack.c.l.b16 %v4261
        %v4551 = vunpack.c.h.b16 %v4261
        %v4552 = vunpack.c.l.b16 %v4262
        %v4553 = vunpack.c.l.b16 %v4263
        %v4554 = vunpack.c.h.b16 %v4263
        %v4555 = vunpack.c.l.b16 %v4264
        %v4556 = vunpack.c.l.b16 %v4265
        %v4557 = vunpack.c.h.b16 %v4265
        %v4558 = vunpack.c.l.b16 %v4266
        %v4559 = vunpack.c.l.b16 %v4267
        %v4560 = vunpack.c.h.b16 %v4267
        %v4561 = vunpack.c.l.b16 %v4268
        %v4562 = vunpack.c.l.b16 %v4269
        %v4563 = vunpack.c.h.b16 %v4269
        %v4564 = vunpack.c.l.b16 %v4270
        %v4565 = vunpack.c.l.b16 %v4271
        %v4566 = vunpack.c.h.b16 %v4271
        %v4567 = vunpack.c.l.b16 %v4272
        %v4568 = vunpack.c.l.b16 %v4273
        %v4569 = vunpack.c.h.b16 %v4273
        %v4570 = vunpack.c.l.b16 %v4274
        %v4571 = vunpack.c.l.b16 %v4275
        %v4572 = vunpack.c.h.b16 %v4275
        %v4573 = vunpack.c.l.b16 %v4276
        %v4574 = vunpack.c.l.b16 %v4277
        %v4575 = vunpack.c.h.b16 %v4277
        %v4576 = vunpack.c.l.b16 %v4278
        %v4577 = vunpack.c.l.b16 %v4279
        %v4578 = vunpack.c.h.b16 %v4279
        %v4579 = vunpack.c.l.b16 %v4280
        %v4580 = vunpack.c.l.b16 %v4281
        %v4581 = vunpack.c.h.b16 %v4281
        %v4582 = vunpack.c.l.b16 %v4282
        %v4583 = vunpack.c.l.b16 %v4283
        %v4584 = vunpack.c.h.b16 %v4283
        %v4585 = vunpack.c.l.b16 %v4284
        %v4586 = vunpack.c.l.b16 %v4285
        %v4587 = vunpack.c.h.b16 %v4285
        %v4588 = vunpack.c.l.b16 %v4286
        %v4589 = vunpack.c.l.b16 %v4287
        %v4590 = vunpack.c.h.b16 %v4287
        %v4591 = vunpack.c.l.b16 %v4288
        %v4592 = vunpack.c.l.b16 %v4289
        %v4593 = vunpack.c.h.b16 %v4289
        %v4594 = vunpack.c.l.b16 %v4290
        %v4595 = vunpack.c.l.b16 %v4291
        %v4596 = vunpack.c.h.b16 %v4291
        %v4597 = vunpack.c.l.b16 %v4292
        %v4598 = vunpack.c.l.b16 %v4293
        %v4599 = vunpack.c.h.b16 %v4293
        %v4600 = vunpack.c.l.b16 %v4294
        %v4601 = vunpack.c.l.b16 %v4295
        %v4602 = vunpack.c.h.b16 %v4295
        %v4603 = vunpack.c.l.b16 %v4296
        %v4604 = vunpack.c.l.b16 %v4297
        %v4605 = vunpack.c.h.b16 %v4297
        %v4606 = vunpack.c.l.b16 %v4298
        %v4607 = vunpack.c.l.b16 %v4299
        %v4608 = vunpack.c.h.b16 %v4299
        %v4609 = vunpack.c.l.b16 %v4300
        %v4610 = vunpack.c.l.b16 %v4301
        %v4611 = vunpack.c.h.b16 %v4301
        %v4612 = vunpack.c.l.b16 %v4302
        %v4613 = vunpack.c.l.b16 %v4303
        %v4614 = vunpack.c.h.b16 %v4303
        %v4615 = vunpack.c.l.b16 %v4304
        %v4616 = vunpack.c.l.b16 %v4305
        %v4617 = vunpack.c.h.b16 %v4305
        %v4618 = vunpack.c.l.b16 %v4306
        %v4619 = vunpack.c.l.b16 %v4307
        %v4620 = vunpack.c.h.b16 %v4307
        %v4621 = vunpack.c.l.b16 %v4308
        %v4622 = vunpack.c.l.b16 %v4309
        %v4623 = vunpack.c.h.b16 %v4309
        %v4624 = vunpack.c.l.b16 %v4310
        %v4625 = vunpack.c.l.b16 %v4311
        %v4626 = vunpack.c.h.b16 %v4311
        %v4627 = vunpack.c.l.b16 %v4312
        %v4628 = vunpack.c.l.b16 %v4313
        %v4629 = vunpack.c.h.b16 %v4313
        %v4630 = vunpack.c.l.b16 %v4314
        %v4631 = vunpack.c.l.b16 %v4315
        %v4632 = vunpack.c.h.b16 %v4315
        %v4633 = vunpack.c.l.b16 %v4316
        %v4634 = vunpack.c.l.b16 %v4317
        %v4635 = vunpack.c.h.b16 %v4317
        %v4636 = vunpack.c.l.b16 %v4318
        %v4637 = vunpack.c.l.b16 %v4319
        %v4638 = vunpack.c.h.b16 %v4319
        %v4639 = vunpack.c.l.b16 %v4320
        %v4640 = vunpack.c.l.b16 %v4321
        %v4641 = vunpack.c.h.b16 %v4321
        %v4642 = vunpack.c.l.b16 %v4322
        %v4643 = vpack.c.b16 %v4454, %v4451
        %v4644 = vpack.c.b16 %v4455, %v4452
        %v4645 = vpack.c.b16 %v4456, %v4453
        %v4646 = vpack.c.b16 %v4460, %v4457
        %v4647 = vpack.c.b16 %v4461, %v4458
        %v4648 = vpack.c.b16 %v4462, %v4459
        %v4649 = vpack.c.b16 %v4466, %v4463
        %v4650 = vpack.c.b16 %v4467, %v4464
        %v4651 = vpack.c.b16 %v4468, %v4465
        %v4652 = vpack.c.b16 %v4472, %v4469
        %v4653 = vpack.c.b16 %v4473, %v4470
        %v4654 = vpack.c.b16 %v4474, %v4471
        %v4655 = vpack.c.b16 %v4478, %v4475
        %v4656 = vpack.c.b16 %v4479, %v4476
        %v4657 = vpack.c.b16 %v4480, %v4477
        %v4658 = vpack.c.b16 %v4484, %v4481
        %v4659 = vpack.c.b16 %v4485, %v4482
        %v4660 = vpack.c.b16 %v4486, %v4483
        %v4661 = vpack.c.b16 %v4490, %v4487
        %v4662 = vpack.c.b16 %v4491, %v4488
        %v4663 = vpack.c.b16 %v4492, %v4489
        %v4664 = vpack.c.b16 %v4496, %v4493
        %v4665 = vpack.c.b16 %v4497, %v4494
        %v4666 = vpack.c.b16 %v4498, %v4495
        %v4667 = vpack.c.b16 %v4502, %v4499
        %v4668 = vpack.c.b16 %v4503, %v4500
        %v4669 = vpack.c.b16 %v4504, %v4501
        %v4670 = vpack.c.b16 %v4508, %v4505
        %v4671 = vpack.c.b16 %v4509, %v4506
        %v4672 = vpack.c.b16 %v4510, %v4507
        %v4673 = vpack.c.b16 %v4514, %v4511
        %v4674 = vpack.c.b16 %v4515, %v4512
        %v4675 = vpack.c.b16 %v4516, %v4513
        %v4676 = vpack.c.b16 %v4520, %v4517
        %v4677 = vpack.c.b16 %v4521, %v4518
        %v4678 = vpack.c.b16 %v4522, %v4519
        %v4679 = vpack.c.b16 %v4526, %v4523
        %v4680 = vpack.c.b16 %v4527, %v4524
        %v4681 = vpack.c.b16 %v4528, %v4525
        %v4682 = vpack.c.b16 %v4532, %v4529
        %v4683 = vpack.c.b16 %v4533, %v4530
        %v4684 = vpack.c.b16 %v4534, %v4531
        %v4685 = vpack.c.b16 %v4538, %v4535
        %v4686 = vpack.c.b16 %v4539, %v4536
        %v4687 = vpack.c.b16 %v4540, %v4537
        %v4688 = vpack.c.b16 %v4544, %v4541
        %v4689 = vpack.c.b16 %v4545, %v4542
        %v4690 = vpack.c.b16 %v4546, %v4543
        %v4691 = vpack.c.b16 %v4550, %v4547
        %v4692 = vpack.c.b16 %v4551, %v4548
        %v4693 = vpack.c.b16 %v4552, %v4549
        %v4694 = vpack.c.b16 %v4556, %v4553
        %v4695 = vpack.c.b16 %v4557, %v4554
        %v4696 = vpack.c.b16 %v4558, %v4555
        %v4697 = vpack.c.b16 %v4562, %v4559
        %v4698 = vpack.c.b16 %v4563, %v4560
        %v4699 = vpack.c.b16 %v4564, %v4561
        %v4700 = vpack.c.b16 %v4568, %v4565
        %v4701 = vpack.c.b16 %v4569, %v4566
        %v4702 = vpack.c.b16 %v4570, %v4567
        %v4703 = vpack.c.b16 %v4574, %v4571
        %v4704 = vpack.c.b16 %v4575, %v4572
        %v4705 = vpack.c.b16 %v4576, %v4573
        %v4706 = vpack.c.b16 %v4580, %v4577
        %v4707 = vpack.c.b16 %v4581, %v4578
        %v4708 = vpack.c.b16 %v4582, %v4579
        %v4709 = vpack.c.b16 %v4586, %v4583
        %v4710 = vpack.c.b16 %v4587, %v4584
        %v4711 = vpack.c.b16 %v4588, %v4585
        %v4712 = vpack.c.b16 %v4592, %v4589
        %v4713 = vpack.c.b16 %v4593, %v4590
        %v4714 = vpack.c.b16 %v4594, %v4591
        %v4715 = vpack.c.b16 %v4598, %v4595
        %v4716 = vpack.c.b16 %v4599, %v4596
        %v4717 = vpack.c.b16 %v4600, %v4597
        %v4718 = vpack.c.b16 %v4604, %v4601
        %v4719 = vpack.c.b16 %v4605, %v4602
        %v4720 = vpack.c.b16 %v4606, %v4603
        %v4721 = vpack.c.b16 %v4610, %v4607
        %v4722 = vpack.c.b16 %v4611, %v4608
        %v4723 = vpack.c.b16 %v4612, %v4609
        %v4724 = vpack.c.b16 %v4616, %v4613
        %v4725 = vpack.c.b16 %v4617, %v4614
        %v4726 = vpack.c.b16 %v4618, %v4615
        %v4727 = vpack.c.b16 %v4622, %v4619
        %v4728 = vpack.c.b16 %v4623, %v4620
        %v4729 = vpack.c.b16 %v4624, %v4621
        %v4730 = vpack.c.b16 %v4628, %v4625
        %v4731 = vpack.c.b16 %v4629, %v4626
        %v4732 = vpack.c.b16 %v4630, %v4627
        %v4733 = vpack.c.b16 %v4634, %v4631
        %v4734 = vpack.c.b16 %v4635, %v4632
        %v4735 = vpack.c.b16 %v4636, %v4633
        %v4736 = vpack.c.b16 %v4640, %v4637
        %v4737 = vpack.c.b16 %v4641, %v4638
        %v4738 = vpack.c.b16 %v4642, %v4639
        %4835 = vmatprep.subr.bf16.mxu0 %v4644
        %4836 = vmatpush1.bf16.msra.mxu0 %v4643
        %4837 = vmatprep.subr.bf16.mxu0 %v4647
        %4838 = vmatpush1.bf16.msra.mxu0 %v4646
        %4839 = vmatprep.subr.bf16.mxu0 %v4650
        %4840 = vmatpush1.bf16.msra.mxu0 %v4649
        %4841 = vmatprep.subr.bf16.mxu0 %v4653
        %4842 = vmatpush1.bf16.msra.mxu0 %v4652
        %4843 = vmatprep.subr.bf16.mxu0 %v4656
        %4844 = vmatpush1.bf16.msra.mxu0 %v4655
        %4845 = vmatprep.subr.bf16.mxu0 %v4659
        %4846 = vmatpush1.bf16.msra.mxu0 %v4658
        %4847 = vmatprep.subr.bf16.mxu0 %v4662
        %4848 = vmatpush1.bf16.msra.mxu0 %v4661
        %4849 = vmatprep.subr.bf16.mxu0 %v4665
        %4850 = vmatpush1.bf16.msra.mxu0 %v4664
        %4851 = vmatprep.subr.bf16.mxu0 %v4668
        %4852 = vmatpush1.bf16.msra.mxu0 %v4667
        %4853 = vmatprep.subr.bf16.mxu0 %v4671
        %4854 = vmatpush1.bf16.msra.mxu0 %v4670
        %4855 = vmatprep.subr.bf16.mxu0 %v4674
        %4856 = vmatpush1.bf16.msra.mxu0 %v4673
        %4857 = vmatprep.subr.bf16.mxu0 %v4677
        %4858 = vmatpush1.bf16.msra.mxu0 %v4676
        %4859 = vmatprep.subr.bf16.mxu0 %v4680
        %4860 = vmatpush1.bf16.msra.mxu0 %v4679
        %4861 = vmatprep.subr.bf16.mxu0 %v4683
        %4862 = vmatpush1.bf16.msra.mxu0 %v4682
        %4863 = vmatprep.subr.bf16.mxu0 %v4686
        %4864 = vmatpush1.bf16.msra.mxu0 %v4685
        %4865 = vmatprep.subr.bf16.mxu0 %v4689
        %4866 = vmatpush1.bf16.msra.mxu0 %v4688
        %4867 = vmatprep.mubr.bf16.mxu0 %v4188
        %4868 = vmatmul.mubr.bf16.gmra.mrb[0].mxu0 %v4187
        %v4869 = vpop.f32.mrb[0].mxu0
        %v4870 = vadd.f32 0.0, %v4869
        %v4871 = vpop.f32.mrb[0].mxu0
        %v4872 = vadd.f32 0.0, %v4871
        %v4873 = vpop.f32.mrb[0].mxu0
        %v4874 = vadd.f32 0.0, %v4873
        %v4875 = vpop.f32.mrb[0].mxu0
        %v4876 = vadd.f32 0.0, %v4875
        %4877 = vmatprep.mubr.bf16.mxu0 %v4192
        %4878 = vmatmul.mubr.bf16.gmra.mrb[0].mxu0 %v4191
        %v4879 = vpop.f32.mrb[0].mxu0
        %v4880 = vadd.f32 0.0, %v4879
        %v4881 = vpop.f32.mrb[0].mxu0
        %v4882 = vadd.f32 0.0, %v4881
        %v4883 = vpop.f32.mrb[0].mxu0
        %v4884 = vpop.f32.mrb[0].mxu0
        %4885 = vdwg.mxu0
        %4886 = vmatprep.subr.bf16.mxu0 %v4692
        %4887 = vmatpush1.bf16.msra.mxu0 %v4691
        %4888 = vmatprep.subr.bf16.mxu0 %v4695
        %4889 = vmatpush1.bf16.msra.mxu0 %v4694
        %4890 = vmatprep.subr.bf16.mxu0 %v4698
        %4891 = vmatpush1.bf16.msra.mxu0 %v4697
        %4892 = vmatprep.subr.bf16.mxu0 %v4701
        %4893 = vmatpush1.bf16.msra.mxu0 %v4700
        %4894 = vmatprep.subr.bf16.mxu0 %v4704
        %4895 = vmatpush1.bf16.msra.mxu0 %v4703
        %4896 = vmatprep.subr.bf16.mxu0 %v4707
        %4897 = vmatpush1.bf16.msra.mxu0 %v4706
        %4898 = vmatprep.subr.bf16.mxu0 %v4710
        %4899 = vmatpush1.bf16.msra.mxu0 %v4709
        %4900 = vmatprep.subr.bf16.mxu0 %v4713
        %4901 = vmatpush1.bf16.msra.mxu0 %v4712
        %4902 = vmatprep.subr.bf16.mxu0 %v4716
        %4903 = vmatpush1.bf16.msra.mxu0 %v4715
        %4904 = vmatprep.subr.bf16.mxu0 %v4719
        %4905 = vmatpush1.bf16.msra.mxu0 %v4718
        %4906 = vmatprep.subr.bf16.mxu0 %v4722
        %4907 = vmatpush1.bf16.msra.mxu0 %v4721
        %4908 = vmatprep.subr.bf16.mxu0 %v4725
        %4909 = vmatpush1.bf16.msra.mxu0 %v4724
        %4910 = vmatprep.subr.bf16.mxu0 %v4728
        %4911 = vmatpush1.bf16.msra.mxu0 %v4727
        %4912 = vmatprep.subr.bf16.mxu0 %v4731
        %4913 = vmatpush1.bf16.msra.mxu0 %v4730
        %4914 = vmatprep.subr.bf16.mxu0 %v4734
        %4915 = vmatpush1.bf16.msra.mxu0 %v4733
        %4916 = vmatprep.subr.bf16.mxu0 %v4737
        %4917 = vmatpush1.bf16.msra.mxu0 %v4736
        %4918 = vmatprep.mubr.bf16.mxu0 %v4190
        %4919 = vmatmul.mubr.bf16.gmra.mrb[0].mxu0 %v4189
        %v4920 = vpop.f32.mrb[0].mxu0
        %v4921 = vadd.f32 %v4870, %v4920
        %v4922 = vpop.f32.mrb[0].mxu0
        %v4923 = vadd.f32 %v4872, %v4922
        %v4924 = vpop.f32.mrb[0].mxu0
        %v4925 = vadd.f32 %v4874, %v4924
        %v4926 = vpop.f32.mrb[0].mxu0
        %v4927 = vadd.f32 %v4876, %v4926
        %4928 = vmatprep.mubr.bf16.mxu0 %v4194
        %4929 = vmatmul.mubr.bf16.gmra.mrb[0].mxu0 %v4193
        %v4930 = vpop.f32.mrb[0].mxu0
        %v4931 = vadd.f32 %v4880, %v4930
        %v4932 = vpop.f32.mrb[0].mxu0
        %v4933 = vadd.f32 %v4882, %v4932
        %v4934 = vpop.f32.mrb[0].mxu0
        %v4935 = vpop.f32.mrb[0].mxu0
        %4936 = vdwg.mxu0
        %4937 = vmatprep.subr.bf16.mxu0 0
        %4938 = vmatpush1.bf16.msra.mxu0 %v4645
        %4939 = vmatprep.subr.bf16.mxu0 0
        %4940 = vmatpush1.bf16.msra.mxu0 %v4648
        %4941 = vmatprep.subr.bf16.mxu0 0
        %4942 = vmatpush1.bf16.msra.mxu0 %v4651
        %4943 = vmatprep.subr.bf16.mxu0 0
        %4944 = vmatpush1.bf16.msra.mxu0 %v4654
        %4945 = vmatprep.subr.bf16.mxu0 0
        %4946 = vmatpush1.bf16.msra.mxu0 %v4657
        %4947 = vmatprep.subr.bf16.mxu0 0
        %4948 = vmatpush1.bf16.msra.mxu0 %v4660
        %4949 = vmatprep.subr.bf16.mxu0 0
        %4950 = vmatpush1.bf16.msra.mxu0 %v4663
        %4951 = vmatprep.subr.bf16.mxu0 0
        %4952 = vmatpush1.bf16.msra.mxu0 %v4666
        %4953 = vmatprep.subr.bf16.mxu0 0
        %4954 = vmatpush1.bf16.msra.mxu0 %v4669
        %4955 = vmatprep.subr.bf16.mxu0 0
        %4956 = vmatpush1.bf16.msra.mxu0 %v4672
        %4957 = vmatprep.subr.bf16.mxu0 0
        %4958 = vmatpush1.bf16.msra.mxu0 %v4675
        %4959 = vmatprep.subr.bf16.mxu0 0
        %4960 = vmatpush1.bf16.msra.mxu0 %v4678
        %4961 = vmatprep.subr.bf16.mxu0 0
        %4962 = vmatpush1.bf16.msra.mxu0 %v4681
        %4963 = vmatprep.subr.bf16.mxu0 0
        %4964 = vmatpush1.bf16.msra.mxu0 %v4684
        %4965 = vmatprep.subr.bf16.mxu0 0
        %4966 = vmatpush1.bf16.msra.mxu0 %v4687
        %4967 = vmatprep.subr.bf16.mxu0 0
        %4968 = vmatpush1.bf16.msra.mxu0 %v4690
        %4969 = vmatprep.mubr.bf16.mxu0 %v4188
        %4970 = vmatmul.mubr.bf16.gmra.mrb[0].mxu0 %v4187
        %v4971 = vpop.f32.mrb[0].mxu0
        %v4972 = vadd.f32 0.0, %v4971
        %v4973 = vpop.f32.mrb[0].mxu0
        %v4974 = vpop.f32.mrb[0].mxu0
        %v4975 = vadd.f32 0.0, %v4974
        %v4976 = vpop.f32.mrb[0].mxu0
        %4977 = vmatprep.mubr.bf16.mxu0 %v4192
        %4978 = vmatmul.mubr.bf16.gmra.mrb[0].mxu0 %v4191
        %v4979 = vpop.f32.mrb[0].mxu0
        %v4980 = vadd.f32 0.0, %v4979
        %v4981 = vpop.f32.mrb[0].mxu0
        %v4982 = vpop.f32.mrb[0].mxu0
        %v4983 = vpop.f32.mrb[0].mxu0
        %4984 = vdwg.mxu0
        %4985 = vmatprep.subr.bf16.mxu0 0
        %4986 = vmatpush1.bf16.msra.mxu0 %v4693
        %4987 = vmatprep.subr.bf16.mxu0 0
        %4988 = vmatpush1.bf16.msra.mxu0 %v4696
        %4989 = vmatprep.subr.bf16.mxu0 0
        %4990 = vmatpush1.bf16.msra.mxu0 %v4699
        %4991 = vmatprep.subr.bf16.mxu0 0
        %4992 = vmatpush1.bf16.msra.mxu0 %v4702
        %4993 = vmatprep.subr.bf16.mxu0 0
        %4994 = vmatpush1.bf16.msra.mxu0 %v4705
        %4995 = vmatprep.subr.bf16.mxu0 0
        %4996 = vmatpush1.bf16.msra.mxu0 %v4708
        %4997 = vmatprep.subr.bf16.mxu0 0
        %4998 = vmatpush1.bf16.msra.mxu0 %v4711
        %4999 = vmatprep.subr.bf16.mxu0 0
        %5000 = vmatpush1.bf16.msra.mxu0 %v4714
        %5001 = vmatprep.subr.bf16.mxu0 0
        %5002 = vmatpush1.bf16.msra.mxu0 %v4717
        %5003 = vmatprep.subr.bf16.mxu0 0
        %5004 = vmatpush1.bf16.msra.mxu0 %v4720
        %5005 = vmatprep.subr.bf16.mxu0 0
        %5006 = vmatpush1.bf16.msra.mxu0 %v4723
        %5007 = vmatprep.subr.bf16.mxu0 0
        %5008 = vmatpush1.bf16.msra.mxu0 %v4726
        %5009 = vmatprep.subr.bf16.mxu0 0
        %5010 = vmatpush1.bf16.msra.mxu0 %v4729
        %5011 = vmatprep.subr.bf16.mxu0 0
        %5012 = vmatpush1.bf16.msra.mxu0 %v4732
        %5013 = vmatprep.subr.bf16.mxu0 0
        %5014 = vmatpush1.bf16.msra.mxu0 %v4735
        %5015 = vmatprep.subr.bf16.mxu0 0
        %5016 = vmatpush1.bf16.msra.mxu0 %v4738
        %5017 = vmatprep.mubr.bf16.mxu0 %v4190
        %5018 = vmatmul.mubr.bf16.gmra.mrb[0].mxu0 %v4189
        %v5019 = vpop.f32.mrb[0].mxu0
        %v5020 = vadd.f32 %v4972, %v5019
        %v5021 = vpop.f32.mrb[0].mxu0
        %v5022 = vpop.f32.mrb[0].mxu0
        %v5023 = vadd.f32 %v4975, %v5022
        %v5024 = vpop.f32.mrb[0].mxu0
        %5025 = vmatprep.mubr.bf16.mxu0 %v4194
        %5026 = vmatmul.mubr.bf16.gmra.mrb[0].mxu0 %v4193
        %v5027 = vpop.f32.mrb[0].mxu0
        %v5028 = vadd.f32 %v4980, %v5027
        %v5029 = vpop.f32.mrb[0].mxu0
        %v5030 = vpop.f32.mrb[0].mxu0
        %v5031 = vpop.f32.mrb[0].mxu0
        %5032 = vdwg.mxu0
        %v5033 = vadd.f32 %v4178, %v4921
        %v5034 = vadd.f32 %v4179, %v4923
        %v5035 = vadd.f32 %v4180, %v5020
        %v5036 = vadd.f32 %v4181, %v4925
        %v5037 = vadd.f32 %v4182, %v4927
        %v5038 = vadd.f32 %v4183, %v5023
        %v5039 = vadd.f32 %v4184, %v4931
        %v5040 = vadd.f32 %v4185, %v4933
        %v5041 = vadd.f32 %v4186, %v5028
        %5042 = vst [vmem:[#allocation4] sm:$0xff] %v5033
        %5043 = vst [vmem:[#allocation4 + $0x8] sm:$0xff] %v5034
        %5044 = vst.msk [vmem:[#allocation4 + $0x10] sm:$0xff] %vm3918, %v5035
        %5045 = vst [vmem:[#allocation4 + $0x18] sm:$0xff] %v5036
        %5046 = vst [vmem:[#allocation4 + $0x20] sm:$0xff] %v5037
        %5047 = vst.msk [vmem:[#allocation4 + $0x28] sm:$0xff] %vm3918, %v5038
        %5048 = vst [vmem:[#allocation4 + $0x30] sm:$0xf] %v5039
        %5049 = vst [vmem:[#allocation4 + $0x38] sm:$0xf] %v5040
        %vm5050 = vcmask 355328
        %5051 = vst.msk [vmem:[#allocation4 + $0x40] sm:$0xf] %vm5050, %v5041
        %p5052 = scmp.eq.s32.totalorder %s24, 1
        // Predicated region
        $region96: #{gatn_forward.1} parent=86 // pred_check
          %p5053 = pneg %p5052
        $region97: #{gatn_forward.1} parent=86 // pred_check_branch
          %5055 = sbr.rel (%p5053) target = $region99
        $region98: #{gatn_forward.1} parent=86 // pred_region
          %v5056 = vld [vmem:[#allocation2] sm:$0xff]
          %v5057 = vld [vmem:[#allocation2 + $0x8] sm:$0xff]
          %v5058 = vld [vmem:[#allocation2 + $0x10] sm:$0xf]
          %v5059 = vld [vmem:[#allocation4] sm:$0xff]
          %v5060 = vld [vmem:[#allocation4 + $0x8] sm:$0xff]
          %v5061 = vld [vmem:[#allocation4 + $0x10] sm:$0xff]
          %v5062 = vld [vmem:[#allocation4 + $0x18] sm:$0xff]
          %v5063 = vld [vmem:[#allocation4 + $0x20] sm:$0xff]
          %v5064 = vld [vmem:[#allocation4 + $0x28] sm:$0xff]
          %v5065 = vld [vmem:[#allocation4 + $0x30] sm:$0xf]
          %v5066 = vld [vmem:[#allocation4 + $0x38] sm:$0xf]
          %v5067 = vld [vmem:[#allocation4 + $0x40] sm:$0xf]
          %vm5068 = vcmask 162816
          %v5070 = vsel %vm5068, %v5056, 0
          %v5073 = vsel %vm5068, %v5057, 0
          %v5076 = vsel %vm5068, %v5058, 0
          %vm5078 = vcmask 1043456
          %v5080 = vsel %vm5078, %v5065, 0
          %v5083 = vsel %vm5078, %v5066, 0
          %v5086 = vsel %vm5078, %v5067, 0
          %5088 = vmatprep.subr.mxu0 %v5060
          %5089 = vmatpush1.msra.mxu0 %v5059
          %5090 = vmatprep.subr.mxu0 %v5063
          %5091 = vmatpush1.msra.mxu0 %v5062
          %5092 = vmatprep.subr.mxu0 %v5083
          %5093 = vmatpush1.msra.mxu0 %v5080
          %5094 = vmatprep.subr.mxu0 0.0
          %5095 = vmatpush1.msra.mxu0 0.0
          %5096 = vmatprep.subr.mxu0 0.0
          %5097 = vmatpush1.msra.mxu0 0.0
          %5098 = vmatprep.subr.mxu0 0.0
          %5099 = vmatpush1.msra.mxu0 0.0
          %5100 = vmatprep.subr.mxu0 0.0
          %5101 = vmatpush1.msra.mxu0 0.0
          %5102 = vmatprep.subr.mxu0 0.0
          %5103 = vmatpush1.msra.mxu0 0.0
          %5104 = vmatprep.subr.mxu0 0.0
          %5105 = vmatpush1.msra.mxu0 0.0
          %5106 = vmatprep.subr.mxu0 0.0
          %5107 = vmatpush1.msra.mxu0 0.0
          %5108 = vmatprep.subr.mxu0 0.0
          %5109 = vmatpush1.msra.mxu0 0.0
          %5110 = vmatprep.subr.mxu0 0.0
          %5111 = vmatpush1.msra.mxu0 0.0
          %5112 = vmatprep.subr.mxu0 0.0
          %5113 = vmatpush1.msra.mxu0 0.0
          %5114 = vmatprep.subr.mxu0 0.0
          %5115 = vmatpush1.msra.mxu0 0.0
          %5116 = vmatprep.subr.mxu0 0.0
          %5117 = vmatpush1.msra.mxu0 0.0
          %5118 = vmatprep.subr.mxu0 0.0
          %5119 = vmatpush1.msra.mxu0 0.0
          %5120 = vmatprep.subr.mxu0 0.0
          %5121 = vmatpush1.msra.mxu0 0.0
          %5122 = vmatprep.subr.mxu0 0.0
          %5123 = vmatpush1.msra.mxu0 0.0
          %5124 = vmatprep.subr.mxu0 0.0
          %5125 = vmatpush1.msra.mxu0 0.0
          %5126 = vmatprep.subr.mxu0 0.0
          %5127 = vmatpush1.msra.mxu0 0.0
          %5128 = vmatprep.subr.mxu0 0.0
          %5129 = vmatpush1.msra.mxu0 0.0
          %5130 = vmatprep.subr.mxu0 0.0
          %5131 = vmatpush1.msra.mxu0 0.0
          %5132 = vmatprep.subr.mxu0 0.0
          %5133 = vmatpush1.msra.mxu0 0.0
          %5134 = vmatprep.subr.mxu0 0.0
          %5135 = vmatpush1.msra.mxu0 0.0
          %5136 = vmatprep.subr.mxu0 0.0
          %5137 = vmatpush1.msra.mxu0 0.0
          %5138 = vmatprep.subr.mxu0 0.0
          %5139 = vmatpush1.msra.mxu0 0.0
          %5140 = vmatprep.subr.mxu0 0.0
          %5141 = vmatpush1.msra.mxu0 0.0
          %5142 = vmatprep.subr.mxu0 0.0
          %5143 = vmatpush1.msra.mxu0 0.0
          %5144 = vmatprep.subr.mxu0 0.0
          %5145 = vmatpush1.msra.mxu0 0.0
          %5146 = vmatprep.subr.mxu0 0.0
          %5147 = vmatpush1.msra.mxu0 0.0
          %5148 = vmatprep.subr.mxu0 0.0
          %5149 = vmatpush1.msra.mxu0 0.0
          %5150 = vmatprep.subr.mxu0 0.0
          %5151 = vmatpush1.msra.mxu0 0.0
          %5152 = vmatprep.mubr.f32.mxu0 0.0
          %5153 = vmatmul.mubr.f32.gmra.mrb[0].mxu0 %v5070
          %v5154 = vpop.f32.mrb[0].mxu0
          %v5155 = vadd.f32 0.0, %v5154
          %v5156 = vpop.f32.mrb[0].mxu0
          %v5157 = vadd.f32 0.0, %v5156
          %5158 = vmatprep.mubr.f32.mxu0 0.0
          %5159 = vmatmul.mubr.f32.gmra.mrb[0].mxu0 %v5073
          %v5160 = vpop.f32.mrb[0].mxu0
          %v5161 = vadd.f32 0.0, %v5160
          %v5162 = vpop.f32.mrb[0].mxu0
          %v5163 = vadd.f32 0.0, %v5162
          %5164 = vmatprep.mubr.f32.mxu0 0.0
          %5165 = vmatmul.mubr.f32.gmra.mrb[0].mxu0 %v5076
          %v5166 = vpop.f32.mrb[0].mxu0
          %v5167 = vadd.f32 0.0, %v5166
          %v5168 = vpop.f32.mrb[0].mxu0
          %v5169 = vadd.f32 0.0, %v5168
          %5170 = vdwg.mxu0
          %5171 = vmatprep.subr.mxu0 0.0
          %5172 = vmatpush1.msra.mxu0 %v5061
          %5173 = vmatprep.subr.mxu0 0.0
          %5174 = vmatpush1.msra.mxu0 %v5064
          %5175 = vmatprep.subr.mxu0 0.0
          %5176 = vmatpush1.msra.mxu0 %v5086
          %5177 = vmatprep.subr.mxu0 0.0
          %5178 = vmatpush1.msra.mxu0 0.0
          %5179 = vmatprep.subr.mxu0 0.0
          %5180 = vmatpush1.msra.mxu0 0.0
          %5181 = vmatprep.subr.mxu0 0.0
          %5182 = vmatpush1.msra.mxu0 0.0
          %5183 = vmatprep.subr.mxu0 0.0
          %5184 = vmatpush1.msra.mxu0 0.0
          %5185 = vmatprep.subr.mxu0 0.0
          %5186 = vmatpush1.msra.mxu0 0.0
          %5187 = vmatprep.subr.mxu0 0.0
          %5188 = vmatpush1.msra.mxu0 0.0
          %5189 = vmatprep.subr.mxu0 0.0
          %5190 = vmatpush1.msra.mxu0 0.0
          %5191 = vmatprep.subr.mxu0 0.0
          %5192 = vmatpush1.msra.mxu0 0.0
          %5193 = vmatprep.subr.mxu0 0.0
          %5194 = vmatpush1.msra.mxu0 0.0
          %5195 = vmatprep.subr.mxu0 0.0
          %5196 = vmatpush1.msra.mxu0 0.0
          %5197 = vmatprep.subr.mxu0 0.0
          %5198 = vmatpush1.msra.mxu0 0.0
          %5199 = vmatprep.subr.mxu0 0.0
          %5200 = vmatpush1.msra.mxu0 0.0
          %5201 = vmatprep.subr.mxu0 0.0
          %5202 = vmatpush1.msra.mxu0 0.0
          %5203 = vmatprep.subr.mxu0 0.0
          %5204 = vmatpush1.msra.mxu0 0.0
          %5205 = vmatprep.subr.mxu0 0.0
          %5206 = vmatpush1.msra.mxu0 0.0
          %5207 = vmatprep.subr.mxu0 0.0
          %5208 = vmatpush1.msra.mxu0 0.0
          %5209 = vmatprep.subr.mxu0 0.0
          %5210 = vmatpush1.msra.mxu0 0.0
          %5211 = vmatprep.subr.mxu0 0.0
          %5212 = vmatpush1.msra.mxu0 0.0
          %5213 = vmatprep.subr.mxu0 0.0
          %5214 = vmatpush1.msra.mxu0 0.0
          %5215 = vmatprep.subr.mxu0 0.0
          %5216 = vmatpush1.msra.mxu0 0.0
          %5217 = vmatprep.subr.mxu0 0.0
          %5218 = vmatpush1.msra.mxu0 0.0
          %5219 = vmatprep.subr.mxu0 0.0
          %5220 = vmatpush1.msra.mxu0 0.0
          %5221 = vmatprep.subr.mxu0 0.0
          %5222 = vmatpush1.msra.mxu0 0.0
          %5223 = vmatprep.subr.mxu0 0.0
          %5224 = vmatpush1.msra.mxu0 0.0
          %5225 = vmatprep.subr.mxu0 0.0
          %5226 = vmatpush1.msra.mxu0 0.0
          %5227 = vmatprep.subr.mxu0 0.0
          %5228 = vmatpush1.msra.mxu0 0.0
          %5229 = vmatprep.subr.mxu0 0.0
          %5230 = vmatpush1.msra.mxu0 0.0
          %5231 = vmatprep.subr.mxu0 0.0
          %5232 = vmatpush1.msra.mxu0 0.0
          %5233 = vmatprep.subr.mxu0 0.0
          %5234 = vmatpush1.msra.mxu0 0.0
          %5235 = vmatprep.mubr.f32.mxu0 0.0
          %5236 = vmatmul.mubr.f32.gmra.mrb[0].mxu0 %v5070
          %v5237 = vpop.f32.mrb[0].mxu0
          %v5238 = vadd.f32 0.0, %v5237
          %v5239 = vpop.f32.mrb[0].mxu0
          %5240 = vmatprep.mubr.f32.mxu0 0.0
          %5241 = vmatmul.mubr.f32.gmra.mrb[0].mxu0 %v5073
          %v5242 = vpop.f32.mrb[0].mxu0
          %v5243 = vadd.f32 0.0, %v5242
          %v5244 = vpop.f32.mrb[0].mxu0
          %5245 = vmatprep.mubr.f32.mxu0 0.0
          %5246 = vmatmul.mubr.f32.gmra.mrb[0].mxu0 %v5076
          %v5247 = vpop.f32.mrb[0].mxu0
          %v5248 = vadd.f32 0.0, %v5247
          %v5249 = vpop.f32.mrb[0].mxu0
          %5250 = vdwg.mxu0
          %v5251 = vpack.c.bf16 %v5161, %v5155
          %v5252 = vpack.c.bf16 %v5163, %v5157
          %v5253 = vpack.c.bf16 %v5243, %v5238
          %v5254 = vpack.c.bf16 %v5167, %v5167
          %v5255 = vpack.c.bf16 %v5169, %v5169
          %v5256 = vpack.c.bf16 %v5248, %v5248
          %5257 = vxpose.xlu0.c.b16.start [1/8] %v5251, 128
          %5258 = vxpose.xlu0.c.b16.cont [2/8] %v5254, 128
          %5259 = vxpose.xlu0.c.b16.cont [3/8] 0, 128
          %5260 = vxpose.xlu0.c.b16.cont [4/8] 0, 128
          %5261 = vxpose.xlu0.c.b16.cont [5/8] 0, 128
          %5262 = vxpose.xlu0.c.b16.cont [6/8] 0, 128
          %5263 = vxpose.xlu0.c.b16.cont [7/8] 0, 128
          %5264 = vxpose.xlu0.c.b16.end [8/8] 0, 128
          %v5265 = vpop.trf.xlu0
          %v5266 = vpop.trf.xlu0
          %v5267 = vpop.trf.xlu0
          %v5268 = vpop.trf.xlu0
          %v5269 = vpop.trf.xlu0
          %v5270 = vpop.trf.xlu0
          %v5271 = vpop.trf.xlu0
          %v5272 = vpop.trf.xlu0
          %5273 = vxpose.xlu0.c.b16.start [1/8] %v5252, 128
          %5274 = vxpose.xlu0.c.b16.cont [2/8] %v5255, 128
          %5275 = vxpose.xlu0.c.b16.cont [3/8] 0, 128
          %5276 = vxpose.xlu0.c.b16.cont [4/8] 0, 128
          %5277 = vxpose.xlu0.c.b16.cont [5/8] 0, 128
          %5278 = vxpose.xlu0.c.b16.cont [6/8] 0, 128
          %5279 = vxpose.xlu0.c.b16.cont [7/8] 0, 128
          %5280 = vxpose.xlu0.c.b16.end [8/8] 0, 128
          %v5281 = vpop.trf.xlu0
          %v5282 = vpop.trf.xlu0
          %v5283 = vpop.trf.xlu0
          %v5284 = vpop.trf.xlu0
          %v5285 = vpop.trf.xlu0
          %v5286 = vpop.trf.xlu0
          %v5287 = vpop.trf.xlu0
          %v5288 = vpop.trf.xlu0
          %5289 = vxpose.xlu0.c.b16.start [1/8] %v5253, 128
          %5290 = vxpose.xlu0.c.b16.cont [2/8] %v5256, 128
          %5291 = vxpose.xlu0.c.b16.cont [3/8] 0, 128
          %5292 = vxpose.xlu0.c.b16.cont [4/8] 0, 128
          %5293 = vxpose.xlu0.c.b16.cont [5/8] 0, 128
          %5294 = vxpose.xlu0.c.b16.cont [6/8] 0, 128
          %5295 = vxpose.xlu0.c.b16.cont [7/8] 0, 128
          %5296 = vxpose.xlu0.c.b16.end [8/8] 0, 128
          %v5297 = vpop.trf.xlu0
          %v5298 = vpop.trf.xlu0
          %v5299 = vpop.trf.xlu0
          %v5300 = vpop.trf.xlu0
          %v5301 = vpop.trf.xlu0
          %v5302 = vpop.trf.xlu0
          %v5303 = vpop.trf.xlu0
          %v5304 = vpop.trf.xlu0
          %v5306 = vsel %vm5068, %v5265, 0
          %v5309 = vsel %vm5068, %v5266, 0
          %v5312 = vsel %vm5068, %v5267, 0
          %v5315 = vsel %vm5068, %v5268, 0
          %v5318 = vsel %vm5068, %v5269, 0
          %v5321 = vsel %vm5068, %v5270, 0
          %v5324 = vsel %vm5068, %v5271, 0
          %v5327 = vsel %vm5068, %v5272, 0
          %v5330 = vsel %vm5068, %v5281, 0
          %v5333 = vsel %vm5068, %v5282, 0
          %v5336 = vsel %vm5068, %v5283, 0
          %v5339 = vsel %vm5068, %v5284, 0
          %v5342 = vsel %vm5068, %v5285, 0
          %v5345 = vsel %vm5068, %v5286, 0
          %v5348 = vsel %vm5068, %v5287, 0
          %v5351 = vsel %vm5068, %v5288, 0
          %v5354 = vsel %vm5068, %v5297, 0
          %v5357 = vsel %vm5068, %v5298, 0
          %v5360 = vsel %vm5068, %v5299, 0
          %vm5362 = vcmask 1041408
          %v5364 = vsel %vm5362, %v5254, 0
          %v5367 = vsel %vm5362, %v5255, 0
          %v5370 = vsel %vm5362, %v5256, 0
          %5372 = vmatprep.subr.bf16.mxu0 %v5252
          %5373 = vmatpush1.bf16.msra.mxu0 %v5251
          %5374 = vmatprep.subr.bf16.mxu0 %v5367
          %5375 = vmatpush1.bf16.msra.mxu0 %v5364
          %5376 = vmatprep.subr.bf16.mxu0 0
          %5377 = vmatpush1.bf16.msra.mxu0 0
          %5378 = vmatprep.subr.bf16.mxu0 0
          %5379 = vmatpush1.bf16.msra.mxu0 0
          %5380 = vmatprep.subr.bf16.mxu0 0
          %5381 = vmatpush1.bf16.msra.mxu0 0
          %5382 = vmatprep.subr.bf16.mxu0 0
          %5383 = vmatpush1.bf16.msra.mxu0 0
          %5384 = vmatprep.subr.bf16.mxu0 0
          %5385 = vmatpush1.bf16.msra.mxu0 0
          %5386 = vmatprep.subr.bf16.mxu0 0
          %5387 = vmatpush1.bf16.msra.mxu0 0
          %5388 = vmatprep.subr.bf16.mxu0 0
          %5389 = vmatpush1.bf16.msra.mxu0 0
          %5390 = vmatprep.subr.bf16.mxu0 0
          %5391 = vmatpush1.bf16.msra.mxu0 0
          %5392 = vmatprep.subr.bf16.mxu0 0
          %5393 = vmatpush1.bf16.msra.mxu0 0
          %5394 = vmatprep.subr.bf16.mxu0 0
          %5395 = vmatpush1.bf16.msra.mxu0 0
          %5396 = vmatprep.subr.bf16.mxu0 0
          %5397 = vmatpush1.bf16.msra.mxu0 0
          %5398 = vmatprep.subr.bf16.mxu0 0
          %5399 = vmatpush1.bf16.msra.mxu0 0
          %5400 = vmatprep.subr.bf16.mxu0 0
          %5401 = vmatpush1.bf16.msra.mxu0 0
          %5402 = vmatprep.subr.bf16.mxu0 0
          %5403 = vmatpush1.bf16.msra.mxu0 0
          %5404 = vmatprep.mubr.bf16.mxu0 0
          %5405 = vmatmul.mubr.bf16.gmra.mrb[0].mxu0 %v5306
          %v5406 = vpop.f32.mrb[0].mxu0
          %v5407 = vadd.f32 0.0, %v5406
          %v5408 = vpop.f32.mrb[0].mxu0
          %v5409 = vadd.f32 0.0, %v5408
          %v5410 = vpop.f32.mrb[0].mxu0
          %v5411 = vadd.f32 0.0, %v5410
          %v5412 = vpop.f32.mrb[0].mxu0
          %v5413 = vadd.f32 0.0, %v5412
          %5414 = vmatprep.mubr.bf16.mxu0 0
          %5415 = vmatmul.mubr.bf16.gmra.mrb[0].mxu0 %v5309
          %v5416 = vpop.f32.mrb[0].mxu0
          %v5417 = vadd.f32 0.0, %v5416
          %v5418 = vpop.f32.mrb[0].mxu0
          %v5419 = vadd.f32 0.0, %v5418
          %v5420 = vpop.f32.mrb[0].mxu0
          %v5421 = vadd.f32 0.0, %v5420
          %v5422 = vpop.f32.mrb[0].mxu0
          %v5423 = vadd.f32 0.0, %v5422
          %5424 = vmatprep.mubr.bf16.mxu0 0
          %5425 = vmatmul.mubr.bf16.gmra.mrb[0].mxu0 %v5312
          %v5426 = vpop.f32.mrb[0].mxu0
          %v5427 = vadd.f32 0.0, %v5426
          %v5428 = vpop.f32.mrb[0].mxu0
          %v5429 = vadd.f32 0.0, %v5428
          %v5430 = vpop.f32.mrb[0].mxu0
          %v5431 = vadd.f32 0.0, %v5430
          %v5432 = vpop.f32.mrb[0].mxu0
          %v5433 = vadd.f32 0.0, %v5432
          %5434 = vmatprep.mubr.bf16.mxu0 0
          %5435 = vmatmul.mubr.bf16.gmra.mrb[0].mxu0 %v5315
          %v5436 = vpop.f32.mrb[0].mxu0
          %v5437 = vadd.f32 0.0, %v5436
          %v5438 = vpop.f32.mrb[0].mxu0
          %v5439 = vadd.f32 0.0, %v5438
          %v5440 = vpop.f32.mrb[0].mxu0
          %v5441 = vadd.f32 0.0, %v5440
          %v5442 = vpop.f32.mrb[0].mxu0
          %v5443 = vadd.f32 0.0, %v5442
          %5444 = vmatprep.mubr.bf16.mxu0 0
          %5445 = vmatmul.mubr.bf16.gmra.mrb[0].mxu0 %v5318
          %v5446 = vpop.f32.mrb[0].mxu0
          %v5447 = vadd.f32 0.0, %v5446
          %v5448 = vpop.f32.mrb[0].mxu0
          %v5449 = vadd.f32 0.0, %v5448
          %v5450 = vpop.f32.mrb[0].mxu0
          %v5451 = vadd.f32 0.0, %v5450
          %v5452 = vpop.f32.mrb[0].mxu0
          %v5453 = vadd.f32 0.0, %v5452
          %5454 = vmatprep.mubr.bf16.mxu0 0
          %5455 = vmatmul.mubr.bf16.gmra.mrb[0].mxu0 %v5321
          %v5456 = vpop.f32.mrb[0].mxu0
          %v5457 = vadd.f32 0.0, %v5456
          %v5458 = vpop.f32.mrb[0].mxu0
          %v5459 = vadd.f32 0.0, %v5458
          %v5460 = vpop.f32.mrb[0].mxu0
          %v5461 = vadd.f32 0.0, %v5460
          %v5462 = vpop.f32.mrb[0].mxu0
          %v5463 = vadd.f32 0.0, %v5462
          %5464 = vmatprep.mubr.bf16.mxu0 0
          %5465 = vmatmul.mubr.bf16.gmra.mrb[0].mxu0 %v5324
          %v5466 = vpop.f32.mrb[0].mxu0
          %v5467 = vadd.f32 0.0, %v5466
          %v5468 = vpop.f32.mrb[0].mxu0
          %v5469 = vadd.f32 0.0, %v5468
          %v5470 = vpop.f32.mrb[0].mxu0
          %v5471 = vadd.f32 0.0, %v5470
          %v5472 = vpop.f32.mrb[0].mxu0
          %v5473 = vadd.f32 0.0, %v5472
          %5474 = vmatprep.mubr.bf16.mxu0 0
          %5475 = vmatmul.mubr.bf16.gmra.mrb[0].mxu0 %v5327
          %v5476 = vpop.f32.mrb[0].mxu0
          %v5477 = vadd.f32 0.0, %v5476
          %v5478 = vpop.f32.mrb[0].mxu0
          %v5479 = vadd.f32 0.0, %v5478
          %v5480 = vpop.f32.mrb[0].mxu0
          %v5481 = vadd.f32 0.0, %v5480
          %v5482 = vpop.f32.mrb[0].mxu0
          %v5483 = vadd.f32 0.0, %v5482
          %5484 = vmatprep.mubr.bf16.mxu0 0
          %5485 = vmatmul.mubr.bf16.gmra.mrb[0].mxu0 %v5330
          %v5486 = vpop.f32.mrb[0].mxu0
          %v5487 = vadd.f32 0.0, %v5486
          %v5488 = vpop.f32.mrb[0].mxu0
          %v5489 = vadd.f32 0.0, %v5488
          %v5490 = vpop.f32.mrb[0].mxu0
          %v5491 = vadd.f32 0.0, %v5490
          %v5492 = vpop.f32.mrb[0].mxu0
          %v5493 = vadd.f32 0.0, %v5492
          %5494 = vmatprep.mubr.bf16.mxu0 0
          %5495 = vmatmul.mubr.bf16.gmra.mrb[0].mxu0 %v5333
          %v5496 = vpop.f32.mrb[0].mxu0
          %v5497 = vadd.f32 0.0, %v5496
          %v5498 = vpop.f32.mrb[0].mxu0
          %v5499 = vadd.f32 0.0, %v5498
          %v5500 = vpop.f32.mrb[0].mxu0
          %v5501 = vadd.f32 0.0, %v5500
          %v5502 = vpop.f32.mrb[0].mxu0
          %v5503 = vadd.f32 0.0, %v5502
          %5504 = vmatprep.mubr.bf16.mxu0 0
          %5505 = vmatmul.mubr.bf16.gmra.mrb[0].mxu0 %v5336
          %v5506 = vpop.f32.mrb[0].mxu0
          %v5507 = vadd.f32 0.0, %v5506
          %v5508 = vpop.f32.mrb[0].mxu0
          %v5509 = vadd.f32 0.0, %v5508
          %v5510 = vpop.f32.mrb[0].mxu0
          %v5511 = vadd.f32 0.0, %v5510
          %v5512 = vpop.f32.mrb[0].mxu0
          %v5513 = vadd.f32 0.0, %v5512
          %5514 = vmatprep.mubr.bf16.mxu0 0
          %5515 = vmatmul.mubr.bf16.gmra.mrb[0].mxu0 %v5339
          %v5516 = vpop.f32.mrb[0].mxu0
          %v5517 = vadd.f32 0.0, %v5516
          %v5518 = vpop.f32.mrb[0].mxu0
          %v5519 = vadd.f32 0.0, %v5518
          %v5520 = vpop.f32.mrb[0].mxu0
          %v5521 = vadd.f32 0.0, %v5520
          %v5522 = vpop.f32.mrb[0].mxu0
          %v5523 = vadd.f32 0.0, %v5522
          %5524 = vmatprep.mubr.bf16.mxu0 0
          %5525 = vmatmul.mubr.bf16.gmra.mrb[0].mxu0 %v5342
          %v5526 = vpop.f32.mrb[0].mxu0
          %v5527 = vadd.f32 0.0, %v5526
          %v5528 = vpop.f32.mrb[0].mxu0
          %v5529 = vadd.f32 0.0, %v5528
          %v5530 = vpop.f32.mrb[0].mxu0
          %v5531 = vadd.f32 0.0, %v5530
          %v5532 = vpop.f32.mrb[0].mxu0
          %v5533 = vadd.f32 0.0, %v5532
          %5534 = vmatprep.mubr.bf16.mxu0 0
          %5535 = vmatmul.mubr.bf16.gmra.mrb[0].mxu0 %v5345
          %v5536 = vpop.f32.mrb[0].mxu0
          %v5537 = vadd.f32 0.0, %v5536
          %v5538 = vpop.f32.mrb[0].mxu0
          %v5539 = vadd.f32 0.0, %v5538
          %v5540 = vpop.f32.mrb[0].mxu0
          %v5541 = vadd.f32 0.0, %v5540
          %v5542 = vpop.f32.mrb[0].mxu0
          %v5543 = vadd.f32 0.0, %v5542
          %5544 = vmatprep.mubr.bf16.mxu0 0
          %5545 = vmatmul.mubr.bf16.gmra.mrb[0].mxu0 %v5348
          %v5546 = vpop.f32.mrb[0].mxu0
          %v5547 = vadd.f32 0.0, %v5546
          %v5548 = vpop.f32.mrb[0].mxu0
          %v5549 = vadd.f32 0.0, %v5548
          %v5550 = vpop.f32.mrb[0].mxu0
          %v5551 = vadd.f32 0.0, %v5550
          %v5552 = vpop.f32.mrb[0].mxu0
          %v5553 = vadd.f32 0.0, %v5552
          %5554 = vmatprep.mubr.bf16.mxu0 0
          %5555 = vmatmul.mubr.bf16.gmra.mrb[0].mxu0 %v5351
          %v5556 = vpop.f32.mrb[0].mxu0
          %v5557 = vadd.f32 0.0, %v5556
          %v5558 = vpop.f32.mrb[0].mxu0
          %v5559 = vadd.f32 0.0, %v5558
          %v5560 = vpop.f32.mrb[0].mxu0
          %v5561 = vadd.f32 0.0, %v5560
          %v5562 = vpop.f32.mrb[0].mxu0
          %v5563 = vadd.f32 0.0, %v5562
          %5564 = vmatprep.mubr.bf16.mxu0 0
          %5565 = vmatmul.mubr.bf16.gmra.mrb[0].mxu0 %v5354
          %v5566 = vpop.f32.mrb[0].mxu0
          %v5567 = vadd.f32 0.0, %v5566
          %v5568 = vpop.f32.mrb[0].mxu0
          %v5569 = vadd.f32 0.0, %v5568
          %v5570 = vpop.f32.mrb[0].mxu0
          %v5571 = vadd.f32 0.0, %v5570
          %v5572 = vpop.f32.mrb[0].mxu0
          %v5573 = vadd.f32 0.0, %v5572
          %5574 = vmatprep.mubr.bf16.mxu0 0
          %5575 = vmatmul.mubr.bf16.gmra.mrb[0].mxu0 %v5357
          %v5576 = vpop.f32.mrb[0].mxu0
          %v5577 = vadd.f32 0.0, %v5576
          %v5578 = vpop.f32.mrb[0].mxu0
          %v5579 = vadd.f32 0.0, %v5578
          %v5580 = vpop.f32.mrb[0].mxu0
          %v5581 = vadd.f32 0.0, %v5580
          %v5582 = vpop.f32.mrb[0].mxu0
          %v5583 = vadd.f32 0.0, %v5582
          %5584 = vmatprep.mubr.bf16.mxu0 0
          %5585 = vmatmul.mubr.bf16.gmra.mrb[0].mxu0 %v5360
          %v5586 = vpop.f32.mrb[0].mxu0
          %v5587 = vadd.f32 0.0, %v5586
          %v5588 = vpop.f32.mrb[0].mxu0
          %v5589 = vadd.f32 0.0, %v5588
          %v5590 = vpop.f32.mrb[0].mxu0
          %v5591 = vadd.f32 0.0, %v5590
          %v5592 = vpop.f32.mrb[0].mxu0
          %v5593 = vadd.f32 0.0, %v5592
          %5594 = vdwg.mxu0
          %5595 = vmatprep.subr.bf16.mxu0 0
          %5596 = vmatpush1.bf16.msra.mxu0 %v5253
          %5597 = vmatprep.subr.bf16.mxu0 0
          %5598 = vmatpush1.bf16.msra.mxu0 %v5370
          %5599 = vmatprep.subr.bf16.mxu0 0
          %5600 = vmatpush1.bf16.msra.mxu0 0
          %5601 = vmatprep.subr.bf16.mxu0 0
          %5602 = vmatpush1.bf16.msra.mxu0 0
          %5603 = vmatprep.subr.bf16.mxu0 0
          %5604 = vmatpush1.bf16.msra.mxu0 0
          %5605 = vmatprep.subr.bf16.mxu0 0
          %5606 = vmatpush1.bf16.msra.mxu0 0
          %5607 = vmatprep.subr.bf16.mxu0 0
          %5608 = vmatpush1.bf16.msra.mxu0 0
          %5609 = vmatprep.subr.bf16.mxu0 0
          %5610 = vmatpush1.bf16.msra.mxu0 0
          %5611 = vmatprep.subr.bf16.mxu0 0
          %5612 = vmatpush1.bf16.msra.mxu0 0
          %5613 = vmatprep.subr.bf16.mxu0 0
          %5614 = vmatpush1.bf16.msra.mxu0 0
          %5615 = vmatprep.subr.bf16.mxu0 0
          %5616 = vmatpush1.bf16.msra.mxu0 0
          %5617 = vmatprep.subr.bf16.mxu0 0
          %5618 = vmatpush1.bf16.msra.mxu0 0
          %5619 = vmatprep.subr.bf16.mxu0 0
          %5620 = vmatpush1.bf16.msra.mxu0 0
          %5621 = vmatprep.subr.bf16.mxu0 0
          %5622 = vmatpush1.bf16.msra.mxu0 0
          %5623 = vmatprep.subr.bf16.mxu0 0
          %5624 = vmatpush1.bf16.msra.mxu0 0
          %5625 = vmatprep.subr.bf16.mxu0 0
          %5626 = vmatpush1.bf16.msra.mxu0 0
          %5627 = vmatprep.mubr.bf16.mxu0 0
          %5628 = vmatmul.mubr.bf16.gmra.mrb[0].mxu0 %v5306
          %v5629 = vpop.f32.mrb[0].mxu0
          %v5630 = vadd.f32 0.0, %v5629
          %v5631 = vpop.f32.mrb[0].mxu0
          %v5632 = vpop.f32.mrb[0].mxu0
          %v5633 = vadd.f32 0.0, %v5632
          %v5634 = vpop.f32.mrb[0].mxu0
          %5635 = vmatprep.mubr.bf16.mxu0 0
          %5636 = vmatmul.mubr.bf16.gmra.mrb[0].mxu0 %v5309
          %v5637 = vpop.f32.mrb[0].mxu0
          %v5638 = vadd.f32 0.0, %v5637
          %v5639 = vpop.f32.mrb[0].mxu0
          %v5640 = vpop.f32.mrb[0].mxu0
          %v5641 = vadd.f32 0.0, %v5640
          %v5642 = vpop.f32.mrb[0].mxu0
          %5643 = vmatprep.mubr.bf16.mxu0 0
          %5644 = vmatmul.mubr.bf16.gmra.mrb[0].mxu0 %v5312
          %v5645 = vpop.f32.mrb[0].mxu0
          %v5646 = vadd.f32 0.0, %v5645
          %v5647 = vpop.f32.mrb[0].mxu0
          %v5648 = vpop.f32.mrb[0].mxu0
          %v5649 = vadd.f32 0.0, %v5648
          %v5650 = vpop.f32.mrb[0].mxu0
          %5651 = vmatprep.mubr.bf16.mxu0 0
          %5652 = vmatmul.mubr.bf16.gmra.mrb[0].mxu0 %v5315
          %v5653 = vpop.f32.mrb[0].mxu0
          %v5654 = vadd.f32 0.0, %v5653
          %v5655 = vpop.f32.mrb[0].mxu0
          %v5656 = vpop.f32.mrb[0].mxu0
          %v5657 = vadd.f32 0.0, %v5656
          %v5658 = vpop.f32.mrb[0].mxu0
          %5659 = vmatprep.mubr.bf16.mxu0 0
          %5660 = vmatmul.mubr.bf16.gmra.mrb[0].mxu0 %v5318
          %v5661 = vpop.f32.mrb[0].mxu0
          %v5662 = vadd.f32 0.0, %v5661
          %v5663 = vpop.f32.mrb[0].mxu0
          %v5664 = vpop.f32.mrb[0].mxu0
          %v5665 = vadd.f32 0.0, %v5664
          %v5666 = vpop.f32.mrb[0].mxu0
          %5667 = vmatprep.mubr.bf16.mxu0 0
          %5668 = vmatmul.mubr.bf16.gmra.mrb[0].mxu0 %v5321
          %v5669 = vpop.f32.mrb[0].mxu0
          %v5670 = vadd.f32 0.0, %v5669
          %v5671 = vpop.f32.mrb[0].mxu0
          %v5672 = vpop.f32.mrb[0].mxu0
          %v5673 = vadd.f32 0.0, %v5672
          %v5674 = vpop.f32.mrb[0].mxu0
          %5675 = vmatprep.mubr.bf16.mxu0 0
          %5676 = vmatmul.mubr.bf16.gmra.mrb[0].mxu0 %v5324
          %v5677 = vpop.f32.mrb[0].mxu0
          %v5678 = vadd.f32 0.0, %v5677
          %v5679 = vpop.f32.mrb[0].mxu0
          %v5680 = vpop.f32.mrb[0].mxu0
          %v5681 = vadd.f32 0.0, %v5680
          %v5682 = vpop.f32.mrb[0].mxu0
          %5683 = vmatprep.mubr.bf16.mxu0 0
          %5684 = vmatmul.mubr.bf16.gmra.mrb[0].mxu0 %v5327
          %v5685 = vpop.f32.mrb[0].mxu0
          %v5686 = vadd.f32 0.0, %v5685
          %v5687 = vpop.f32.mrb[0].mxu0
          %v5688 = vpop.f32.mrb[0].mxu0
          %v5689 = vadd.f32 0.0, %v5688
          %v5690 = vpop.f32.mrb[0].mxu0
          %5691 = vmatprep.mubr.bf16.mxu0 0
          %5692 = vmatmul.mubr.bf16.gmra.mrb[0].mxu0 %v5330
          %v5693 = vpop.f32.mrb[0].mxu0
          %v5694 = vadd.f32 0.0, %v5693
          %v5695 = vpop.f32.mrb[0].mxu0
          %v5696 = vpop.f32.mrb[0].mxu0
          %v5697 = vadd.f32 0.0, %v5696
          %v5698 = vpop.f32.mrb[0].mxu0
          %5699 = vmatprep.mubr.bf16.mxu0 0
          %5700 = vmatmul.mubr.bf16.gmra.mrb[0].mxu0 %v5333
          %v5701 = vpop.f32.mrb[0].mxu0
          %v5702 = vadd.f32 0.0, %v5701
          %v5703 = vpop.f32.mrb[0].mxu0
          %v5704 = vpop.f32.mrb[0].mxu0
          %v5705 = vadd.f32 0.0, %v5704
          %v5706 = vpop.f32.mrb[0].mxu0
          %5707 = vmatprep.mubr.bf16.mxu0 0
          %5708 = vmatmul.mubr.bf16.gmra.mrb[0].mxu0 %v5336
          %v5709 = vpop.f32.mrb[0].mxu0
          %v5710 = vadd.f32 0.0, %v5709
          %v5711 = vpop.f32.mrb[0].mxu0
          %v5712 = vpop.f32.mrb[0].mxu0
          %v5713 = vadd.f32 0.0, %v5712
          %v5714 = vpop.f32.mrb[0].mxu0
          %5715 = vmatprep.mubr.bf16.mxu0 0
          %5716 = vmatmul.mubr.bf16.gmra.mrb[0].mxu0 %v5339
          %v5717 = vpop.f32.mrb[0].mxu0
          %v5718 = vadd.f32 0.0, %v5717
          %v5719 = vpop.f32.mrb[0].mxu0
          %v5720 = vpop.f32.mrb[0].mxu0
          %v5721 = vadd.f32 0.0, %v5720
          %v5722 = vpop.f32.mrb[0].mxu0
          %5723 = vmatprep.mubr.bf16.mxu0 0
          %5724 = vmatmul.mubr.bf16.gmra.mrb[0].mxu0 %v5342
          %v5725 = vpop.f32.mrb[0].mxu0
          %v5726 = vadd.f32 0.0, %v5725
          %v5727 = vpop.f32.mrb[0].mxu0
          %v5728 = vpop.f32.mrb[0].mxu0
          %v5729 = vadd.f32 0.0, %v5728
          %v5730 = vpop.f32.mrb[0].mxu0
          %5731 = vmatprep.mubr.bf16.mxu0 0
          %5732 = vmatmul.mubr.bf16.gmra.mrb[0].mxu0 %v5345
          %v5733 = vpop.f32.mrb[0].mxu0
          %v5734 = vadd.f32 0.0, %v5733
          %v5735 = vpop.f32.mrb[0].mxu0
          %v5736 = vpop.f32.mrb[0].mxu0
          %v5737 = vadd.f32 0.0, %v5736
          %v5738 = vpop.f32.mrb[0].mxu0
          %5739 = vmatprep.mubr.bf16.mxu0 0
          %5740 = vmatmul.mubr.bf16.gmra.mrb[0].mxu0 %v5348
          %v5741 = vpop.f32.mrb[0].mxu0
          %v5742 = vadd.f32 0.0, %v5741
          %v5743 = vpop.f32.mrb[0].mxu0
          %v5744 = vpop.f32.mrb[0].mxu0
          %v5745 = vadd.f32 0.0, %v5744
          %v5746 = vpop.f32.mrb[0].mxu0
          %5747 = vmatprep.mubr.bf16.mxu0 0
          %5748 = vmatmul.mubr.bf16.gmra.mrb[0].mxu0 %v5351
          %v5749 = vpop.f32.mrb[0].mxu0
          %v5750 = vadd.f32 0.0, %v5749
          %v5751 = vpop.f32.mrb[0].mxu0
          %v5752 = vpop.f32.mrb[0].mxu0
          %v5753 = vadd.f32 0.0, %v5752
          %v5754 = vpop.f32.mrb[0].mxu0
          %5755 = vmatprep.mubr.bf16.mxu0 0
          %5756 = vmatmul.mubr.bf16.gmra.mrb[0].mxu0 %v5354
          %v5757 = vpop.f32.mrb[0].mxu0
          %v5758 = vadd.f32 0.0, %v5757
          %v5759 = vpop.f32.mrb[0].mxu0
          %v5760 = vpop.f32.mrb[0].mxu0
          %v5761 = vadd.f32 0.0, %v5760
          %v5762 = vpop.f32.mrb[0].mxu0
          %5763 = vmatprep.mubr.bf16.mxu0 0
          %5764 = vmatmul.mubr.bf16.gmra.mrb[0].mxu0 %v5357
          %v5765 = vpop.f32.mrb[0].mxu0
          %v5766 = vadd.f32 0.0, %v5765
          %v5767 = vpop.f32.mrb[0].mxu0
          %v5768 = vpop.f32.mrb[0].mxu0
          %v5769 = vadd.f32 0.0, %v5768
          %v5770 = vpop.f32.mrb[0].mxu0
          %5771 = vmatprep.mubr.bf16.mxu0 0
          %5772 = vmatmul.mubr.bf16.gmra.mrb[0].mxu0 %v5360
          %v5773 = vpop.f32.mrb[0].mxu0
          %v5774 = vadd.f32 0.0, %v5773
          %v5775 = vpop.f32.mrb[0].mxu0
          %v5776 = vpop.f32.mrb[0].mxu0
          %v5777 = vadd.f32 0.0, %v5776
          %v5778 = vpop.f32.mrb[0].mxu0
          %5779 = vdwg.mxu0
          %5780 = vst [vmem:[#allocation6] sm:$0xff] %v5407
          %5781 = vst [vmem:[#allocation6 + $0x8] sm:$0xff] %v5409
          %5782 = vst.msk [vmem:[#allocation6 + $0x10] sm:$0xff] %vm3918, %v5630
          %5783 = vst [vmem:[#allocation6 + $0x18] sm:$0xff] %v5411
          %5784 = vst [vmem:[#allocation6 + $0x20] sm:$0xff] %v5413
          %5785 = vst.msk [vmem:[#allocation6 + $0x28] sm:$0xff] %vm3918, %v5633
          %5786 = vst [vmem:[#allocation6 + $0x30] sm:$0xff] %v5417
          %5787 = vst [vmem:[#allocation6 + $0x38] sm:$0xff] %v5419
          %5788 = vst.msk [vmem:[#allocation6 + $0x40] sm:$0xff] %vm3918, %v5638
          %5789 = vst [vmem:[#allocation6 + $0x48] sm:$0xff] %v5421
          %5790 = vst [vmem:[#allocation6 + $0x50] sm:$0xff] %v5423
          %5791 = vst.msk [vmem:[#allocation6 + $0x58] sm:$0xff] %vm3918, %v5641
          %5792 = vst [vmem:[#allocation6 + $0x60] sm:$0xff] %v5427
          %5793 = vst [vmem:[#allocation6 + $0x68] sm:$0xff] %v5429
          %5794 = vst.msk [vmem:[#allocation6 + $0x70] sm:$0xff] %vm3918, %v5646
          %5795 = vst [vmem:[#allocation6 + $0x78] sm:$0xff] %v5431
          %5796 = vst [vmem:[#allocation6 + $0x80] sm:$0xff] %v5433
          %5797 = vst.msk [vmem:[#allocation6 + $0x88] sm:$0xff] %vm3918, %v5649
          %5798 = vst [vmem:[#allocation6 + $0x90] sm:$0xff] %v5437
          %5799 = vst [vmem:[#allocation6 + $0x98] sm:$0xff] %v5439
          %5800 = vst.msk [vmem:[#allocation6 + $0xa0] sm:$0xff] %vm3918, %v5654
          %5801 = vst [vmem:[#allocation6 + $0xa8] sm:$0xff] %v5441
          %5802 = vst [vmem:[#allocation6 + $0xb0] sm:$0xff] %v5443
          %5803 = vst.msk [vmem:[#allocation6 + $0xb8] sm:$0xff] %vm3918, %v5657
          %5804 = vst [vmem:[#allocation6 + $0xc0] sm:$0xff] %v5447
          %5805 = vst [vmem:[#allocation6 + $0xc8] sm:$0xff] %v5449
          %5806 = vst.msk [vmem:[#allocation6 + $0xd0] sm:$0xff] %vm3918, %v5662
          %5807 = vst [vmem:[#allocation6 + $0xd8] sm:$0xff] %v5451
          %5808 = vst [vmem:[#allocation6 + $0xe0] sm:$0xff] %v5453
          %5809 = vst.msk [vmem:[#allocation6 + $0xe8] sm:$0xff] %vm3918, %v5665
          %5810 = vst [vmem:[#allocation6 + $0xf0] sm:$0xff] %v5457
          %5811 = vst [vmem:[#allocation6 + $0xf8] sm:$0xff] %v5459
          %5812 = vst.msk [vmem:[#allocation6 + $0x100] sm:$0xff] %vm3918, %v5670
          %5813 = vst [vmem:[#allocation6 + $0x108] sm:$0xff] %v5461
          %5814 = vst [vmem:[#allocation6 + $0x110] sm:$0xff] %v5463
          %5815 = vst.msk [vmem:[#allocation6 + $0x118] sm:$0xff] %vm3918, %v5673
          %5816 = vst [vmem:[#allocation6 + $0x120] sm:$0xff] %v5467
          %5817 = vst [vmem:[#allocation6 + $0x128] sm:$0xff] %v5469
          %5818 = vst.msk [vmem:[#allocation6 + $0x130] sm:$0xff] %vm3918, %v5678
          %5819 = vst [vmem:[#allocation6 + $0x138] sm:$0xff] %v5471
          %5820 = vst [vmem:[#allocation6 + $0x140] sm:$0xff] %v5473
          %5821 = vst.msk [vmem:[#allocation6 + $0x148] sm:$0xff] %vm3918, %v5681
          %5822 = vst [vmem:[#allocation6 + $0x150] sm:$0xff] %v5477
          %5823 = vst [vmem:[#allocation6 + $0x158] sm:$0xff] %v5479
          %5824 = vst.msk [vmem:[#allocation6 + $0x160] sm:$0xff] %vm3918, %v5686
          %5825 = vst [vmem:[#allocation6 + $0x168] sm:$0xff] %v5481
          %5826 = vst [vmem:[#allocation6 + $0x170] sm:$0xff] %v5483
          %5827 = vst.msk [vmem:[#allocation6 + $0x178] sm:$0xff] %vm3918, %v5689
          %5828 = vst [vmem:[#allocation6 + $0x180] sm:$0xff] %v5487
          %5829 = vst [vmem:[#allocation6 + $0x188] sm:$0xff] %v5489
          %5830 = vst.msk [vmem:[#allocation6 + $0x190] sm:$0xff] %vm3918, %v5694
          %5831 = vst [vmem:[#allocation6 + $0x198] sm:$0xff] %v5491
          %5832 = vst [vmem:[#allocation6 + $0x1a0] sm:$0xff] %v5493
          %5833 = vst.msk [vmem:[#allocation6 + $0x1a8] sm:$0xff] %vm3918, %v5697
          %5834 = vst [vmem:[#allocation6 + $0x1b0] sm:$0xff] %v5497
          %5835 = vst [vmem:[#allocation6 + $0x1b8] sm:$0xff] %v5499
          %5836 = vst.msk [vmem:[#allocation6 + $0x1c0] sm:$0xff] %vm3918, %v5702
          %5837 = vst [vmem:[#allocation6 + $0x1c8] sm:$0xff] %v5501
          %5838 = vst [vmem:[#allocation6 + $0x1d0] sm:$0xff] %v5503
          %5839 = vst.msk [vmem:[#allocation6 + $0x1d8] sm:$0xff] %vm3918, %v5705
          %5840 = vst [vmem:[#allocation6 + $0x1e0] sm:$0xff] %v5507
          %5841 = vst [vmem:[#allocation6 + $0x1e8] sm:$0xff] %v5509
          %5842 = vst.msk [vmem:[#allocation6 + $0x1f0] sm:$0xff] %vm3918, %v5710
          %5843 = vst [vmem:[#allocation6 + $0x1f8] sm:$0xff] %v5511
          %5844 = vst [vmem:[#allocation6 + $0x200] sm:$0xff] %v5513
          %5845 = vst.msk [vmem:[#allocation6 + $0x208] sm:$0xff] %vm3918, %v5713
          %5846 = vst [vmem:[#allocation6 + $0x210] sm:$0xff] %v5517
          %5847 = vst [vmem:[#allocation6 + $0x218] sm:$0xff] %v5519
          %5848 = vst.msk [vmem:[#allocation6 + $0x220] sm:$0xff] %vm3918, %v5718
          %5849 = vst [vmem:[#allocation6 + $0x228] sm:$0xff] %v5521
          %5850 = vst [vmem:[#allocation6 + $0x230] sm:$0xff] %v5523
          %5851 = vst.msk [vmem:[#allocation6 + $0x238] sm:$0xff] %vm3918, %v5721
          %5852 = vst [vmem:[#allocation6 + $0x240] sm:$0xff] %v5527
          %5853 = vst [vmem:[#allocation6 + $0x248] sm:$0xff] %v5529
          %5854 = vst.msk [vmem:[#allocation6 + $0x250] sm:$0xff] %vm3918, %v5726
          %5855 = vst [vmem:[#allocation6 + $0x258] sm:$0xff] %v5531
          %5856 = vst [vmem:[#allocation6 + $0x260] sm:$0xff] %v5533
          %5857 = vst.msk [vmem:[#allocation6 + $0x268] sm:$0xff] %vm3918, %v5729
          %5858 = vst [vmem:[#allocation6 + $0x270] sm:$0xff] %v5537
          %5859 = vst [vmem:[#allocation6 + $0x278] sm:$0xff] %v5539
          %5860 = vst.msk [vmem:[#allocation6 + $0x280] sm:$0xff] %vm3918, %v5734
          %5861 = vst [vmem:[#allocation6 + $0x288] sm:$0xff] %v5541
          %5862 = vst [vmem:[#allocation6 + $0x290] sm:$0xff] %v5543
          %5863 = vst.msk [vmem:[#allocation6 + $0x298] sm:$0xff] %vm3918, %v5737
          %5864 = vst [vmem:[#allocation6 + $0x2a0] sm:$0xff] %v5547
          %5865 = vst [vmem:[#allocation6 + $0x2a8] sm:$0xff] %v5549
          %5866 = vst.msk [vmem:[#allocation6 + $0x2b0] sm:$0xff] %vm3918, %v5742
          %5867 = vst [vmem:[#allocation6 + $0x2b8] sm:$0xff] %v5551
          %5868 = vst [vmem:[#allocation6 + $0x2c0] sm:$0xff] %v5553
          %5869 = vst.msk [vmem:[#allocation6 + $0x2c8] sm:$0xff] %vm3918, %v5745
          %5870 = vst [vmem:[#allocation6 + $0x2d0] sm:$0xff] %v5557
          %5871 = vst [vmem:[#allocation6 + $0x2d8] sm:$0xff] %v5559
          %5872 = vst.msk [vmem:[#allocation6 + $0x2e0] sm:$0xff] %vm3918, %v5750
          %5873 = vst [vmem:[#allocation6 + $0x2e8] sm:$0xff] %v5561
          %5874 = vst [vmem:[#allocation6 + $0x2f0] sm:$0xff] %v5563
          %5875 = vst.msk [vmem:[#allocation6 + $0x2f8] sm:$0xff] %vm3918, %v5753
          %5876 = vst [vmem:[#allocation6 + $0x300] sm:$0xff] %v5567
          %5877 = vst [vmem:[#allocation6 + $0x308] sm:$0xff] %v5569
          %5878 = vst.msk [vmem:[#allocation6 + $0x310] sm:$0xff] %vm3918, %v5758
          %5879 = vst [vmem:[#allocation6 + $0x318] sm:$0xff] %v5571
          %5880 = vst [vmem:[#allocation6 + $0x320] sm:$0xff] %v5573
          %5881 = vst.msk [vmem:[#allocation6 + $0x328] sm:$0xff] %vm3918, %v5761
          %5882 = vst [vmem:[#allocation6 + $0x330] sm:$0xff] %v5577
          %5883 = vst [vmem:[#allocation6 + $0x338] sm:$0xff] %v5579
          %5884 = vst.msk [vmem:[#allocation6 + $0x340] sm:$0xff] %vm3918, %v5766
          %5885 = vst [vmem:[#allocation6 + $0x348] sm:$0xff] %v5581
          %5886 = vst [vmem:[#allocation6 + $0x350] sm:$0xff] %v5583
          %5887 = vst.msk [vmem:[#allocation6 + $0x358] sm:$0xff] %vm3918, %v5769
          %5888 = vst [vmem:[#allocation6 + $0x360] sm:$0xff] %v5587
          %5889 = vst [vmem:[#allocation6 + $0x368] sm:$0xff] %v5589
          %5890 = vst.msk [vmem:[#allocation6 + $0x370] sm:$0xff] %vm3918, %v5774
          %5891 = vst [vmem:[#allocation6 + $0x378] sm:$0xf] %v5591
          %5892 = vst [vmem:[#allocation6 + $0x380] sm:$0xf] %v5593
          %5893 = vst.msk [vmem:[#allocation6 + $0x388] sm:$0xf] %vm5050, %v5777
        $region99: #{gatn_forward.1} parent=86 // pred_fallthru
          _
        // Predicated region
        $region100: #{gatn_forward.1} parent=86 // pred_check
          %p5894 = pneg %p299
        $region101: #{gatn_forward.1} parent=86 // pred_check_branch
          %5896 = sbr.rel (%p5894) target = $region103
        $region102: #{gatn_forward.1} parent=86 // pred_region
          %s5898 = ssub.s32 14592, 14592
          %5899 = vsyncadd [#allocation7], %s5898
          %s5900 = sshll.u32 [#allocation6], 4
          %s5901 = int_to_ptr.vmem [resolvable:$true] %s5900
          %5906 = dma.vmem_to_hbm [thread:$0]  %s5901, 14592, %s12, [#allocation7], 384, 384, 24
        $region103: #{gatn_forward.1} parent=86 // pred_fallthru
          _
        // Predicated region
        $region104: #{gatn_forward.1} parent=86 // pred_check
          %p5907 = pneg %p299
        $region105: #{gatn_forward.1} parent=86 // pred_check_branch
          %5909 = sbr.rel (%p5907) target = $region107
        $region106: #{gatn_forward.1} parent=86 // pred_region
          %5910 = dma.done [#allocation7], 14592
        $region107: #{gatn_forward.1} parent=86 // pred_fallthru
          _
      $region87: #{gatn_forward.1} parent=5 // pred_fallthru
        _
      %p5911 = scmp.le.s32.totalorder 2, %s19
      // Predicated region
      $region108: #{gatn_forward.1} parent=5 // pred_check
        %p5912 = pneg %p5911
      $region109: #{gatn_forward.1} parent=5 // pred_check_branch
        %5914 = sbr.rel (%p5912) target = $region111
      $region110: #{gatn_forward.1} parent=5 // pred_region
        %s5915 = ssub.s32 %s19, 2
      $region111: #{gatn_forward.1} parent=5 // pred_fallthru
        _
    $region6: #{gatn_forward.1} parent=1 // loop_footer
      %s23 = sadd.s32 1, %s19
    $region7: #{gatn_forward.1} parent=1 // loop_footer_branch
      %18 = sbr.rel target = $region3
    $region8: #{gatn_forward.1} parent=1 // loop_exit
      _
    %5916 = vsyncpa [#allocation7], 1
    %s5917 = scalar_lea.sflag [#allocation7], 1
    %5918 = vsyncpa %s5917, 1

</llo_original>
